<compile_context>
chip_gen: v7x
topology: tpu7x:2x2x1
jax: 0.10.0
libtpu: 0.0.40
codegen_flags: <defaults>
</compile_context>

<pallas_src>
import math

import jax
import jax.numpy as jnp
from jax import lax
from jax.experimental import pallas as pl
from jax.experimental.pallas import tpu as pltpu


# ---------------------------------------------------------------------------
# Kernel 1: fused xi path  (hhat -> Cnn_bar -> *0.03)
# ---------------------------------------------------------------------------
def xi_fused_kernel(h_ref, Tt_ref, t_ref, w3_ref, b3_ref, w2_ref, b2_ref,
                    w1_ref, b1_ref, wl3_ref, bl3_ref, out_ref):
    B = h_ref.shape[0]
    K = h_ref.shape[1]        # hdim (32)
    S = 9                     # sizeh
    f32 = jnp.float32

    h = h_ref[...]            # (B, 32)
    Tt = Tt_ref[...]          # (32, 81)

    # hhat = h @ T^T + t  as a VPU broadcast-FMA loop (exact f32; the MXU buys
    # nothing at M=2, K=32, N=81).
    hhat = jnp.broadcast_to(t_ref[...], (B, S * S)).astype(f32)    # (B, 81)
    for k in range(K):
        hhat = hhat + h[:, k:k + 1] * Tt[k:k + 1, :]

    # rows of the 9x9 image (row-major flatten of hhat)
    rows = [hhat[:, r * S:(r + 1) * S] for r in range(S)]          # (B, 9) each

    def shift_cols(v, s):
        # out[:, c] = v[:, c + s], zero fill outside [0, 9)
        if s == 0:
            return v
        z = jnp.zeros((v.shape[0], abs(s)), f32)
        if s > 0:
            return jnp.concatenate([v[:, s:], z], axis=1)
        return jnp.concatenate([z, v[:, :s]], axis=1)

    # conv3: 3x3, zero padding 1 -> nine rows of (B, 9)
    sh = [[shift_cols(rows[r], s) for s in (-1, 0, 1)] for r in range(S)]
    b3 = b3_ref[0]
    y3 = []
    for r in range(S):
        acc = jnp.zeros((B, S), f32)
        for di in range(3):
            rr = r + di - 1
            if rr < 0 or rr >= S:
                continue                      # zero-padding row
            for dj in range(3):
                acc = acc + w3_ref[di, dj] * sh[rr][dj]
        y3.append(acc + b3)

    # conv2: 2x2 (valid) -> eight rows of (B, 8), then softplus
    b2 = b2_ref[0]
    z = []
    for r in range(S - 1):
        acc = (w2_ref[0, 0] * y3[r][:, 0:S - 1]
               + w2_ref[0, 1] * y3[r][:, 1:S]
               + w2_ref[1, 0] * y3[r + 1][:, 0:S - 1]
               + w2_ref[1, 1] * y3[r + 1][:, 1:S])
        z.append(jax.nn.softplus(acc + b2))

    # lin1 (64 -> 16) on the row-major flatten of the 8x8 conv output,
    # done as VPU broadcast-FMAs (no flatten/reshape needed).
    w1 = w1_ref[...]                                               # (64, 16)
    h16 = jnp.broadcast_to(b1_ref[...], (B, 16)).astype(f32)
    for r in range(8):
        zr = z[r]
        for c in range(8):
            idx = r * 8 + c
            h16 = h16 + zr[:, c:c + 1] * w1[idx:idx + 1, :]
    h16 = jax.nn.softplus(h16)

    # lin3 (16 -> 1) + softplus, then Cnn_bar's *1e8 and Block_RGB's *0.03
    o = jnp.sum(h16 * wl3_ref[...], axis=1, keepdims=True) + bl3_ref[...]
    out_ref[...] = jax.nn.softplus(o) * 1e8 * 0.03


def run_xi(h, params):
    B = h.shape[0]
    vmem = pl.BlockSpec(memory_space=pltpu.MemorySpace.VMEM)
    smem = pl.BlockSpec(memory_space=pltpu.MemorySpace.SMEM)
    out = pl.pallas_call(
        xi_fused_kernel,
        out_shape=jax.ShapeDtypeStruct((B, 1), jnp.float32),
        in_specs=[vmem, vmem, vmem, smem, smem, smem, smem,
                  vmem, vmem, vmem, vmem],
        out_specs=vmem,
    )(h, params["T_t"], params["t"],
      params["conv3_w"], params["conv3_b"],
      params["conv2_w"], params["conv2_b"],
      params["lin1_w"], params["lin1_b"],
      params["lin3_w"], params["lin3_b"])
    return out[:, 0]


# ---------------------------------------------------------------------------
# Kernel 2: fused nn_sigma std estimate (Haar + exact median selection)
# ---------------------------------------------------------------------------
def sigma_std_kernel(img_ref, out_ref):
    x = img_ref[0]                                   # (256, 256) f32
    H, W = x.shape

    # g[r, c] = x[r,c] - x[r-1,c] - x[r,c-1] + x[r-1,c-1]   (circular indices)
    u = x - jnp.concatenate([x[H - 1:H, :], x[:H - 1, :]], axis=0)
    g = u - jnp.concatenate([u[:, W - 1:W], u[:, :W - 1]], axis=1)

    # |Haar diagonal detail| / 0.6745; the circularly-padded stride-2 output
    # value at (i, j) is 0.5 * g[2i, 2j].
    v = jnp.abs(g) * jnp.float32(0.5 / 0.6745)
    ui = pltpu.bitcast(v, jnp.int32)                 # order-preserving (v >= 0)

    # Sample-point weights: the 129x129 output repeats its first row and
    # first column, so position (2i, 2j) carries weight
    # (1 + [i == 0]) * (1 + [j == 0]); odd positions weigh 0.  sum(w) = 129^2.
    rows = lax.broadcasted_iota(jnp.int32, (H, W), 0)
    cols = lax.broadcasted_iota(jnp.int32, (H, W), 1)
    wr = jnp.where((rows & 1) == 0, jnp.where(rows == 0, 2.0, 1.0), 0.0)
    wc = jnp.where((cols & 1) == 0, jnp.where(cols == 0, 2.0, 1.0), 0.0)
    w = (wr * wc).astype(jnp.float32)

    n_out = (H // 2 + 1) * (W // 2 + 1)              # 16641 coefficients
    m = jnp.float32((n_out + 1) // 2)                # median rank (n_out odd)

    # Exact k-th smallest via binary search on the int32 bit pattern.
    def body(_, carry):
        lo, hi = carry                               # (1, 1) int32 each
        mid = lo + ((hi - lo) >> 1)
        cnt = jnp.sum(jnp.where(ui <= mid, w, 0.0), keepdims=True)
        take_lower = cnt >= m
        lo = jnp.where(take_lower, lo, mid + 1)
        hi = jnp.where(take_lower, mid, hi)
        return lo, hi

    lo0 = jnp.zeros((1, 1), jnp.int32)
    hi0 = jnp.full((1, 1), 2 ** 31 - 1, jnp.int32)
    lo, _ = lax.fori_loop(0, 32, body, (lo0, hi0))

    # lo is the bit pattern of the median; recover the float value.
    med = jnp.min(jnp.where(ui >= lo, v, jnp.inf), keepdims=True)   # (1, 1)
    # lane-dense store (128 wide) of the per-image scalar
    out_ref[...] = jnp.broadcast_to(jnp.reshape(med, (1, 1, 1)), (1, 1, 128))


def run_sigma_std(image):
    B, H, W = image.shape
    out = pl.pallas_call(
        sigma_std_kernel,
        out_shape=jax.ShapeDtypeStruct((B, 1, 128), jnp.float32),
        grid=(B,),
        in_specs=[pl.BlockSpec((1, H, W), lambda b: (b, 0, 0))],
        out_specs=pl.BlockSpec((1, 1, 128), lambda b: (b, 0, 0)),
        compiler_params=pltpu.CompilerParams(
            dimension_semantics=("parallel",)),
    )(image)
    return out[:, 0, 0]


# ---------------------------------------------------------------------------
# Parameter construction (deterministic; replaces .mat load + torch init)
# ---------------------------------------------------------------------------
def init_params(key, sizeh=9, hdim=32):
    ks = jax.random.split(key, 10)
    P = sizeh * sizeh
    return {
        # replaces sio.loadmat('Model_files/useful_tools.mat'); T is stored
        # pre-transposed so the kernel never transposes at call time.
        "T_t": 0.1 * jax.random.normal(ks[0], (hdim, P), jnp.float32),
        "t": 0.1 * jax.random.normal(ks[1], (1, P), jnp.float32),
        # Cnn_bar
        "conv3_w": 0.3 * jax.random.normal(ks[2], (3, 3), jnp.float32),
        "conv3_b": 0.1 * jax.random.normal(ks[3], (1,), jnp.float32),
        "conv2_w": 0.3 * jax.random.normal(ks[4], (2, 2), jnp.float32),
        "conv2_b": 0.1 * jax.random.normal(ks[5], (1,), jnp.float32),
        "lin1_w": 0.1 * jax.random.normal(ks[6], (64, 16), jnp.float32),  # (in, out)
        "lin1_b": 0.1 * jax.random.normal(ks[7], (1, 16), jnp.float32),
        "lin3_w": 0.1 * jax.random.normal(ks[8], (1, 16), jnp.float32),   # (out, in)
        "lin3_b": 0.1 * jax.random.normal(ks[9], (1, 1), jnp.float32),
        # nn_sigma learned scalars
        "a_k": jnp.float32(0.8),
        "b_k": jnp.float32(-10.0),
    }


# ---------------------------------------------------------------------------
# Block_RGB.forward
# ---------------------------------------------------------------------------
def block_rgb_forward(params, y_vec, mk0_vec, h0_vec, gvar, h_vec, Ch_vec,
                      gamma_vec, lambda_vec, KmtK0_dict, KmtKn_dict):
    batch = h0_vec.shape[0]

    # ---- xi = Cnn_bar(reshape(T @ h + t)) * 0.03  (single fused kernel) ----
    h = h_vec.reshape(batch, -1).astype(jnp.float32)
    xi = run_xi(h, params)                                     # (batch,)

    # ---- beta = nn_sigma(image) ----
    # The original repeats y over 3 identical channels; the per-channel Haar
    # median equals the 3-channel median exactly, so one channel is processed.
    image = y_vec.reshape(batch, 256, 256).astype(jnp.float32)
    std_approx = run_sigma_std(image)                          # (batch,)
    gvar_ = (jax.nn.softplus(params["a_k"]) * std_approx
             + jax.nn.softplus(params["b_k"])) ** 2
    beta = 1.0 / gvar_

    # TODO(synk): cardan_RGB.apply is an external custom autograd op (no
    # source provided); return (xi, beta) - the quantities computed here.
    return xi, beta


# ---------------------------------------------------------------------------
# Pure-JAX reference (faithful to the PyTorch forward) for self-checking
# ---------------------------------------------------------------------------
def reference_forward(params, y_vec, h_vec, batch, sizeh):
    hp = jax.lax.Precision.HIGHEST
    h = h_vec.reshape(batch, -1).astype(jnp.float32)
    hhat = jnp.dot(h, params["T_t"], precision=hp) + params["t"]
    img = hhat.reshape(batch, 1, sizeh, sizeh)
    xp = jnp.pad(img, ((0, 0), (0, 0), (1, 1), (1, 1)))
    y3 = sum(params["conv3_w"][di, dj] * xp[:, :, di:di + sizeh, dj:dj + sizeh]
             for di in range(3) for dj in range(3)) + params["conv3_b"][0]
    y2 = sum(params["conv2_w"][di, dj]
             * y3[:, :, di:di + sizeh - 1, dj:dj + sizeh - 1]
             for di in range(2) for dj in range(2)) + params["conv2_b"][0]
    z = jax.nn.softplus(y2).reshape(batch, -1)
    h16 = jax.nn.softplus(jnp.dot(z, params["lin1_w"], precision=hp)
                          + params["lin1_b"])
    o = jax.nn.softplus(jnp.dot(h16, params["lin3_w"].T, precision=hp)
                        + params["lin3_b"])
    xi = o[:, 0] * 1e8 * 0.03

    image = jnp.broadcast_to(y_vec.reshape(batch, 1, 256, 256),
                             (batch, 3, 256, 256)).astype(jnp.float32)
    imp = jnp.pad(image, ((0, 0), (0, 0), (1, 1), (1, 1)), mode="wrap")
    d = 0.5 * (imp[:, :, 0::2, 0::2] - imp[:, :, 0::2, 1::2]
               - imp[:, :, 1::2, 0::2] + imp[:, :, 1::2, 1::2])
    y = jnp.abs(d).reshape(batch, -1) / 0.6745
    n = y.shape[1]
    k = math.ceil(n / 2)
    std_approx = jnp.sort(y, axis=1)[:, n - k]
    gvar_ = (jax.nn.softplus(params["a_k"]) * std_approx
             + jax.nn.softplus(params["b_k"])) ** 2
    beta = 1.0 / gvar_
    return xi, beta


# ---------------------------------------------------------------------------
if __name__ == "__main__":
    batch, sizeh, hdim = 2, 9, 32
    key = jax.random.PRNGKey(0)
    kp, k1, k2, k3 = jax.random.split(key, 4)

    params = init_params(kp, sizeh=sizeh, hdim=hdim)

    y_vec = jax.random.normal(k1, (batch, 256 * 256), jnp.float32)
    h_vec = jax.random.normal(k2, (batch, hdim, 1), jnp.float32)
    h0_vec = jax.random.normal(k3, (batch, sizeh, sizeh), jnp.float32)
    mk0_vec = jnp.zeros((batch, 256 * 256), jnp.float32)      # pass-through args
    gvar = jnp.ones((batch,), jnp.float32)
    Ch_vec = jnp.zeros((batch, sizeh * sizeh), jnp.float32)
    gamma_vec = jnp.ones((batch,), jnp.float32)
    lambda_vec = jnp.ones((batch,), jnp.float32)

    xi, beta = block_rgb_forward(params, y_vec, mk0_vec, h0_vec, gvar, h_vec,
                                 Ch_vec, gamma_vec, lambda_vec, {}, {})
    jax.block_until_ready((xi, beta))
    assert xi.shape == (batch,) and beta.shape == (batch,)
    assert bool(jnp.all(jnp.isfinite(xi))) and bool(jnp.all(jnp.isfinite(beta)))

    # correctness check against the faithful pure-JAX reference
    xi_ref, beta_ref = reference_forward(params, y_vec, h_vec, batch, sizeh)
    assert bool(jnp.allclose(xi, xi_ref, rtol=5e-3, atol=1e-2)), (xi, xi_ref)
    assert bool(jnp.allclose(beta, beta_ref, rtol=5e-3, atol=1e-6)), (beta, beta_ref)

    print("KERNEL_OK")
</pallas_src>

<mosaic_0001>
module attributes {stable_mosaic.version = 11 : i64} {
  func.func @xi_fused_kernel(%arg0: memref<2x32xf32, #tpu.memory_space<vmem>>, %arg1: memref<32x81xf32, #tpu.memory_space<vmem>>, %arg2: memref<1x81xf32, #tpu.memory_space<vmem>>, %arg3: memref<3x3xf32, #tpu.memory_space<smem>>, %arg4: memref<1xf32, #tpu.memory_space<smem>>, %arg5: memref<2x2xf32, #tpu.memory_space<smem>>, %arg6: memref<1xf32, #tpu.memory_space<smem>>, %arg7: memref<64x16xf32, #tpu.memory_space<vmem>>, %arg8: memref<1x16xf32, #tpu.memory_space<vmem>>, %arg9: memref<1x16xf32, #tpu.memory_space<vmem>>, %arg10: memref<1x1xf32, #tpu.memory_space<vmem>>, %arg11: memref<2x1xf32, #tpu.memory_space<vmem>>) attributes {dimension_semantics = [], scalar_prefetch = 0 : i64, scratch_operands = 0 : i64, tpu.core_type = #tpu.core_type<tc>} {
    %c0 = arith.constant 0 : index
    %c0_0 = arith.constant 0 : index
    %0 = vector.load %arg0[%c0, %c0_0] : memref<2x32xf32, #tpu.memory_space<vmem>>, vector<2x32xf32>
    %c0_1 = arith.constant 0 : index
    %c0_2 = arith.constant 0 : index
    %1 = vector.load %arg1[%c0_1, %c0_2] : memref<32x81xf32, #tpu.memory_space<vmem>>, vector<32x81xf32>
    %c0_3 = arith.constant 0 : index
    %c0_4 = arith.constant 0 : index
    %2 = vector.load %arg2[%c0_3, %c0_4] : memref<1x81xf32, #tpu.memory_space<vmem>>, vector<1x81xf32>
    %3 = vector.shape_cast %2 : vector<1x81xf32> to vector<1x81xf32>
    %4 = vector.broadcast %3 : vector<1x81xf32> to vector<2x81xf32>
    %5 = vector.extract_strided_slice %0 {offsets = [0, 0], sizes = [2, 1], strides = [1, 1]} : vector<2x32xf32> to vector<2x1xf32>
    %6 = vector.extract_strided_slice %1 {offsets = [0, 0], sizes = [1, 81], strides = [1, 1]} : vector<32x81xf32> to vector<1x81xf32>
    %7 = vector.broadcast %5 : vector<2x1xf32> to vector<2x81xf32>
    %8 = vector.broadcast %6 : vector<1x81xf32> to vector<2x81xf32>
    %9 = arith.mulf %7, %8 : vector<2x81xf32>
    %10 = arith.addf %4, %9 : vector<2x81xf32>
    %11 = vector.extract_strided_slice %0 {offsets = [0, 1], sizes = [2, 1], strides = [1, 1]} : vector<2x32xf32> to vector<2x1xf32>
    %12 = vector.extract_strided_slice %1 {offsets = [1, 0], sizes = [1, 81], strides = [1, 1]} : vector<32x81xf32> to vector<1x81xf32>
    %13 = vector.broadcast %11 : vector<2x1xf32> to vector<2x81xf32>
    %14 = vector.broadcast %12 : vector<1x81xf32> to vector<2x81xf32>
    %15 = arith.mulf %13, %14 : vector<2x81xf32>
    %16 = arith.addf %10, %15 : vector<2x81xf32>
    %17 = vector.extract_strided_slice %0 {offsets = [0, 2], sizes = [2, 1], strides = [1, 1]} : vector<2x32xf32> to vector<2x1xf32>
    %18 = vector.extract_strided_slice %1 {offsets = [2, 0], sizes = [1, 81], strides = [1, 1]} : vector<32x81xf32> to vector<1x81xf32>
    %19 = vector.broadcast %17 : vector<2x1xf32> to vector<2x81xf32>
    %20 = vector.broadcast %18 : vector<1x81xf32> to vector<2x81xf32>
    %21 = arith.mulf %19, %20 : vector<2x81xf32>
    %22 = arith.addf %16, %21 : vector<2x81xf32>
    %23 = vector.extract_strided_slice %0 {offsets = [0, 3], sizes = [2, 1], strides = [1, 1]} : vector<2x32xf32> to vector<2x1xf32>
    %24 = vector.extract_strided_slice %1 {offsets = [3, 0], sizes = [1, 81], strides = [1, 1]} : vector<32x81xf32> to vector<1x81xf32>
    %25 = vector.broadcast %23 : vector<2x1xf32> to vector<2x81xf32>
    %26 = vector.broadcast %24 : vector<1x81xf32> to vector<2x81xf32>
    %27 = arith.mulf %25, %26 : vector<2x81xf32>
    %28 = arith.addf %22, %27 : vector<2x81xf32>
    %29 = vector.extract_strided_slice %0 {offsets = [0, 4], sizes = [2, 1], strides = [1, 1]} : vector<2x32xf32> to vector<2x1xf32>
    %30 = vector.extract_strided_slice %1 {offsets = [4, 0], sizes = [1, 81], strides = [1, 1]} : vector<32x81xf32> to vector<1x81xf32>
    %31 = vector.broadcast %29 : vector<2x1xf32> to vector<2x81xf32>
    %32 = vector.broadcast %30 : vector<1x81xf32> to vector<2x81xf32>
    %33 = arith.mulf %31, %32 : vector<2x81xf32>
    %34 = arith.addf %28, %33 : vector<2x81xf32>
    %35 = vector.extract_strided_slice %0 {offsets = [0, 5], sizes = [2, 1], strides = [1, 1]} : vector<2x32xf32> to vector<2x1xf32>
    %36 = vector.extract_strided_slice %1 {offsets = [5, 0], sizes = [1, 81], strides = [1, 1]} : vector<32x81xf32> to vector<1x81xf32>
    %37 = vector.broadcast %35 : vector<2x1xf32> to vector<2x81xf32>
    %38 = vector.broadcast %36 : vector<1x81xf32> to vector<2x81xf32>
    %39 = arith.mulf %37, %38 : vector<2x81xf32>
    %40 = arith.addf %34, %39 : vector<2x81xf32>
    %41 = vector.extract_strided_slice %0 {offsets = [0, 6], sizes = [2, 1], strides = [1, 1]} : vector<2x32xf32> to vector<2x1xf32>
    %42 = vector.extract_strided_slice %1 {offsets = [6, 0], sizes = [1, 81], strides = [1, 1]} : vector<32x81xf32> to vector<1x81xf32>
    %43 = vector.broadcast %41 : vector<2x1xf32> to vector<2x81xf32>
    %44 = vector.broadcast %42 : vector<1x81xf32> to vector<2x81xf32>
    %45 = arith.mulf %43, %44 : vector<2x81xf32>
    %46 = arith.addf %40, %45 : vector<2x81xf32>
    %47 = vector.extract_strided_slice %0 {offsets = [0, 7], sizes = [2, 1], strides = [1, 1]} : vector<2x32xf32> to vector<2x1xf32>
    %48 = vector.extract_strided_slice %1 {offsets = [7, 0], sizes = [1, 81], strides = [1, 1]} : vector<32x81xf32> to vector<1x81xf32>
    %49 = vector.broadcast %47 : vector<2x1xf32> to vector<2x81xf32>
    %50 = vector.broadcast %48 : vector<1x81xf32> to vector<2x81xf32>
    %51 = arith.mulf %49, %50 : vector<2x81xf32>
    %52 = arith.addf %46, %51 : vector<2x81xf32>
    %53 = vector.extract_strided_slice %0 {offsets = [0, 8], sizes = [2, 1], strides = [1, 1]} : vector<2x32xf32> to vector<2x1xf32>
    %54 = vector.extract_strided_slice %1 {offsets = [8, 0], sizes = [1, 81], strides = [1, 1]} : vector<32x81xf32> to vector<1x81xf32>
    %55 = vector.broadcast %53 : vector<2x1xf32> to vector<2x81xf32>
    %56 = vector.broadcast %54 : vector<1x81xf32> to vector<2x81xf32>
    %57 = arith.mulf %55, %56 : vector<2x81xf32>
    %58 = arith.addf %52, %57 : vector<2x81xf32>
    %59 = vector.extract_strided_slice %0 {offsets = [0, 9], sizes = [2, 1], strides = [1, 1]} : vector<2x32xf32> to vector<2x1xf32>
    %60 = vector.extract_strided_slice %1 {offsets = [9, 0], sizes = [1, 81], strides = [1, 1]} : vector<32x81xf32> to vector<1x81xf32>
    %61 = vector.broadcast %59 : vector<2x1xf32> to vector<2x81xf32>
    %62 = vector.broadcast %60 : vector<1x81xf32> to vector<2x81xf32>
    %63 = arith.mulf %61, %62 : vector<2x81xf32>
    %64 = arith.addf %58, %63 : vector<2x81xf32>
    %65 = vector.extract_strided_slice %0 {offsets = [0, 10], sizes = [2, 1], strides = [1, 1]} : vector<2x32xf32> to vector<2x1xf32>
    %66 = vector.extract_strided_slice %1 {offsets = [10, 0], sizes = [1, 81], strides = [1, 1]} : vector<32x81xf32> to vector<1x81xf32>
    %67 = vector.broadcast %65 : vector<2x1xf32> to vector<2x81xf32>
    %68 = vector.broadcast %66 : vector<1x81xf32> to vector<2x81xf32>
    %69 = arith.mulf %67, %68 : vector<2x81xf32>
    %70 = arith.addf %64, %69 : vector<2x81xf32>
    %71 = vector.extract_strided_slice %0 {offsets = [0, 11], sizes = [2, 1], strides = [1, 1]} : vector<2x32xf32> to vector<2x1xf32>
    %72 = vector.extract_strided_slice %1 {offsets = [11, 0], sizes = [1, 81], strides = [1, 1]} : vector<32x81xf32> to vector<1x81xf32>
    %73 = vector.broadcast %71 : vector<2x1xf32> to vector<2x81xf32>
    %74 = vector.broadcast %72 : vector<1x81xf32> to vector<2x81xf32>
    %75 = arith.mulf %73, %74 : vector<2x81xf32>
    %76 = arith.addf %70, %75 : vector<2x81xf32>
    %77 = vector.extract_strided_slice %0 {offsets = [0, 12], sizes = [2, 1], strides = [1, 1]} : vector<2x32xf32> to vector<2x1xf32>
    %78 = vector.extract_strided_slice %1 {offsets = [12, 0], sizes = [1, 81], strides = [1, 1]} : vector<32x81xf32> to vector<1x81xf32>
    %79 = vector.broadcast %77 : vector<2x1xf32> to vector<2x81xf32>
    %80 = vector.broadcast %78 : vector<1x81xf32> to vector<2x81xf32>
    %81 = arith.mulf %79, %80 : vector<2x81xf32>
    %82 = arith.addf %76, %81 : vector<2x81xf32>
    %83 = vector.extract_strided_slice %0 {offsets = [0, 13], sizes = [2, 1], strides = [1, 1]} : vector<2x32xf32> to vector<2x1xf32>
    %84 = vector.extract_strided_slice %1 {offsets = [13, 0], sizes = [1, 81], strides = [1, 1]} : vector<32x81xf32> to vector<1x81xf32>
    %85 = vector.broadcast %83 : vector<2x1xf32> to vector<2x81xf32>
    %86 = vector.broadcast %84 : vector<1x81xf32> to vector<2x81xf32>
    %87 = arith.mulf %85, %86 : vector<2x81xf32>
    %88 = arith.addf %82, %87 : vector<2x81xf32>
    %89 = vector.extract_strided_slice %0 {offsets = [0, 14], sizes = [2, 1], strides = [1, 1]} : vector<2x32xf32> to vector<2x1xf32>
    %90 = vector.extract_strided_slice %1 {offsets = [14, 0], sizes = [1, 81], strides = [1, 1]} : vector<32x81xf32> to vector<1x81xf32>
    %91 = vector.broadcast %89 : vector<2x1xf32> to vector<2x81xf32>
    %92 = vector.broadcast %90 : vector<1x81xf32> to vector<2x81xf32>
    %93 = arith.mulf %91, %92 : vector<2x81xf32>
    %94 = arith.addf %88, %93 : vector<2x81xf32>
    %95 = vector.extract_strided_slice %0 {offsets = [0, 15], sizes = [2, 1], strides = [1, 1]} : vector<2x32xf32> to vector<2x1xf32>
    %96 = vector.extract_strided_slice %1 {offsets = [15, 0], sizes = [1, 81], strides = [1, 1]} : vector<32x81xf32> to vector<1x81xf32>
    %97 = vector.broadcast %95 : vector<2x1xf32> to vector<2x81xf32>
    %98 = vector.broadcast %96 : vector<1x81xf32> to vector<2x81xf32>
    %99 = arith.mulf %97, %98 : vector<2x81xf32>
    %100 = arith.addf %94, %99 : vector<2x81xf32>
    %101 = vector.extract_strided_slice %0 {offsets = [0, 16], sizes = [2, 1], strides = [1, 1]} : vector<2x32xf32> to vector<2x1xf32>
    %102 = vector.extract_strided_slice %1 {offsets = [16, 0], sizes = [1, 81], strides = [1, 1]} : vector<32x81xf32> to vector<1x81xf32>
    %103 = vector.broadcast %101 : vector<2x1xf32> to vector<2x81xf32>
    %104 = vector.broadcast %102 : vector<1x81xf32> to vector<2x81xf32>
    %105 = arith.mulf %103, %104 : vector<2x81xf32>
    %106 = arith.addf %100, %105 : vector<2x81xf32>
    %107 = vector.extract_strided_slice %0 {offsets = [0, 17], sizes = [2, 1], strides = [1, 1]} : vector<2x32xf32> to vector<2x1xf32>
    %108 = vector.extract_strided_slice %1 {offsets = [17, 0], sizes = [1, 81], strides = [1, 1]} : vector<32x81xf32> to vector<1x81xf32>
    %109 = vector.broadcast %107 : vector<2x1xf32> to vector<2x81xf32>
    %110 = vector.broadcast %108 : vector<1x81xf32> to vector<2x81xf32>
    %111 = arith.mulf %109, %110 : vector<2x81xf32>
    %112 = arith.addf %106, %111 : vector<2x81xf32>
    %113 = vector.extract_strided_slice %0 {offsets = [0, 18], sizes = [2, 1], strides = [1, 1]} : vector<2x32xf32> to vector<2x1xf32>
    %114 = vector.extract_strided_slice %1 {offsets = [18, 0], sizes = [1, 81], strides = [1, 1]} : vector<32x81xf32> to vector<1x81xf32>
    %115 = vector.broadcast %113 : vector<2x1xf32> to vector<2x81xf32>
    %116 = vector.broadcast %114 : vector<1x81xf32> to vector<2x81xf32>
    %117 = arith.mulf %115, %116 : vector<2x81xf32>
    %118 = arith.addf %112, %117 : vector<2x81xf32>
    %119 = vector.extract_strided_slice %0 {offsets = [0, 19], sizes = [2, 1], strides = [1, 1]} : vector<2x32xf32> to vector<2x1xf32>
    %120 = vector.extract_strided_slice %1 {offsets = [19, 0], sizes = [1, 81], strides = [1, 1]} : vector<32x81xf32> to vector<1x81xf32>
    %121 = vector.broadcast %119 : vector<2x1xf32> to vector<2x81xf32>
    %122 = vector.broadcast %120 : vector<1x81xf32> to vector<2x81xf32>
    %123 = arith.mulf %121, %122 : vector<2x81xf32>
    %124 = arith.addf %118, %123 : vector<2x81xf32>
    %125 = vector.extract_strided_slice %0 {offsets = [0, 20], sizes = [2, 1], strides = [1, 1]} : vector<2x32xf32> to vector<2x1xf32>
    %126 = vector.extract_strided_slice %1 {offsets = [20, 0], sizes = [1, 81], strides = [1, 1]} : vector<32x81xf32> to vector<1x81xf32>
    %127 = vector.broadcast %125 : vector<2x1xf32> to vector<2x81xf32>
    %128 = vector.broadcast %126 : vector<1x81xf32> to vector<2x81xf32>
    %129 = arith.mulf %127, %128 : vector<2x81xf32>
    %130 = arith.addf %124, %129 : vector<2x81xf32>
    %131 = vector.extract_strided_slice %0 {offsets = [0, 21], sizes = [2, 1], strides = [1, 1]} : vector<2x32xf32> to vector<2x1xf32>
    %132 = vector.extract_strided_slice %1 {offsets = [21, 0], sizes = [1, 81], strides = [1, 1]} : vector<32x81xf32> to vector<1x81xf32>
    %133 = vector.broadcast %131 : vector<2x1xf32> to vector<2x81xf32>
    %134 = vector.broadcast %132 : vector<1x81xf32> to vector<2x81xf32>
    %135 = arith.mulf %133, %134 : vector<2x81xf32>
    %136 = arith.addf %130, %135 : vector<2x81xf32>
    %137 = vector.extract_strided_slice %0 {offsets = [0, 22], sizes = [2, 1], strides = [1, 1]} : vector<2x32xf32> to vector<2x1xf32>
    %138 = vector.extract_strided_slice %1 {offsets = [22, 0], sizes = [1, 81], strides = [1, 1]} : vector<32x81xf32> to vector<1x81xf32>
    %139 = vector.broadcast %137 : vector<2x1xf32> to vector<2x81xf32>
    %140 = vector.broadcast %138 : vector<1x81xf32> to vector<2x81xf32>
    %141 = arith.mulf %139, %140 : vector<2x81xf32>
    %142 = arith.addf %136, %141 : vector<2x81xf32>
    %143 = vector.extract_strided_slice %0 {offsets = [0, 23], sizes = [2, 1], strides = [1, 1]} : vector<2x32xf32> to vector<2x1xf32>
    %144 = vector.extract_strided_slice %1 {offsets = [23, 0], sizes = [1, 81], strides = [1, 1]} : vector<32x81xf32> to vector<1x81xf32>
    %145 = vector.broadcast %143 : vector<2x1xf32> to vector<2x81xf32>
    %146 = vector.broadcast %144 : vector<1x81xf32> to vector<2x81xf32>
    %147 = arith.mulf %145, %146 : vector<2x81xf32>
    %148 = arith.addf %142, %147 : vector<2x81xf32>
    %149 = vector.extract_strided_slice %0 {offsets = [0, 24], sizes = [2, 1], strides = [1, 1]} : vector<2x32xf32> to vector<2x1xf32>
    %150 = vector.extract_strided_slice %1 {offsets = [24, 0], sizes = [1, 81], strides = [1, 1]} : vector<32x81xf32> to vector<1x81xf32>
    %151 = vector.broadcast %149 : vector<2x1xf32> to vector<2x81xf32>
    %152 = vector.broadcast %150 : vector<1x81xf32> to vector<2x81xf32>
    %153 = arith.mulf %151, %152 : vector<2x81xf32>
    %154 = arith.addf %148, %153 : vector<2x81xf32>
    %155 = vector.extract_strided_slice %0 {offsets = [0, 25], sizes = [2, 1], strides = [1, 1]} : vector<2x32xf32> to vector<2x1xf32>
    %156 = vector.extract_strided_slice %1 {offsets = [25, 0], sizes = [1, 81], strides = [1, 1]} : vector<32x81xf32> to vector<1x81xf32>
    %157 = vector.broadcast %155 : vector<2x1xf32> to vector<2x81xf32>
    %158 = vector.broadcast %156 : vector<1x81xf32> to vector<2x81xf32>
    %159 = arith.mulf %157, %158 : vector<2x81xf32>
    %160 = arith.addf %154, %159 : vector<2x81xf32>
    %161 = vector.extract_strided_slice %0 {offsets = [0, 26], sizes = [2, 1], strides = [1, 1]} : vector<2x32xf32> to vector<2x1xf32>
    %162 = vector.extract_strided_slice %1 {offsets = [26, 0], sizes = [1, 81], strides = [1, 1]} : vector<32x81xf32> to vector<1x81xf32>
    %163 = vector.broadcast %161 : vector<2x1xf32> to vector<2x81xf32>
    %164 = vector.broadcast %162 : vector<1x81xf32> to vector<2x81xf32>
    %165 = arith.mulf %163, %164 : vector<2x81xf32>
    %166 = arith.addf %160, %165 : vector<2x81xf32>
    %167 = vector.extract_strided_slice %0 {offsets = [0, 27], sizes = [2, 1], strides = [1, 1]} : vector<2x32xf32> to vector<2x1xf32>
    %168 = vector.extract_strided_slice %1 {offsets = [27, 0], sizes = [1, 81], strides = [1, 1]} : vector<32x81xf32> to vector<1x81xf32>
    %169 = vector.broadcast %167 : vector<2x1xf32> to vector<2x81xf32>
    %170 = vector.broadcast %168 : vector<1x81xf32> to vector<2x81xf32>
    %171 = arith.mulf %169, %170 : vector<2x81xf32>
    %172 = arith.addf %166, %171 : vector<2x81xf32>
    %173 = vector.extract_strided_slice %0 {offsets = [0, 28], sizes = [2, 1], strides = [1, 1]} : vector<2x32xf32> to vector<2x1xf32>
    %174 = vector.extract_strided_slice %1 {offsets = [28, 0], sizes = [1, 81], strides = [1, 1]} : vector<32x81xf32> to vector<1x81xf32>
    %175 = vector.broadcast %173 : vector<2x1xf32> to vector<2x81xf32>
    %176 = vector.broadcast %174 : vector<1x81xf32> to vector<2x81xf32>
    %177 = arith.mulf %175, %176 : vector<2x81xf32>
    %178 = arith.addf %172, %177 : vector<2x81xf32>
    %179 = vector.extract_strided_slice %0 {offsets = [0, 29], sizes = [2, 1], strides = [1, 1]} : vector<2x32xf32> to vector<2x1xf32>
    %180 = vector.extract_strided_slice %1 {offsets = [29, 0], sizes = [1, 81], strides = [1, 1]} : vector<32x81xf32> to vector<1x81xf32>
    %181 = vector.broadcast %179 : vector<2x1xf32> to vector<2x81xf32>
    %182 = vector.broadcast %180 : vector<1x81xf32> to vector<2x81xf32>
    %183 = arith.mulf %181, %182 : vector<2x81xf32>
    %184 = arith.addf %178, %183 : vector<2x81xf32>
    %185 = vector.extract_strided_slice %0 {offsets = [0, 30], sizes = [2, 1], strides = [1, 1]} : vector<2x32xf32> to vector<2x1xf32>
    %186 = vector.extract_strided_slice %1 {offsets = [30, 0], sizes = [1, 81], strides = [1, 1]} : vector<32x81xf32> to vector<1x81xf32>
    %187 = vector.broadcast %185 : vector<2x1xf32> to vector<2x81xf32>
    %188 = vector.broadcast %186 : vector<1x81xf32> to vector<2x81xf32>
    %189 = arith.mulf %187, %188 : vector<2x81xf32>
    %190 = arith.addf %184, %189 : vector<2x81xf32>
    %191 = vector.extract_strided_slice %0 {offsets = [0, 31], sizes = [2, 1], strides = [1, 1]} : vector<2x32xf32> to vector<2x1xf32>
    %192 = vector.extract_strided_slice %1 {offsets = [31, 0], sizes = [1, 81], strides = [1, 1]} : vector<32x81xf32> to vector<1x81xf32>
    %193 = vector.broadcast %191 : vector<2x1xf32> to vector<2x81xf32>
    %194 = vector.broadcast %192 : vector<1x81xf32> to vector<2x81xf32>
    %195 = arith.mulf %193, %194 : vector<2x81xf32>
    %196 = arith.addf %190, %195 : vector<2x81xf32>
    %197 = vector.extract_strided_slice %196 {offsets = [0, 0], sizes = [2, 9], strides = [1, 1]} : vector<2x81xf32> to vector<2x9xf32>
    %198 = vector.extract_strided_slice %196 {offsets = [0, 9], sizes = [2, 9], strides = [1, 1]} : vector<2x81xf32> to vector<2x9xf32>
    %199 = vector.extract_strided_slice %196 {offsets = [0, 18], sizes = [2, 9], strides = [1, 1]} : vector<2x81xf32> to vector<2x9xf32>
    %200 = vector.extract_strided_slice %196 {offsets = [0, 27], sizes = [2, 9], strides = [1, 1]} : vector<2x81xf32> to vector<2x9xf32>
    %201 = vector.extract_strided_slice %196 {offsets = [0, 36], sizes = [2, 9], strides = [1, 1]} : vector<2x81xf32> to vector<2x9xf32>
    %202 = vector.extract_strided_slice %196 {offsets = [0, 45], sizes = [2, 9], strides = [1, 1]} : vector<2x81xf32> to vector<2x9xf32>
    %203 = vector.extract_strided_slice %196 {offsets = [0, 54], sizes = [2, 9], strides = [1, 1]} : vector<2x81xf32> to vector<2x9xf32>
    %204 = vector.extract_strided_slice %196 {offsets = [0, 63], sizes = [2, 9], strides = [1, 1]} : vector<2x81xf32> to vector<2x9xf32>
    %205 = vector.extract_strided_slice %196 {offsets = [0, 72], sizes = [2, 9], strides = [1, 1]} : vector<2x81xf32> to vector<2x9xf32>
    %cst = arith.constant 0.000000e+00 : f32
    %206 = vector.broadcast %cst : f32 to vector<2x1xf32>
    %207 = vector.extract_strided_slice %197 {offsets = [0, 0], sizes = [2, 8], strides = [1, 1]} : vector<2x9xf32> to vector<2x8xf32>
    %208 = tpu.concatenate %206, %207 in 1 : vector<2x1xf32>, vector<2x8xf32> -> vector<2x9xf32>
    %cst_5 = arith.constant 0.000000e+00 : f32
    %209 = vector.broadcast %cst_5 : f32 to vector<2x1xf32>
    %210 = vector.extract_strided_slice %197 {offsets = [0, 1], sizes = [2, 8], strides = [1, 1]} : vector<2x9xf32> to vector<2x8xf32>
    %211 = tpu.concatenate %210, %209 in 1 : vector<2x8xf32>, vector<2x1xf32> -> vector<2x9xf32>
    %cst_6 = arith.constant 0.000000e+00 : f32
    %212 = vector.broadcast %cst_6 : f32 to vector<2x1xf32>
    %213 = vector.extract_strided_slice %198 {offsets = [0, 0], sizes = [2, 8], strides = [1, 1]} : vector<2x9xf32> to vector<2x8xf32>
    %214 = tpu.concatenate %212, %213 in 1 : vector<2x1xf32>, vector<2x8xf32> -> vector<2x9xf32>
    %cst_7 = arith.constant 0.000000e+00 : f32
    %215 = vector.broadcast %cst_7 : f32 to vector<2x1xf32>
    %216 = vector.extract_strided_slice %198 {offsets = [0, 1], sizes = [2, 8], strides = [1, 1]} : vector<2x9xf32> to vector<2x8xf32>
    %217 = tpu.concatenate %216, %215 in 1 : vector<2x8xf32>, vector<2x1xf32> -> vector<2x9xf32>
    %cst_8 = arith.constant 0.000000e+00 : f32
    %218 = vector.broadcast %cst_8 : f32 to vector<2x1xf32>
    %219 = vector.extract_strided_slice %199 {offsets = [0, 0], sizes = [2, 8], strides = [1, 1]} : vector<2x9xf32> to vector<2x8xf32>
    %220 = tpu.concatenate %218, %219 in 1 : vector<2x1xf32>, vector<2x8xf32> -> vector<2x9xf32>
    %cst_9 = arith.constant 0.000000e+00 : f32
    %221 = vector.broadcast %cst_9 : f32 to vector<2x1xf32>
    %222 = vector.extract_strided_slice %199 {offsets = [0, 1], sizes = [2, 8], strides = [1, 1]} : vector<2x9xf32> to vector<2x8xf32>
    %223 = tpu.concatenate %222, %221 in 1 : vector<2x8xf32>, vector<2x1xf32> -> vector<2x9xf32>
    %cst_10 = arith.constant 0.000000e+00 : f32
    %224 = vector.broadcast %cst_10 : f32 to vector<2x1xf32>
    %225 = vector.extract_strided_slice %200 {offsets = [0, 0], sizes = [2, 8], strides = [1, 1]} : vector<2x9xf32> to vector<2x8xf32>
    %226 = tpu.concatenate %224, %225 in 1 : vector<2x1xf32>, vector<2x8xf32> -> vector<2x9xf32>
    %cst_11 = arith.constant 0.000000e+00 : f32
    %227 = vector.broadcast %cst_11 : f32 to vector<2x1xf32>
    %228 = vector.extract_strided_slice %200 {offsets = [0, 1], sizes = [2, 8], strides = [1, 1]} : vector<2x9xf32> to vector<2x8xf32>
    %229 = tpu.concatenate %228, %227 in 1 : vector<2x8xf32>, vector<2x1xf32> -> vector<2x9xf32>
    %cst_12 = arith.constant 0.000000e+00 : f32
    %230 = vector.broadcast %cst_12 : f32 to vector<2x1xf32>
    %231 = vector.extract_strided_slice %201 {offsets = [0, 0], sizes = [2, 8], strides = [1, 1]} : vector<2x9xf32> to vector<2x8xf32>
    %232 = tpu.concatenate %230, %231 in 1 : vector<2x1xf32>, vector<2x8xf32> -> vector<2x9xf32>
    %cst_13 = arith.constant 0.000000e+00 : f32
    %233 = vector.broadcast %cst_13 : f32 to vector<2x1xf32>
    %234 = vector.extract_strided_slice %201 {offsets = [0, 1], sizes = [2, 8], strides = [1, 1]} : vector<2x9xf32> to vector<2x8xf32>
    %235 = tpu.concatenate %234, %233 in 1 : vector<2x8xf32>, vector<2x1xf32> -> vector<2x9xf32>
    %cst_14 = arith.constant 0.000000e+00 : f32
    %236 = vector.broadcast %cst_14 : f32 to vector<2x1xf32>
    %237 = vector.extract_strided_slice %202 {offsets = [0, 0], sizes = [2, 8], strides = [1, 1]} : vector<2x9xf32> to vector<2x8xf32>
    %238 = tpu.concatenate %236, %237 in 1 : vector<2x1xf32>, vector<2x8xf32> -> vector<2x9xf32>
    %cst_15 = arith.constant 0.000000e+00 : f32
    %239 = vector.broadcast %cst_15 : f32 to vector<2x1xf32>
    %240 = vector.extract_strided_slice %202 {offsets = [0, 1], sizes = [2, 8], strides = [1, 1]} : vector<2x9xf32> to vector<2x8xf32>
    %241 = tpu.concatenate %240, %239 in 1 : vector<2x8xf32>, vector<2x1xf32> -> vector<2x9xf32>
    %cst_16 = arith.constant 0.000000e+00 : f32
    %242 = vector.broadcast %cst_16 : f32 to vector<2x1xf32>
    %243 = vector.extract_strided_slice %203 {offsets = [0, 0], sizes = [2, 8], strides = [1, 1]} : vector<2x9xf32> to vector<2x8xf32>
    %244 = tpu.concatenate %242, %243 in 1 : vector<2x1xf32>, vector<2x8xf32> -> vector<2x9xf32>
    %cst_17 = arith.constant 0.000000e+00 : f32
    %245 = vector.broadcast %cst_17 : f32 to vector<2x1xf32>
    %246 = vector.extract_strided_slice %203 {offsets = [0, 1], sizes = [2, 8], strides = [1, 1]} : vector<2x9xf32> to vector<2x8xf32>
    %247 = tpu.concatenate %246, %245 in 1 : vector<2x8xf32>, vector<2x1xf32> -> vector<2x9xf32>
    %cst_18 = arith.constant 0.000000e+00 : f32
    %248 = vector.broadcast %cst_18 : f32 to vector<2x1xf32>
    %249 = vector.extract_strided_slice %204 {offsets = [0, 0], sizes = [2, 8], strides = [1, 1]} : vector<2x9xf32> to vector<2x8xf32>
    %250 = tpu.concatenate %248, %249 in 1 : vector<2x1xf32>, vector<2x8xf32> -> vector<2x9xf32>
    %cst_19 = arith.constant 0.000000e+00 : f32
    %251 = vector.broadcast %cst_19 : f32 to vector<2x1xf32>
    %252 = vector.extract_strided_slice %204 {offsets = [0, 1], sizes = [2, 8], strides = [1, 1]} : vector<2x9xf32> to vector<2x8xf32>
    %253 = tpu.concatenate %252, %251 in 1 : vector<2x8xf32>, vector<2x1xf32> -> vector<2x9xf32>
    %cst_20 = arith.constant 0.000000e+00 : f32
    %254 = vector.broadcast %cst_20 : f32 to vector<2x1xf32>
    %255 = vector.extract_strided_slice %205 {offsets = [0, 0], sizes = [2, 8], strides = [1, 1]} : vector<2x9xf32> to vector<2x8xf32>
    %256 = tpu.concatenate %254, %255 in 1 : vector<2x1xf32>, vector<2x8xf32> -> vector<2x9xf32>
    %cst_21 = arith.constant 0.000000e+00 : f32
    %257 = vector.broadcast %cst_21 : f32 to vector<2x1xf32>
    %258 = vector.extract_strided_slice %205 {offsets = [0, 1], sizes = [2, 8], strides = [1, 1]} : vector<2x9xf32> to vector<2x8xf32>
    %259 = tpu.concatenate %258, %257 in 1 : vector<2x8xf32>, vector<2x1xf32> -> vector<2x9xf32>
    %c0_22 = arith.constant 0 : index
    %260 = memref.load %arg4[%c0_22] : memref<1xf32, #tpu.memory_space<smem>>
    %cst_23 = arith.constant 0.000000e+00 : f32
    %261 = vector.broadcast %cst_23 : f32 to vector<2x9xf32>
    %c1 = arith.constant 1 : index
    %c0_24 = arith.constant 0 : index
    %262 = memref.load %arg3[%c1, %c0_24] : memref<3x3xf32, #tpu.memory_space<smem>>
    %263 = vector.broadcast %262 : f32 to vector<2x9xf32>
    %264 = arith.mulf %263, %208 : vector<2x9xf32>
    %265 = arith.addf %261, %264 : vector<2x9xf32>
    %c1_25 = arith.constant 1 : index
    %c1_26 = arith.constant 1 : index
    %266 = memref.load %arg3[%c1_25, %c1_26] : memref<3x3xf32, #tpu.memory_space<smem>>
    %267 = vector.broadcast %266 : f32 to vector<2x9xf32>
    %268 = arith.mulf %267, %197 : vector<2x9xf32>
    %269 = arith.addf %265, %268 : vector<2x9xf32>
    %c1_27 = arith.constant 1 : index
    %c2 = arith.constant 2 : index
    %270 = memref.load %arg3[%c1_27, %c2] : memref<3x3xf32, #tpu.memory_space<smem>>
    %271 = vector.broadcast %270 : f32 to vector<2x9xf32>
    %272 = arith.mulf %271, %211 : vector<2x9xf32>
    %273 = arith.addf %269, %272 : vector<2x9xf32>
    %c2_28 = arith.constant 2 : index
    %c0_29 = arith.constant 0 : index
    %274 = memref.load %arg3[%c2_28, %c0_29] : memref<3x3xf32, #tpu.memory_space<smem>>
    %275 = vector.broadcast %274 : f32 to vector<2x9xf32>
    %276 = arith.mulf %275, %214 : vector<2x9xf32>
    %277 = arith.addf %273, %276 : vector<2x9xf32>
    %c2_30 = arith.constant 2 : index
    %c1_31 = arith.constant 1 : index
    %278 = memref.load %arg3[%c2_30, %c1_31] : memref<3x3xf32, #tpu.memory_space<smem>>
    %279 = vector.broadcast %278 : f32 to vector<2x9xf32>
    %280 = arith.mulf %279, %198 : vector<2x9xf32>
    %281 = arith.addf %277, %280 : vector<2x9xf32>
    %c2_32 = arith.constant 2 : index
    %c2_33 = arith.constant 2 : index
    %282 = memref.load %arg3[%c2_32, %c2_33] : memref<3x3xf32, #tpu.memory_space<smem>>
    %283 = vector.broadcast %282 : f32 to vector<2x9xf32>
    %284 = arith.mulf %283, %217 : vector<2x9xf32>
    %285 = arith.addf %281, %284 : vector<2x9xf32>
    %286 = vector.broadcast %260 : f32 to vector<2x9xf32>
    %287 = arith.addf %285, %286 : vector<2x9xf32>
    %cst_34 = arith.constant 0.000000e+00 : f32
    %288 = vector.broadcast %cst_34 : f32 to vector<2x9xf32>
    %c0_35 = arith.constant 0 : index
    %c0_36 = arith.constant 0 : index
    %289 = memref.load %arg3[%c0_35, %c0_36] : memref<3x3xf32, #tpu.memory_space<smem>>
    %290 = vector.broadcast %289 : f32 to vector<2x9xf32>
    %291 = arith.mulf %290, %208 : vector<2x9xf32>
    %292 = arith.addf %288, %291 : vector<2x9xf32>
    %c0_37 = arith.constant 0 : index
    %c1_38 = arith.constant 1 : index
    %293 = memref.load %arg3[%c0_37, %c1_38] : memref<3x3xf32, #tpu.memory_space<smem>>
    %294 = vector.broadcast %293 : f32 to vector<2x9xf32>
    %295 = arith.mulf %294, %197 : vector<2x9xf32>
    %296 = arith.addf %292, %295 : vector<2x9xf32>
    %c0_39 = arith.constant 0 : index
    %c2_40 = arith.constant 2 : index
    %297 = memref.load %arg3[%c0_39, %c2_40] : memref<3x3xf32, #tpu.memory_space<smem>>
    %298 = vector.broadcast %297 : f32 to vector<2x9xf32>
    %299 = arith.mulf %298, %211 : vector<2x9xf32>
    %300 = arith.addf %296, %299 : vector<2x9xf32>
    %c1_41 = arith.constant 1 : index
    %c0_42 = arith.constant 0 : index
    %301 = memref.load %arg3[%c1_41, %c0_42] : memref<3x3xf32, #tpu.memory_space<smem>>
    %302 = vector.broadcast %301 : f32 to vector<2x9xf32>
    %303 = arith.mulf %302, %214 : vector<2x9xf32>
    %304 = arith.addf %300, %303 : vector<2x9xf32>
    %c1_43 = arith.constant 1 : index
    %c1_44 = arith.constant 1 : index
    %305 = memref.load %arg3[%c1_43, %c1_44] : memref<3x3xf32, #tpu.memory_space<smem>>
    %306 = vector.broadcast %305 : f32 to vector<2x9xf32>
    %307 = arith.mulf %306, %198 : vector<2x9xf32>
    %308 = arith.addf %304, %307 : vector<2x9xf32>
    %c1_45 = arith.constant 1 : index
    %c2_46 = arith.constant 2 : index
    %309 = memref.load %arg3[%c1_45, %c2_46] : memref<3x3xf32, #tpu.memory_space<smem>>
    %310 = vector.broadcast %309 : f32 to vector<2x9xf32>
    %311 = arith.mulf %310, %217 : vector<2x9xf32>
    %312 = arith.addf %308, %311 : vector<2x9xf32>
    %c2_47 = arith.constant 2 : index
    %c0_48 = arith.constant 0 : index
    %313 = memref.load %arg3[%c2_47, %c0_48] : memref<3x3xf32, #tpu.memory_space<smem>>
    %314 = vector.broadcast %313 : f32 to vector<2x9xf32>
    %315 = arith.mulf %314, %220 : vector<2x9xf32>
    %316 = arith.addf %312, %315 : vector<2x9xf32>
    %c2_49 = arith.constant 2 : index
    %c1_50 = arith.constant 1 : index
    %317 = memref.load %arg3[%c2_49, %c1_50] : memref<3x3xf32, #tpu.memory_space<smem>>
    %318 = vector.broadcast %317 : f32 to vector<2x9xf32>
    %319 = arith.mulf %318, %199 : vector<2x9xf32>
    %320 = arith.addf %316, %319 : vector<2x9xf32>
    %c2_51 = arith.constant 2 : index
    %c2_52 = arith.constant 2 : index
    %321 = memref.load %arg3[%c2_51, %c2_52] : memref<3x3xf32, #tpu.memory_space<smem>>
    %322 = vector.broadcast %321 : f32 to vector<2x9xf32>
    %323 = arith.mulf %322, %223 : vector<2x9xf32>
    %324 = arith.addf %320, %323 : vector<2x9xf32>
    %325 = vector.broadcast %260 : f32 to vector<2x9xf32>
    %326 = arith.addf %324, %325 : vector<2x9xf32>
    %cst_53 = arith.constant 0.000000e+00 : f32
    %327 = vector.broadcast %cst_53 : f32 to vector<2x9xf32>
    %c0_54 = arith.constant 0 : index
    %c0_55 = arith.constant 0 : index
    %328 = memref.load %arg3[%c0_54, %c0_55] : memref<3x3xf32, #tpu.memory_space<smem>>
    %329 = vector.broadcast %328 : f32 to vector<2x9xf32>
    %330 = arith.mulf %329, %214 : vector<2x9xf32>
    %331 = arith.addf %327, %330 : vector<2x9xf32>
    %c0_56 = arith.constant 0 : index
    %c1_57 = arith.constant 1 : index
    %332 = memref.load %arg3[%c0_56, %c1_57] : memref<3x3xf32, #tpu.memory_space<smem>>
    %333 = vector.broadcast %332 : f32 to vector<2x9xf32>
    %334 = arith.mulf %333, %198 : vector<2x9xf32>
    %335 = arith.addf %331, %334 : vector<2x9xf32>
    %c0_58 = arith.constant 0 : index
    %c2_59 = arith.constant 2 : index
    %336 = memref.load %arg3[%c0_58, %c2_59] : memref<3x3xf32, #tpu.memory_space<smem>>
    %337 = vector.broadcast %336 : f32 to vector<2x9xf32>
    %338 = arith.mulf %337, %217 : vector<2x9xf32>
    %339 = arith.addf %335, %338 : vector<2x9xf32>
    %c1_60 = arith.constant 1 : index
    %c0_61 = arith.constant 0 : index
    %340 = memref.load %arg3[%c1_60, %c0_61] : memref<3x3xf32, #tpu.memory_space<smem>>
    %341 = vector.broadcast %340 : f32 to vector<2x9xf32>
    %342 = arith.mulf %341, %220 : vector<2x9xf32>
    %343 = arith.addf %339, %342 : vector<2x9xf32>
    %c1_62 = arith.constant 1 : index
    %c1_63 = arith.constant 1 : index
    %344 = memref.load %arg3[%c1_62, %c1_63] : memref<3x3xf32, #tpu.memory_space<smem>>
    %345 = vector.broadcast %344 : f32 to vector<2x9xf32>
    %346 = arith.mulf %345, %199 : vector<2x9xf32>
    %347 = arith.addf %343, %346 : vector<2x9xf32>
    %c1_64 = arith.constant 1 : index
    %c2_65 = arith.constant 2 : index
    %348 = memref.load %arg3[%c1_64, %c2_65] : memref<3x3xf32, #tpu.memory_space<smem>>
    %349 = vector.broadcast %348 : f32 to vector<2x9xf32>
    %350 = arith.mulf %349, %223 : vector<2x9xf32>
    %351 = arith.addf %347, %350 : vector<2x9xf32>
    %c2_66 = arith.constant 2 : index
    %c0_67 = arith.constant 0 : index
    %352 = memref.load %arg3[%c2_66, %c0_67] : memref<3x3xf32, #tpu.memory_space<smem>>
    %353 = vector.broadcast %352 : f32 to vector<2x9xf32>
    %354 = arith.mulf %353, %226 : vector<2x9xf32>
    %355 = arith.addf %351, %354 : vector<2x9xf32>
    %c2_68 = arith.constant 2 : index
    %c1_69 = arith.constant 1 : index
    %356 = memref.load %arg3[%c2_68, %c1_69] : memref<3x3xf32, #tpu.memory_space<smem>>
    %357 = vector.broadcast %356 : f32 to vector<2x9xf32>
    %358 = arith.mulf %357, %200 : vector<2x9xf32>
    %359 = arith.addf %355, %358 : vector<2x9xf32>
    %c2_70 = arith.constant 2 : index
    %c2_71 = arith.constant 2 : index
    %360 = memref.load %arg3[%c2_70, %c2_71] : memref<3x3xf32, #tpu.memory_space<smem>>
    %361 = vector.broadcast %360 : f32 to vector<2x9xf32>
    %362 = arith.mulf %361, %229 : vector<2x9xf32>
    %363 = arith.addf %359, %362 : vector<2x9xf32>
    %364 = vector.broadcast %260 : f32 to vector<2x9xf32>
    %365 = arith.addf %363, %364 : vector<2x9xf32>
    %cst_72 = arith.constant 0.000000e+00 : f32
    %366 = vector.broadcast %cst_72 : f32 to vector<2x9xf32>
    %c0_73 = arith.constant 0 : index
    %c0_74 = arith.constant 0 : index
    %367 = memref.load %arg3[%c0_73, %c0_74] : memref<3x3xf32, #tpu.memory_space<smem>>
    %368 = vector.broadcast %367 : f32 to vector<2x9xf32>
    %369 = arith.mulf %368, %220 : vector<2x9xf32>
    %370 = arith.addf %366, %369 : vector<2x9xf32>
    %c0_75 = arith.constant 0 : index
    %c1_76 = arith.constant 1 : index
    %371 = memref.load %arg3[%c0_75, %c1_76] : memref<3x3xf32, #tpu.memory_space<smem>>
    %372 = vector.broadcast %371 : f32 to vector<2x9xf32>
    %373 = arith.mulf %372, %199 : vector<2x9xf32>
    %374 = arith.addf %370, %373 : vector<2x9xf32>
    %c0_77 = arith.constant 0 : index
    %c2_78 = arith.constant 2 : index
    %375 = memref.load %arg3[%c0_77, %c2_78] : memref<3x3xf32, #tpu.memory_space<smem>>
    %376 = vector.broadcast %375 : f32 to vector<2x9xf32>
    %377 = arith.mulf %376, %223 : vector<2x9xf32>
    %378 = arith.addf %374, %377 : vector<2x9xf32>
    %c1_79 = arith.constant 1 : index
    %c0_80 = arith.constant 0 : index
    %379 = memref.load %arg3[%c1_79, %c0_80] : memref<3x3xf32, #tpu.memory_space<smem>>
    %380 = vector.broadcast %379 : f32 to vector<2x9xf32>
    %381 = arith.mulf %380, %226 : vector<2x9xf32>
    %382 = arith.addf %378, %381 : vector<2x9xf32>
    %c1_81 = arith.constant 1 : index
    %c1_82 = arith.constant 1 : index
    %383 = memref.load %arg3[%c1_81, %c1_82] : memref<3x3xf32, #tpu.memory_space<smem>>
    %384 = vector.broadcast %383 : f32 to vector<2x9xf32>
    %385 = arith.mulf %384, %200 : vector<2x9xf32>
    %386 = arith.addf %382, %385 : vector<2x9xf32>
    %c1_83 = arith.constant 1 : index
    %c2_84 = arith.constant 2 : index
    %387 = memref.load %arg3[%c1_83, %c2_84] : memref<3x3xf32, #tpu.memory_space<smem>>
    %388 = vector.broadcast %387 : f32 to vector<2x9xf32>
    %389 = arith.mulf %388, %229 : vector<2x9xf32>
    %390 = arith.addf %386, %389 : vector<2x9xf32>
    %c2_85 = arith.constant 2 : index
    %c0_86 = arith.constant 0 : index
    %391 = memref.load %arg3[%c2_85, %c0_86] : memref<3x3xf32, #tpu.memory_space<smem>>
    %392 = vector.broadcast %391 : f32 to vector<2x9xf32>
    %393 = arith.mulf %392, %232 : vector<2x9xf32>
    %394 = arith.addf %390, %393 : vector<2x9xf32>
    %c2_87 = arith.constant 2 : index
    %c1_88 = arith.constant 1 : index
    %395 = memref.load %arg3[%c2_87, %c1_88] : memref<3x3xf32, #tpu.memory_space<smem>>
    %396 = vector.broadcast %395 : f32 to vector<2x9xf32>
    %397 = arith.mulf %396, %201 : vector<2x9xf32>
    %398 = arith.addf %394, %397 : vector<2x9xf32>
    %c2_89 = arith.constant 2 : index
    %c2_90 = arith.constant 2 : index
    %399 = memref.load %arg3[%c2_89, %c2_90] : memref<3x3xf32, #tpu.memory_space<smem>>
    %400 = vector.broadcast %399 : f32 to vector<2x9xf32>
    %401 = arith.mulf %400, %235 : vector<2x9xf32>
    %402 = arith.addf %398, %401 : vector<2x9xf32>
    %403 = vector.broadcast %260 : f32 to vector<2x9xf32>
    %404 = arith.addf %402, %403 : vector<2x9xf32>
    %cst_91 = arith.constant 0.000000e+00 : f32
    %405 = vector.broadcast %cst_91 : f32 to vector<2x9xf32>
    %c0_92 = arith.constant 0 : index
    %c0_93 = arith.constant 0 : index
    %406 = memref.load %arg3[%c0_92, %c0_93] : memref<3x3xf32, #tpu.memory_space<smem>>
    %407 = vector.broadcast %406 : f32 to vector<2x9xf32>
    %408 = arith.mulf %407, %226 : vector<2x9xf32>
    %409 = arith.addf %405, %408 : vector<2x9xf32>
    %c0_94 = arith.constant 0 : index
    %c1_95 = arith.constant 1 : index
    %410 = memref.load %arg3[%c0_94, %c1_95] : memref<3x3xf32, #tpu.memory_space<smem>>
    %411 = vector.broadcast %410 : f32 to vector<2x9xf32>
    %412 = arith.mulf %411, %200 : vector<2x9xf32>
    %413 = arith.addf %409, %412 : vector<2x9xf32>
    %c0_96 = arith.constant 0 : index
    %c2_97 = arith.constant 2 : index
    %414 = memref.load %arg3[%c0_96, %c2_97] : memref<3x3xf32, #tpu.memory_space<smem>>
    %415 = vector.broadcast %414 : f32 to vector<2x9xf32>
    %416 = arith.mulf %415, %229 : vector<2x9xf32>
    %417 = arith.addf %413, %416 : vector<2x9xf32>
    %c1_98 = arith.constant 1 : index
    %c0_99 = arith.constant 0 : index
    %418 = memref.load %arg3[%c1_98, %c0_99] : memref<3x3xf32, #tpu.memory_space<smem>>
    %419 = vector.broadcast %418 : f32 to vector<2x9xf32>
    %420 = arith.mulf %419, %232 : vector<2x9xf32>
    %421 = arith.addf %417, %420 : vector<2x9xf32>
    %c1_100 = arith.constant 1 : index
    %c1_101 = arith.constant 1 : index
    %422 = memref.load %arg3[%c1_100, %c1_101] : memref<3x3xf32, #tpu.memory_space<smem>>
    %423 = vector.broadcast %422 : f32 to vector<2x9xf32>
    %424 = arith.mulf %423, %201 : vector<2x9xf32>
    %425 = arith.addf %421, %424 : vector<2x9xf32>
    %c1_102 = arith.constant 1 : index
    %c2_103 = arith.constant 2 : index
    %426 = memref.load %arg3[%c1_102, %c2_103] : memref<3x3xf32, #tpu.memory_space<smem>>
    %427 = vector.broadcast %426 : f32 to vector<2x9xf32>
    %428 = arith.mulf %427, %235 : vector<2x9xf32>
    %429 = arith.addf %425, %428 : vector<2x9xf32>
    %c2_104 = arith.constant 2 : index
    %c0_105 = arith.constant 0 : index
    %430 = memref.load %arg3[%c2_104, %c0_105] : memref<3x3xf32, #tpu.memory_space<smem>>
    %431 = vector.broadcast %430 : f32 to vector<2x9xf32>
    %432 = arith.mulf %431, %238 : vector<2x9xf32>
    %433 = arith.addf %429, %432 : vector<2x9xf32>
    %c2_106 = arith.constant 2 : index
    %c1_107 = arith.constant 1 : index
    %434 = memref.load %arg3[%c2_106, %c1_107] : memref<3x3xf32, #tpu.memory_space<smem>>
    %435 = vector.broadcast %434 : f32 to vector<2x9xf32>
    %436 = arith.mulf %435, %202 : vector<2x9xf32>
    %437 = arith.addf %433, %436 : vector<2x9xf32>
    %c2_108 = arith.constant 2 : index
    %c2_109 = arith.constant 2 : index
    %438 = memref.load %arg3[%c2_108, %c2_109] : memref<3x3xf32, #tpu.memory_space<smem>>
    %439 = vector.broadcast %438 : f32 to vector<2x9xf32>
    %440 = arith.mulf %439, %241 : vector<2x9xf32>
    %441 = arith.addf %437, %440 : vector<2x9xf32>
    %442 = vector.broadcast %260 : f32 to vector<2x9xf32>
    %443 = arith.addf %441, %442 : vector<2x9xf32>
    %cst_110 = arith.constant 0.000000e+00 : f32
    %444 = vector.broadcast %cst_110 : f32 to vector<2x9xf32>
    %c0_111 = arith.constant 0 : index
    %c0_112 = arith.constant 0 : index
    %445 = memref.load %arg3[%c0_111, %c0_112] : memref<3x3xf32, #tpu.memory_space<smem>>
    %446 = vector.broadcast %445 : f32 to vector<2x9xf32>
    %447 = arith.mulf %446, %232 : vector<2x9xf32>
    %448 = arith.addf %444, %447 : vector<2x9xf32>
    %c0_113 = arith.constant 0 : index
    %c1_114 = arith.constant 1 : index
    %449 = memref.load %arg3[%c0_113, %c1_114] : memref<3x3xf32, #tpu.memory_space<smem>>
    %450 = vector.broadcast %449 : f32 to vector<2x9xf32>
    %451 = arith.mulf %450, %201 : vector<2x9xf32>
    %452 = arith.addf %448, %451 : vector<2x9xf32>
    %c0_115 = arith.constant 0 : index
    %c2_116 = arith.constant 2 : index
    %453 = memref.load %arg3[%c0_115, %c2_116] : memref<3x3xf32, #tpu.memory_space<smem>>
    %454 = vector.broadcast %453 : f32 to vector<2x9xf32>
    %455 = arith.mulf %454, %235 : vector<2x9xf32>
    %456 = arith.addf %452, %455 : vector<2x9xf32>
    %c1_117 = arith.constant 1 : index
    %c0_118 = arith.constant 0 : index
    %457 = memref.load %arg3[%c1_117, %c0_118] : memref<3x3xf32, #tpu.memory_space<smem>>
    %458 = vector.broadcast %457 : f32 to vector<2x9xf32>
    %459 = arith.mulf %458, %238 : vector<2x9xf32>
    %460 = arith.addf %456, %459 : vector<2x9xf32>
    %c1_119 = arith.constant 1 : index
    %c1_120 = arith.constant 1 : index
    %461 = memref.load %arg3[%c1_119, %c1_120] : memref<3x3xf32, #tpu.memory_space<smem>>
    %462 = vector.broadcast %461 : f32 to vector<2x9xf32>
    %463 = arith.mulf %462, %202 : vector<2x9xf32>
    %464 = arith.addf %460, %463 : vector<2x9xf32>
    %c1_121 = arith.constant 1 : index
    %c2_122 = arith.constant 2 : index
    %465 = memref.load %arg3[%c1_121, %c2_122] : memref<3x3xf32, #tpu.memory_space<smem>>
    %466 = vector.broadcast %465 : f32 to vector<2x9xf32>
    %467 = arith.mulf %466, %241 : vector<2x9xf32>
    %468 = arith.addf %464, %467 : vector<2x9xf32>
    %c2_123 = arith.constant 2 : index
    %c0_124 = arith.constant 0 : index
    %469 = memref.load %arg3[%c2_123, %c0_124] : memref<3x3xf32, #tpu.memory_space<smem>>
    %470 = vector.broadcast %469 : f32 to vector<2x9xf32>
    %471 = arith.mulf %470, %244 : vector<2x9xf32>
    %472 = arith.addf %468, %471 : vector<2x9xf32>
    %c2_125 = arith.constant 2 : index
    %c1_126 = arith.constant 1 : index
    %473 = memref.load %arg3[%c2_125, %c1_126] : memref<3x3xf32, #tpu.memory_space<smem>>
    %474 = vector.broadcast %473 : f32 to vector<2x9xf32>
    %475 = arith.mulf %474, %203 : vector<2x9xf32>
    %476 = arith.addf %472, %475 : vector<2x9xf32>
    %c2_127 = arith.constant 2 : index
    %c2_128 = arith.constant 2 : index
    %477 = memref.load %arg3[%c2_127, %c2_128] : memref<3x3xf32, #tpu.memory_space<smem>>
    %478 = vector.broadcast %477 : f32 to vector<2x9xf32>
    %479 = arith.mulf %478, %247 : vector<2x9xf32>
    %480 = arith.addf %476, %479 : vector<2x9xf32>
    %481 = vector.broadcast %260 : f32 to vector<2x9xf32>
    %482 = arith.addf %480, %481 : vector<2x9xf32>
    %cst_129 = arith.constant 0.000000e+00 : f32
    %483 = vector.broadcast %cst_129 : f32 to vector<2x9xf32>
    %c0_130 = arith.constant 0 : index
    %c0_131 = arith.constant 0 : index
    %484 = memref.load %arg3[%c0_130, %c0_131] : memref<3x3xf32, #tpu.memory_space<smem>>
    %485 = vector.broadcast %484 : f32 to vector<2x9xf32>
    %486 = arith.mulf %485, %238 : vector<2x9xf32>
    %487 = arith.addf %483, %486 : vector<2x9xf32>
    %c0_132 = arith.constant 0 : index
    %c1_133 = arith.constant 1 : index
    %488 = memref.load %arg3[%c0_132, %c1_133] : memref<3x3xf32, #tpu.memory_space<smem>>
    %489 = vector.broadcast %488 : f32 to vector<2x9xf32>
    %490 = arith.mulf %489, %202 : vector<2x9xf32>
    %491 = arith.addf %487, %490 : vector<2x9xf32>
    %c0_134 = arith.constant 0 : index
    %c2_135 = arith.constant 2 : index
    %492 = memref.load %arg3[%c0_134, %c2_135] : memref<3x3xf32, #tpu.memory_space<smem>>
    %493 = vector.broadcast %492 : f32 to vector<2x9xf32>
    %494 = arith.mulf %493, %241 : vector<2x9xf32>
    %495 = arith.addf %491, %494 : vector<2x9xf32>
    %c1_136 = arith.constant 1 : index
    %c0_137 = arith.constant 0 : index
    %496 = memref.load %arg3[%c1_136, %c0_137] : memref<3x3xf32, #tpu.memory_space<smem>>
    %497 = vector.broadcast %496 : f32 to vector<2x9xf32>
    %498 = arith.mulf %497, %244 : vector<2x9xf32>
    %499 = arith.addf %495, %498 : vector<2x9xf32>
    %c1_138 = arith.constant 1 : index
    %c1_139 = arith.constant 1 : index
    %500 = memref.load %arg3[%c1_138, %c1_139] : memref<3x3xf32, #tpu.memory_space<smem>>
    %501 = vector.broadcast %500 : f32 to vector<2x9xf32>
    %502 = arith.mulf %501, %203 : vector<2x9xf32>
    %503 = arith.addf %499, %502 : vector<2x9xf32>
    %c1_140 = arith.constant 1 : index
    %c2_141 = arith.constant 2 : index
    %504 = memref.load %arg3[%c1_140, %c2_141] : memref<3x3xf32, #tpu.memory_space<smem>>
    %505 = vector.broadcast %504 : f32 to vector<2x9xf32>
    %506 = arith.mulf %505, %247 : vector<2x9xf32>
    %507 = arith.addf %503, %506 : vector<2x9xf32>
    %c2_142 = arith.constant 2 : index
    %c0_143 = arith.constant 0 : index
    %508 = memref.load %arg3[%c2_142, %c0_143] : memref<3x3xf32, #tpu.memory_space<smem>>
    %509 = vector.broadcast %508 : f32 to vector<2x9xf32>
    %510 = arith.mulf %509, %250 : vector<2x9xf32>
    %511 = arith.addf %507, %510 : vector<2x9xf32>
    %c2_144 = arith.constant 2 : index
    %c1_145 = arith.constant 1 : index
    %512 = memref.load %arg3[%c2_144, %c1_145] : memref<3x3xf32, #tpu.memory_space<smem>>
    %513 = vector.broadcast %512 : f32 to vector<2x9xf32>
    %514 = arith.mulf %513, %204 : vector<2x9xf32>
    %515 = arith.addf %511, %514 : vector<2x9xf32>
    %c2_146 = arith.constant 2 : index
    %c2_147 = arith.constant 2 : index
    %516 = memref.load %arg3[%c2_146, %c2_147] : memref<3x3xf32, #tpu.memory_space<smem>>
    %517 = vector.broadcast %516 : f32 to vector<2x9xf32>
    %518 = arith.mulf %517, %253 : vector<2x9xf32>
    %519 = arith.addf %515, %518 : vector<2x9xf32>
    %520 = vector.broadcast %260 : f32 to vector<2x9xf32>
    %521 = arith.addf %519, %520 : vector<2x9xf32>
    %cst_148 = arith.constant 0.000000e+00 : f32
    %522 = vector.broadcast %cst_148 : f32 to vector<2x9xf32>
    %c0_149 = arith.constant 0 : index
    %c0_150 = arith.constant 0 : index
    %523 = memref.load %arg3[%c0_149, %c0_150] : memref<3x3xf32, #tpu.memory_space<smem>>
    %524 = vector.broadcast %523 : f32 to vector<2x9xf32>
    %525 = arith.mulf %524, %244 : vector<2x9xf32>
    %526 = arith.addf %522, %525 : vector<2x9xf32>
    %c0_151 = arith.constant 0 : index
    %c1_152 = arith.constant 1 : index
    %527 = memref.load %arg3[%c0_151, %c1_152] : memref<3x3xf32, #tpu.memory_space<smem>>
    %528 = vector.broadcast %527 : f32 to vector<2x9xf32>
    %529 = arith.mulf %528, %203 : vector<2x9xf32>
    %530 = arith.addf %526, %529 : vector<2x9xf32>
    %c0_153 = arith.constant 0 : index
    %c2_154 = arith.constant 2 : index
    %531 = memref.load %arg3[%c0_153, %c2_154] : memref<3x3xf32, #tpu.memory_space<smem>>
    %532 = vector.broadcast %531 : f32 to vector<2x9xf32>
    %533 = arith.mulf %532, %247 : vector<2x9xf32>
    %534 = arith.addf %530, %533 : vector<2x9xf32>
    %c1_155 = arith.constant 1 : index
    %c0_156 = arith.constant 0 : index
    %535 = memref.load %arg3[%c1_155, %c0_156] : memref<3x3xf32, #tpu.memory_space<smem>>
    %536 = vector.broadcast %535 : f32 to vector<2x9xf32>
    %537 = arith.mulf %536, %250 : vector<2x9xf32>
    %538 = arith.addf %534, %537 : vector<2x9xf32>
    %c1_157 = arith.constant 1 : index
    %c1_158 = arith.constant 1 : index
    %539 = memref.load %arg3[%c1_157, %c1_158] : memref<3x3xf32, #tpu.memory_space<smem>>
    %540 = vector.broadcast %539 : f32 to vector<2x9xf32>
    %541 = arith.mulf %540, %204 : vector<2x9xf32>
    %542 = arith.addf %538, %541 : vector<2x9xf32>
    %c1_159 = arith.constant 1 : index
    %c2_160 = arith.constant 2 : index
    %543 = memref.load %arg3[%c1_159, %c2_160] : memref<3x3xf32, #tpu.memory_space<smem>>
    %544 = vector.broadcast %543 : f32 to vector<2x9xf32>
    %545 = arith.mulf %544, %253 : vector<2x9xf32>
    %546 = arith.addf %542, %545 : vector<2x9xf32>
    %c2_161 = arith.constant 2 : index
    %c0_162 = arith.constant 0 : index
    %547 = memref.load %arg3[%c2_161, %c0_162] : memref<3x3xf32, #tpu.memory_space<smem>>
    %548 = vector.broadcast %547 : f32 to vector<2x9xf32>
    %549 = arith.mulf %548, %256 : vector<2x9xf32>
    %550 = arith.addf %546, %549 : vector<2x9xf32>
    %c2_163 = arith.constant 2 : index
    %c1_164 = arith.constant 1 : index
    %551 = memref.load %arg3[%c2_163, %c1_164] : memref<3x3xf32, #tpu.memory_space<smem>>
    %552 = vector.broadcast %551 : f32 to vector<2x9xf32>
    %553 = arith.mulf %552, %205 : vector<2x9xf32>
    %554 = arith.addf %550, %553 : vector<2x9xf32>
    %c2_165 = arith.constant 2 : index
    %c2_166 = arith.constant 2 : index
    %555 = memref.load %arg3[%c2_165, %c2_166] : memref<3x3xf32, #tpu.memory_space<smem>>
    %556 = vector.broadcast %555 : f32 to vector<2x9xf32>
    %557 = arith.mulf %556, %259 : vector<2x9xf32>
    %558 = arith.addf %554, %557 : vector<2x9xf32>
    %559 = vector.broadcast %260 : f32 to vector<2x9xf32>
    %560 = arith.addf %558, %559 : vector<2x9xf32>
    %cst_167 = arith.constant 0.000000e+00 : f32
    %561 = vector.broadcast %cst_167 : f32 to vector<2x9xf32>
    %c0_168 = arith.constant 0 : index
    %c0_169 = arith.constant 0 : index
    %562 = memref.load %arg3[%c0_168, %c0_169] : memref<3x3xf32, #tpu.memory_space<smem>>
    %563 = vector.broadcast %562 : f32 to vector<2x9xf32>
    %564 = arith.mulf %563, %250 : vector<2x9xf32>
    %565 = arith.addf %561, %564 : vector<2x9xf32>
    %c0_170 = arith.constant 0 : index
    %c1_171 = arith.constant 1 : index
    %566 = memref.load %arg3[%c0_170, %c1_171] : memref<3x3xf32, #tpu.memory_space<smem>>
    %567 = vector.broadcast %566 : f32 to vector<2x9xf32>
    %568 = arith.mulf %567, %204 : vector<2x9xf32>
    %569 = arith.addf %565, %568 : vector<2x9xf32>
    %c0_172 = arith.constant 0 : index
    %c2_173 = arith.constant 2 : index
    %570 = memref.load %arg3[%c0_172, %c2_173] : memref<3x3xf32, #tpu.memory_space<smem>>
    %571 = vector.broadcast %570 : f32 to vector<2x9xf32>
    %572 = arith.mulf %571, %253 : vector<2x9xf32>
    %573 = arith.addf %569, %572 : vector<2x9xf32>
    %c1_174 = arith.constant 1 : index
    %c0_175 = arith.constant 0 : index
    %574 = memref.load %arg3[%c1_174, %c0_175] : memref<3x3xf32, #tpu.memory_space<smem>>
    %575 = vector.broadcast %574 : f32 to vector<2x9xf32>
    %576 = arith.mulf %575, %256 : vector<2x9xf32>
    %577 = arith.addf %573, %576 : vector<2x9xf32>
    %c1_176 = arith.constant 1 : index
    %c1_177 = arith.constant 1 : index
    %578 = memref.load %arg3[%c1_176, %c1_177] : memref<3x3xf32, #tpu.memory_space<smem>>
    %579 = vector.broadcast %578 : f32 to vector<2x9xf32>
    %580 = arith.mulf %579, %205 : vector<2x9xf32>
    %581 = arith.addf %577, %580 : vector<2x9xf32>
    %c1_178 = arith.constant 1 : index
    %c2_179 = arith.constant 2 : index
    %582 = memref.load %arg3[%c1_178, %c2_179] : memref<3x3xf32, #tpu.memory_space<smem>>
    %583 = vector.broadcast %582 : f32 to vector<2x9xf32>
    %584 = arith.mulf %583, %259 : vector<2x9xf32>
    %585 = arith.addf %581, %584 : vector<2x9xf32>
    %586 = vector.broadcast %260 : f32 to vector<2x9xf32>
    %587 = arith.addf %585, %586 : vector<2x9xf32>
    %c0_180 = arith.constant 0 : index
    %588 = memref.load %arg6[%c0_180] : memref<1xf32, #tpu.memory_space<smem>>
    %c0_181 = arith.constant 0 : index
    %c0_182 = arith.constant 0 : index
    %589 = memref.load %arg5[%c0_181, %c0_182] : memref<2x2xf32, #tpu.memory_space<smem>>
    %590 = vector.extract_strided_slice %287 {offsets = [0, 0], sizes = [2, 8], strides = [1, 1]} : vector<2x9xf32> to vector<2x8xf32>
    %591 = vector.broadcast %589 : f32 to vector<2x8xf32>
    %592 = arith.mulf %591, %590 : vector<2x8xf32>
    %c0_183 = arith.constant 0 : index
    %c1_184 = arith.constant 1 : index
    %593 = memref.load %arg5[%c0_183, %c1_184] : memref<2x2xf32, #tpu.memory_space<smem>>
    %594 = vector.extract_strided_slice %287 {offsets = [0, 1], sizes = [2, 8], strides = [1, 1]} : vector<2x9xf32> to vector<2x8xf32>
    %595 = vector.broadcast %593 : f32 to vector<2x8xf32>
    %596 = arith.mulf %595, %594 : vector<2x8xf32>
    %597 = arith.addf %592, %596 : vector<2x8xf32>
    %c1_185 = arith.constant 1 : index
    %c0_186 = arith.constant 0 : index
    %598 = memref.load %arg5[%c1_185, %c0_186] : memref<2x2xf32, #tpu.memory_space<smem>>
    %599 = vector.extract_strided_slice %326 {offsets = [0, 0], sizes = [2, 8], strides = [1, 1]} : vector<2x9xf32> to vector<2x8xf32>
    %600 = vector.broadcast %598 : f32 to vector<2x8xf32>
    %601 = arith.mulf %600, %599 : vector<2x8xf32>
    %602 = arith.addf %597, %601 : vector<2x8xf32>
    %c1_187 = arith.constant 1 : index
    %c1_188 = arith.constant 1 : index
    %603 = memref.load %arg5[%c1_187, %c1_188] : memref<2x2xf32, #tpu.memory_space<smem>>
    %604 = vector.extract_strided_slice %326 {offsets = [0, 1], sizes = [2, 8], strides = [1, 1]} : vector<2x9xf32> to vector<2x8xf32>
    %605 = vector.broadcast %603 : f32 to vector<2x8xf32>
    %606 = arith.mulf %605, %604 : vector<2x8xf32>
    %607 = arith.addf %602, %606 : vector<2x8xf32>
    %608 = vector.broadcast %588 : f32 to vector<2x8xf32>
    %609 = arith.addf %607, %608 : vector<2x8xf32>
    %cst_189 = arith.constant 0.000000e+00 : f32
    %610 = vector.broadcast %cst_189 : f32 to vector<2x8xf32>
    %611 = arith.maximumf %609, %610 : vector<2x8xf32>
    %612 = vector.broadcast %cst_189 : f32 to vector<2x8xf32>
    %613 = arith.subf %609, %612 : vector<2x8xf32>
    %614 = arith.cmpf one, %613, %613 : vector<2x8xf32>
    %615 = vector.broadcast %cst_189 : f32 to vector<2x8xf32>
    %616 = arith.addf %609, %615 : vector<2x8xf32>
    %617 = math.absf %613 : vector<2x8xf32>
    %cst_190 = arith.constant 0.000000e+00 : f32
    %618 = vector.broadcast %cst_190 : f32 to vector<2x8xf32>
    %619 = arith.subf %618, %617 : vector<2x8xf32>
    %620 = math.exp %619 : vector<2x8xf32>
    %621 = math.log1p %620 : vector<2x8xf32>
    %622 = arith.addf %611, %621 : vector<2x8xf32>
    %623 = arith.select %614, %616, %622 : vector<2x8xi1>, vector<2x8xf32>
    %c0_191 = arith.constant 0 : index
    %c0_192 = arith.constant 0 : index
    %624 = memref.load %arg5[%c0_191, %c0_192] : memref<2x2xf32, #tpu.memory_space<smem>>
    %625 = vector.extract_strided_slice %326 {offsets = [0, 0], sizes = [2, 8], strides = [1, 1]} : vector<2x9xf32> to vector<2x8xf32>
    %626 = vector.broadcast %624 : f32 to vector<2x8xf32>
    %627 = arith.mulf %626, %625 : vector<2x8xf32>
    %c0_193 = arith.constant 0 : index
    %c1_194 = arith.constant 1 : index
    %628 = memref.load %arg5[%c0_193, %c1_194] : memref<2x2xf32, #tpu.memory_space<smem>>
    %629 = vector.extract_strided_slice %326 {offsets = [0, 1], sizes = [2, 8], strides = [1, 1]} : vector<2x9xf32> to vector<2x8xf32>
    %630 = vector.broadcast %628 : f32 to vector<2x8xf32>
    %631 = arith.mulf %630, %629 : vector<2x8xf32>
    %632 = arith.addf %627, %631 : vector<2x8xf32>
    %c1_195 = arith.constant 1 : index
    %c0_196 = arith.constant 0 : index
    %633 = memref.load %arg5[%c1_195, %c0_196] : memref<2x2xf32, #tpu.memory_space<smem>>
    %634 = vector.extract_strided_slice %365 {offsets = [0, 0], sizes = [2, 8], strides = [1, 1]} : vector<2x9xf32> to vector<2x8xf32>
    %635 = vector.broadcast %633 : f32 to vector<2x8xf32>
    %636 = arith.mulf %635, %634 : vector<2x8xf32>
    %637 = arith.addf %632, %636 : vector<2x8xf32>
    %c1_197 = arith.constant 1 : index
    %c1_198 = arith.constant 1 : index
    %638 = memref.load %arg5[%c1_197, %c1_198] : memref<2x2xf32, #tpu.memory_space<smem>>
    %639 = vector.extract_strided_slice %365 {offsets = [0, 1], sizes = [2, 8], strides = [1, 1]} : vector<2x9xf32> to vector<2x8xf32>
    %640 = vector.broadcast %638 : f32 to vector<2x8xf32>
    %641 = arith.mulf %640, %639 : vector<2x8xf32>
    %642 = arith.addf %637, %641 : vector<2x8xf32>
    %643 = vector.broadcast %588 : f32 to vector<2x8xf32>
    %644 = arith.addf %642, %643 : vector<2x8xf32>
    %cst_199 = arith.constant 0.000000e+00 : f32
    %645 = vector.broadcast %cst_199 : f32 to vector<2x8xf32>
    %646 = arith.maximumf %644, %645 : vector<2x8xf32>
    %647 = vector.broadcast %cst_199 : f32 to vector<2x8xf32>
    %648 = arith.subf %644, %647 : vector<2x8xf32>
    %649 = arith.cmpf one, %648, %648 : vector<2x8xf32>
    %650 = vector.broadcast %cst_199 : f32 to vector<2x8xf32>
    %651 = arith.addf %644, %650 : vector<2x8xf32>
    %652 = math.absf %648 : vector<2x8xf32>
    %cst_200 = arith.constant 0.000000e+00 : f32
    %653 = vector.broadcast %cst_200 : f32 to vector<2x8xf32>
    %654 = arith.subf %653, %652 : vector<2x8xf32>
    %655 = math.exp %654 : vector<2x8xf32>
    %656 = math.log1p %655 : vector<2x8xf32>
    %657 = arith.addf %646, %656 : vector<2x8xf32>
    %658 = arith.select %649, %651, %657 : vector<2x8xi1>, vector<2x8xf32>
    %c0_201 = arith.constant 0 : index
    %c0_202 = arith.constant 0 : index
    %659 = memref.load %arg5[%c0_201, %c0_202] : memref<2x2xf32, #tpu.memory_space<smem>>
    %660 = vector.extract_strided_slice %365 {offsets = [0, 0], sizes = [2, 8], strides = [1, 1]} : vector<2x9xf32> to vector<2x8xf32>
    %661 = vector.broadcast %659 : f32 to vector<2x8xf32>
    %662 = arith.mulf %661, %660 : vector<2x8xf32>
    %c0_203 = arith.constant 0 : index
    %c1_204 = arith.constant 1 : index
    %663 = memref.load %arg5[%c0_203, %c1_204] : memref<2x2xf32, #tpu.memory_space<smem>>
    %664 = vector.extract_strided_slice %365 {offsets = [0, 1], sizes = [2, 8], strides = [1, 1]} : vector<2x9xf32> to vector<2x8xf32>
    %665 = vector.broadcast %663 : f32 to vector<2x8xf32>
    %666 = arith.mulf %665, %664 : vector<2x8xf32>
    %667 = arith.addf %662, %666 : vector<2x8xf32>
    %c1_205 = arith.constant 1 : index
    %c0_206 = arith.constant 0 : index
    %668 = memref.load %arg5[%c1_205, %c0_206] : memref<2x2xf32, #tpu.memory_space<smem>>
    %669 = vector.extract_strided_slice %404 {offsets = [0, 0], sizes = [2, 8], strides = [1, 1]} : vector<2x9xf32> to vector<2x8xf32>
    %670 = vector.broadcast %668 : f32 to vector<2x8xf32>
    %671 = arith.mulf %670, %669 : vector<2x8xf32>
    %672 = arith.addf %667, %671 : vector<2x8xf32>
    %c1_207 = arith.constant 1 : index
    %c1_208 = arith.constant 1 : index
    %673 = memref.load %arg5[%c1_207, %c1_208] : memref<2x2xf32, #tpu.memory_space<smem>>
    %674 = vector.extract_strided_slice %404 {offsets = [0, 1], sizes = [2, 8], strides = [1, 1]} : vector<2x9xf32> to vector<2x8xf32>
    %675 = vector.broadcast %673 : f32 to vector<2x8xf32>
    %676 = arith.mulf %675, %674 : vector<2x8xf32>
    %677 = arith.addf %672, %676 : vector<2x8xf32>
    %678 = vector.broadcast %588 : f32 to vector<2x8xf32>
    %679 = arith.addf %677, %678 : vector<2x8xf32>
    %cst_209 = arith.constant 0.000000e+00 : f32
    %680 = vector.broadcast %cst_209 : f32 to vector<2x8xf32>
    %681 = arith.maximumf %679, %680 : vector<2x8xf32>
    %682 = vector.broadcast %cst_209 : f32 to vector<2x8xf32>
    %683 = arith.subf %679, %682 : vector<2x8xf32>
    %684 = arith.cmpf one, %683, %683 : vector<2x8xf32>
    %685 = vector.broadcast %cst_209 : f32 to vector<2x8xf32>
    %686 = arith.addf %679, %685 : vector<2x8xf32>
    %687 = math.absf %683 : vector<2x8xf32>
    %cst_210 = arith.constant 0.000000e+00 : f32
    %688 = vector.broadcast %cst_210 : f32 to vector<2x8xf32>
    %689 = arith.subf %688, %687 : vector<2x8xf32>
    %690 = math.exp %689 : vector<2x8xf32>
    %691 = math.log1p %690 : vector<2x8xf32>
    %692 = arith.addf %681, %691 : vector<2x8xf32>
    %693 = arith.select %684, %686, %692 : vector<2x8xi1>, vector<2x8xf32>
    %c0_211 = arith.constant 0 : index
    %c0_212 = arith.constant 0 : index
    %694 = memref.load %arg5[%c0_211, %c0_212] : memref<2x2xf32, #tpu.memory_space<smem>>
    %695 = vector.extract_strided_slice %404 {offsets = [0, 0], sizes = [2, 8], strides = [1, 1]} : vector<2x9xf32> to vector<2x8xf32>
    %696 = vector.broadcast %694 : f32 to vector<2x8xf32>
    %697 = arith.mulf %696, %695 : vector<2x8xf32>
    %c0_213 = arith.constant 0 : index
    %c1_214 = arith.constant 1 : index
    %698 = memref.load %arg5[%c0_213, %c1_214] : memref<2x2xf32, #tpu.memory_space<smem>>
    %699 = vector.extract_strided_slice %404 {offsets = [0, 1], sizes = [2, 8], strides = [1, 1]} : vector<2x9xf32> to vector<2x8xf32>
    %700 = vector.broadcast %698 : f32 to vector<2x8xf32>
    %701 = arith.mulf %700, %699 : vector<2x8xf32>
    %702 = arith.addf %697, %701 : vector<2x8xf32>
    %c1_215 = arith.constant 1 : index
    %c0_216 = arith.constant 0 : index
    %703 = memref.load %arg5[%c1_215, %c0_216] : memref<2x2xf32, #tpu.memory_space<smem>>
    %704 = vector.extract_strided_slice %443 {offsets = [0, 0], sizes = [2, 8], strides = [1, 1]} : vector<2x9xf32> to vector<2x8xf32>
    %705 = vector.broadcast %703 : f32 to vector<2x8xf32>
    %706 = arith.mulf %705, %704 : vector<2x8xf32>
    %707 = arith.addf %702, %706 : vector<2x8xf32>
    %c1_217 = arith.constant 1 : index
    %c1_218 = arith.constant 1 : index
    %708 = memref.load %arg5[%c1_217, %c1_218] : memref<2x2xf32, #tpu.memory_space<smem>>
    %709 = vector.extract_strided_slice %443 {offsets = [0, 1], sizes = [2, 8], strides = [1, 1]} : vector<2x9xf32> to vector<2x8xf32>
    %710 = vector.broadcast %708 : f32 to vector<2x8xf32>
    %711 = arith.mulf %710, %709 : vector<2x8xf32>
    %712 = arith.addf %707, %711 : vector<2x8xf32>
    %713 = vector.broadcast %588 : f32 to vector<2x8xf32>
    %714 = arith.addf %712, %713 : vector<2x8xf32>
    %cst_219 = arith.constant 0.000000e+00 : f32
    %715 = vector.broadcast %cst_219 : f32 to vector<2x8xf32>
    %716 = arith.maximumf %714, %715 : vector<2x8xf32>
    %717 = vector.broadcast %cst_219 : f32 to vector<2x8xf32>
    %718 = arith.subf %714, %717 : vector<2x8xf32>
    %719 = arith.cmpf one, %718, %718 : vector<2x8xf32>
    %720 = vector.broadcast %cst_219 : f32 to vector<2x8xf32>
    %721 = arith.addf %714, %720 : vector<2x8xf32>
    %722 = math.absf %718 : vector<2x8xf32>
    %cst_220 = arith.constant 0.000000e+00 : f32
    %723 = vector.broadcast %cst_220 : f32 to vector<2x8xf32>
    %724 = arith.subf %723, %722 : vector<2x8xf32>
    %725 = math.exp %724 : vector<2x8xf32>
    %726 = math.log1p %725 : vector<2x8xf32>
    %727 = arith.addf %716, %726 : vector<2x8xf32>
    %728 = arith.select %719, %721, %727 : vector<2x8xi1>, vector<2x8xf32>
    %c0_221 = arith.constant 0 : index
    %c0_222 = arith.constant 0 : index
    %729 = memref.load %arg5[%c0_221, %c0_222] : memref<2x2xf32, #tpu.memory_space<smem>>
    %730 = vector.extract_strided_slice %443 {offsets = [0, 0], sizes = [2, 8], strides = [1, 1]} : vector<2x9xf32> to vector<2x8xf32>
    %731 = vector.broadcast %729 : f32 to vector<2x8xf32>
    %732 = arith.mulf %731, %730 : vector<2x8xf32>
    %c0_223 = arith.constant 0 : index
    %c1_224 = arith.constant 1 : index
    %733 = memref.load %arg5[%c0_223, %c1_224] : memref<2x2xf32, #tpu.memory_space<smem>>
    %734 = vector.extract_strided_slice %443 {offsets = [0, 1], sizes = [2, 8], strides = [1, 1]} : vector<2x9xf32> to vector<2x8xf32>
    %735 = vector.broadcast %733 : f32 to vector<2x8xf32>
    %736 = arith.mulf %735, %734 : vector<2x8xf32>
    %737 = arith.addf %732, %736 : vector<2x8xf32>
    %c1_225 = arith.constant 1 : index
    %c0_226 = arith.constant 0 : index
    %738 = memref.load %arg5[%c1_225, %c0_226] : memref<2x2xf32, #tpu.memory_space<smem>>
    %739 = vector.extract_strided_slice %482 {offsets = [0, 0], sizes = [2, 8], strides = [1, 1]} : vector<2x9xf32> to vector<2x8xf32>
    %740 = vector.broadcast %738 : f32 to vector<2x8xf32>
    %741 = arith.mulf %740, %739 : vector<2x8xf32>
    %742 = arith.addf %737, %741 : vector<2x8xf32>
    %c1_227 = arith.constant 1 : index
    %c1_228 = arith.constant 1 : index
    %743 = memref.load %arg5[%c1_227, %c1_228] : memref<2x2xf32, #tpu.memory_space<smem>>
    %744 = vector.extract_strided_slice %482 {offsets = [0, 1], sizes = [2, 8], strides = [1, 1]} : vector<2x9xf32> to vector<2x8xf32>
    %745 = vector.broadcast %743 : f32 to vector<2x8xf32>
    %746 = arith.mulf %745, %744 : vector<2x8xf32>
    %747 = arith.addf %742, %746 : vector<2x8xf32>
    %748 = vector.broadcast %588 : f32 to vector<2x8xf32>
    %749 = arith.addf %747, %748 : vector<2x8xf32>
    %cst_229 = arith.constant 0.000000e+00 : f32
    %750 = vector.broadcast %cst_229 : f32 to vector<2x8xf32>
    %751 = arith.maximumf %749, %750 : vector<2x8xf32>
    %752 = vector.broadcast %cst_229 : f32 to vector<2x8xf32>
    %753 = arith.subf %749, %752 : vector<2x8xf32>
    %754 = arith.cmpf one, %753, %753 : vector<2x8xf32>
    %755 = vector.broadcast %cst_229 : f32 to vector<2x8xf32>
    %756 = arith.addf %749, %755 : vector<2x8xf32>
    %757 = math.absf %753 : vector<2x8xf32>
    %cst_230 = arith.constant 0.000000e+00 : f32
    %758 = vector.broadcast %cst_230 : f32 to vector<2x8xf32>
    %759 = arith.subf %758, %757 : vector<2x8xf32>
    %760 = math.exp %759 : vector<2x8xf32>
    %761 = math.log1p %760 : vector<2x8xf32>
    %762 = arith.addf %751, %761 : vector<2x8xf32>
    %763 = arith.select %754, %756, %762 : vector<2x8xi1>, vector<2x8xf32>
    %c0_231 = arith.constant 0 : index
    %c0_232 = arith.constant 0 : index
    %764 = memref.load %arg5[%c0_231, %c0_232] : memref<2x2xf32, #tpu.memory_space<smem>>
    %765 = vector.extract_strided_slice %482 {offsets = [0, 0], sizes = [2, 8], strides = [1, 1]} : vector<2x9xf32> to vector<2x8xf32>
    %766 = vector.broadcast %764 : f32 to vector<2x8xf32>
    %767 = arith.mulf %766, %765 : vector<2x8xf32>
    %c0_233 = arith.constant 0 : index
    %c1_234 = arith.constant 1 : index
    %768 = memref.load %arg5[%c0_233, %c1_234] : memref<2x2xf32, #tpu.memory_space<smem>>
    %769 = vector.extract_strided_slice %482 {offsets = [0, 1], sizes = [2, 8], strides = [1, 1]} : vector<2x9xf32> to vector<2x8xf32>
    %770 = vector.broadcast %768 : f32 to vector<2x8xf32>
    %771 = arith.mulf %770, %769 : vector<2x8xf32>
    %772 = arith.addf %767, %771 : vector<2x8xf32>
    %c1_235 = arith.constant 1 : index
    %c0_236 = arith.constant 0 : index
    %773 = memref.load %arg5[%c1_235, %c0_236] : memref<2x2xf32, #tpu.memory_space<smem>>
    %774 = vector.extract_strided_slice %521 {offsets = [0, 0], sizes = [2, 8], strides = [1, 1]} : vector<2x9xf32> to vector<2x8xf32>
    %775 = vector.broadcast %773 : f32 to vector<2x8xf32>
    %776 = arith.mulf %775, %774 : vector<2x8xf32>
    %777 = arith.addf %772, %776 : vector<2x8xf32>
    %c1_237 = arith.constant 1 : index
    %c1_238 = arith.constant 1 : index
    %778 = memref.load %arg5[%c1_237, %c1_238] : memref<2x2xf32, #tpu.memory_space<smem>>
    %779 = vector.extract_strided_slice %521 {offsets = [0, 1], sizes = [2, 8], strides = [1, 1]} : vector<2x9xf32> to vector<2x8xf32>
    %780 = vector.broadcast %778 : f32 to vector<2x8xf32>
    %781 = arith.mulf %780, %779 : vector<2x8xf32>
    %782 = arith.addf %777, %781 : vector<2x8xf32>
    %783 = vector.broadcast %588 : f32 to vector<2x8xf32>
    %784 = arith.addf %782, %783 : vector<2x8xf32>
    %cst_239 = arith.constant 0.000000e+00 : f32
    %785 = vector.broadcast %cst_239 : f32 to vector<2x8xf32>
    %786 = arith.maximumf %784, %785 : vector<2x8xf32>
    %787 = vector.broadcast %cst_239 : f32 to vector<2x8xf32>
    %788 = arith.subf %784, %787 : vector<2x8xf32>
    %789 = arith.cmpf one, %788, %788 : vector<2x8xf32>
    %790 = vector.broadcast %cst_239 : f32 to vector<2x8xf32>
    %791 = arith.addf %784, %790 : vector<2x8xf32>
    %792 = math.absf %788 : vector<2x8xf32>
    %cst_240 = arith.constant 0.000000e+00 : f32
    %793 = vector.broadcast %cst_240 : f32 to vector<2x8xf32>
    %794 = arith.subf %793, %792 : vector<2x8xf32>
    %795 = math.exp %794 : vector<2x8xf32>
    %796 = math.log1p %795 : vector<2x8xf32>
    %797 = arith.addf %786, %796 : vector<2x8xf32>
    %798 = arith.select %789, %791, %797 : vector<2x8xi1>, vector<2x8xf32>
    %c0_241 = arith.constant 0 : index
    %c0_242 = arith.constant 0 : index
    %799 = memref.load %arg5[%c0_241, %c0_242] : memref<2x2xf32, #tpu.memory_space<smem>>
    %800 = vector.extract_strided_slice %521 {offsets = [0, 0], sizes = [2, 8], strides = [1, 1]} : vector<2x9xf32> to vector<2x8xf32>
    %801 = vector.broadcast %799 : f32 to vector<2x8xf32>
    %802 = arith.mulf %801, %800 : vector<2x8xf32>
    %c0_243 = arith.constant 0 : index
    %c1_244 = arith.constant 1 : index
    %803 = memref.load %arg5[%c0_243, %c1_244] : memref<2x2xf32, #tpu.memory_space<smem>>
    %804 = vector.extract_strided_slice %521 {offsets = [0, 1], sizes = [2, 8], strides = [1, 1]} : vector<2x9xf32> to vector<2x8xf32>
    %805 = vector.broadcast %803 : f32 to vector<2x8xf32>
    %806 = arith.mulf %805, %804 : vector<2x8xf32>
    %807 = arith.addf %802, %806 : vector<2x8xf32>
    %c1_245 = arith.constant 1 : index
    %c0_246 = arith.constant 0 : index
    %808 = memref.load %arg5[%c1_245, %c0_246] : memref<2x2xf32, #tpu.memory_space<smem>>
    %809 = vector.extract_strided_slice %560 {offsets = [0, 0], sizes = [2, 8], strides = [1, 1]} : vector<2x9xf32> to vector<2x8xf32>
    %810 = vector.broadcast %808 : f32 to vector<2x8xf32>
    %811 = arith.mulf %810, %809 : vector<2x8xf32>
    %812 = arith.addf %807, %811 : vector<2x8xf32>
    %c1_247 = arith.constant 1 : index
    %c1_248 = arith.constant 1 : index
    %813 = memref.load %arg5[%c1_247, %c1_248] : memref<2x2xf32, #tpu.memory_space<smem>>
    %814 = vector.extract_strided_slice %560 {offsets = [0, 1], sizes = [2, 8], strides = [1, 1]} : vector<2x9xf32> to vector<2x8xf32>
    %815 = vector.broadcast %813 : f32 to vector<2x8xf32>
    %816 = arith.mulf %815, %814 : vector<2x8xf32>
    %817 = arith.addf %812, %816 : vector<2x8xf32>
    %818 = vector.broadcast %588 : f32 to vector<2x8xf32>
    %819 = arith.addf %817, %818 : vector<2x8xf32>
    %cst_249 = arith.constant 0.000000e+00 : f32
    %820 = vector.broadcast %cst_249 : f32 to vector<2x8xf32>
    %821 = arith.maximumf %819, %820 : vector<2x8xf32>
    %822 = vector.broadcast %cst_249 : f32 to vector<2x8xf32>
    %823 = arith.subf %819, %822 : vector<2x8xf32>
    %824 = arith.cmpf one, %823, %823 : vector<2x8xf32>
    %825 = vector.broadcast %cst_249 : f32 to vector<2x8xf32>
    %826 = arith.addf %819, %825 : vector<2x8xf32>
    %827 = math.absf %823 : vector<2x8xf32>
    %cst_250 = arith.constant 0.000000e+00 : f32
    %828 = vector.broadcast %cst_250 : f32 to vector<2x8xf32>
    %829 = arith.subf %828, %827 : vector<2x8xf32>
    %830 = math.exp %829 : vector<2x8xf32>
    %831 = math.log1p %830 : vector<2x8xf32>
    %832 = arith.addf %821, %831 : vector<2x8xf32>
    %833 = arith.select %824, %826, %832 : vector<2x8xi1>, vector<2x8xf32>
    %c0_251 = arith.constant 0 : index
    %c0_252 = arith.constant 0 : index
    %834 = memref.load %arg5[%c0_251, %c0_252] : memref<2x2xf32, #tpu.memory_space<smem>>
    %835 = vector.extract_strided_slice %560 {offsets = [0, 0], sizes = [2, 8], strides = [1, 1]} : vector<2x9xf32> to vector<2x8xf32>
    %836 = vector.broadcast %834 : f32 to vector<2x8xf32>
    %837 = arith.mulf %836, %835 : vector<2x8xf32>
    %c0_253 = arith.constant 0 : index
    %c1_254 = arith.constant 1 : index
    %838 = memref.load %arg5[%c0_253, %c1_254] : memref<2x2xf32, #tpu.memory_space<smem>>
    %839 = vector.extract_strided_slice %560 {offsets = [0, 1], sizes = [2, 8], strides = [1, 1]} : vector<2x9xf32> to vector<2x8xf32>
    %840 = vector.broadcast %838 : f32 to vector<2x8xf32>
    %841 = arith.mulf %840, %839 : vector<2x8xf32>
    %842 = arith.addf %837, %841 : vector<2x8xf32>
    %c1_255 = arith.constant 1 : index
    %c0_256 = arith.constant 0 : index
    %843 = memref.load %arg5[%c1_255, %c0_256] : memref<2x2xf32, #tpu.memory_space<smem>>
    %844 = vector.extract_strided_slice %587 {offsets = [0, 0], sizes = [2, 8], strides = [1, 1]} : vector<2x9xf32> to vector<2x8xf32>
    %845 = vector.broadcast %843 : f32 to vector<2x8xf32>
    %846 = arith.mulf %845, %844 : vector<2x8xf32>
    %847 = arith.addf %842, %846 : vector<2x8xf32>
    %c1_257 = arith.constant 1 : index
    %c1_258 = arith.constant 1 : index
    %848 = memref.load %arg5[%c1_257, %c1_258] : memref<2x2xf32, #tpu.memory_space<smem>>
    %849 = vector.extract_strided_slice %587 {offsets = [0, 1], sizes = [2, 8], strides = [1, 1]} : vector<2x9xf32> to vector<2x8xf32>
    %850 = vector.broadcast %848 : f32 to vector<2x8xf32>
    %851 = arith.mulf %850, %849 : vector<2x8xf32>
    %852 = arith.addf %847, %851 : vector<2x8xf32>
    %853 = vector.broadcast %588 : f32 to vector<2x8xf32>
    %854 = arith.addf %852, %853 : vector<2x8xf32>
    %cst_259 = arith.constant 0.000000e+00 : f32
    %855 = vector.broadcast %cst_259 : f32 to vector<2x8xf32>
    %856 = arith.maximumf %854, %855 : vector<2x8xf32>
    %857 = vector.broadcast %cst_259 : f32 to vector<2x8xf32>
    %858 = arith.subf %854, %857 : vector<2x8xf32>
    %859 = arith.cmpf one, %858, %858 : vector<2x8xf32>
    %860 = vector.broadcast %cst_259 : f32 to vector<2x8xf32>
    %861 = arith.addf %854, %860 : vector<2x8xf32>
    %862 = math.absf %858 : vector<2x8xf32>
    %cst_260 = arith.constant 0.000000e+00 : f32
    %863 = vector.broadcast %cst_260 : f32 to vector<2x8xf32>
    %864 = arith.subf %863, %862 : vector<2x8xf32>
    %865 = math.exp %864 : vector<2x8xf32>
    %866 = math.log1p %865 : vector<2x8xf32>
    %867 = arith.addf %856, %866 : vector<2x8xf32>
    %868 = arith.select %859, %861, %867 : vector<2x8xi1>, vector<2x8xf32>
    %c0_261 = arith.constant 0 : index
    %c0_262 = arith.constant 0 : index
    %869 = vector.load %arg7[%c0_261, %c0_262] : memref<64x16xf32, #tpu.memory_space<vmem>>, vector<64x16xf32>
    %c0_263 = arith.constant 0 : index
    %c0_264 = arith.constant 0 : index
    %870 = vector.load %arg8[%c0_263, %c0_264] : memref<1x16xf32, #tpu.memory_space<vmem>>, vector<1x16xf32>
    %871 = vector.shape_cast %870 : vector<1x16xf32> to vector<1x16xf32>
    %872 = vector.broadcast %871 : vector<1x16xf32> to vector<2x16xf32>
    %873 = vector.extract_strided_slice %623 {offsets = [0, 0], sizes = [2, 1], strides = [1, 1]} : vector<2x8xf32> to vector<2x1xf32>
    %874 = vector.extract_strided_slice %869 {offsets = [0, 0], sizes = [1, 16], strides = [1, 1]} : vector<64x16xf32> to vector<1x16xf32>
    %875 = vector.broadcast %873 : vector<2x1xf32> to vector<2x16xf32>
    %876 = vector.broadcast %874 : vector<1x16xf32> to vector<2x16xf32>
    %877 = arith.mulf %875, %876 : vector<2x16xf32>
    %878 = arith.addf %872, %877 : vector<2x16xf32>
    %879 = vector.extract_strided_slice %623 {offsets = [0, 1], sizes = [2, 1], strides = [1, 1]} : vector<2x8xf32> to vector<2x1xf32>
    %880 = vector.extract_strided_slice %869 {offsets = [1, 0], sizes = [1, 16], strides = [1, 1]} : vector<64x16xf32> to vector<1x16xf32>
    %881 = vector.broadcast %879 : vector<2x1xf32> to vector<2x16xf32>
    %882 = vector.broadcast %880 : vector<1x16xf32> to vector<2x16xf32>
    %883 = arith.mulf %881, %882 : vector<2x16xf32>
    %884 = arith.addf %878, %883 : vector<2x16xf32>
    %885 = vector.extract_strided_slice %623 {offsets = [0, 2], sizes = [2, 1], strides = [1, 1]} : vector<2x8xf32> to vector<2x1xf32>
    %886 = vector.extract_strided_slice %869 {offsets = [2, 0], sizes = [1, 16], strides = [1, 1]} : vector<64x16xf32> to vector<1x16xf32>
    %887 = vector.broadcast %885 : vector<2x1xf32> to vector<2x16xf32>
    %888 = vector.broadcast %886 : vector<1x16xf32> to vector<2x16xf32>
    %889 = arith.mulf %887, %888 : vector<2x16xf32>
    %890 = arith.addf %884, %889 : vector<2x16xf32>
    %891 = vector.extract_strided_slice %623 {offsets = [0, 3], sizes = [2, 1], strides = [1, 1]} : vector<2x8xf32> to vector<2x1xf32>
    %892 = vector.extract_strided_slice %869 {offsets = [3, 0], sizes = [1, 16], strides = [1, 1]} : vector<64x16xf32> to vector<1x16xf32>
    %893 = vector.broadcast %891 : vector<2x1xf32> to vector<2x16xf32>
    %894 = vector.broadcast %892 : vector<1x16xf32> to vector<2x16xf32>
    %895 = arith.mulf %893, %894 : vector<2x16xf32>
    %896 = arith.addf %890, %895 : vector<2x16xf32>
    %897 = vector.extract_strided_slice %623 {offsets = [0, 4], sizes = [2, 1], strides = [1, 1]} : vector<2x8xf32> to vector<2x1xf32>
    %898 = vector.extract_strided_slice %869 {offsets = [4, 0], sizes = [1, 16], strides = [1, 1]} : vector<64x16xf32> to vector<1x16xf32>
    %899 = vector.broadcast %897 : vector<2x1xf32> to vector<2x16xf32>
    %900 = vector.broadcast %898 : vector<1x16xf32> to vector<2x16xf32>
    %901 = arith.mulf %899, %900 : vector<2x16xf32>
    %902 = arith.addf %896, %901 : vector<2x16xf32>
    %903 = vector.extract_strided_slice %623 {offsets = [0, 5], sizes = [2, 1], strides = [1, 1]} : vector<2x8xf32> to vector<2x1xf32>
    %904 = vector.extract_strided_slice %869 {offsets = [5, 0], sizes = [1, 16], strides = [1, 1]} : vector<64x16xf32> to vector<1x16xf32>
    %905 = vector.broadcast %903 : vector<2x1xf32> to vector<2x16xf32>
    %906 = vector.broadcast %904 : vector<1x16xf32> to vector<2x16xf32>
    %907 = arith.mulf %905, %906 : vector<2x16xf32>
    %908 = arith.addf %902, %907 : vector<2x16xf32>
    %909 = vector.extract_strided_slice %623 {offsets = [0, 6], sizes = [2, 1], strides = [1, 1]} : vector<2x8xf32> to vector<2x1xf32>
    %910 = vector.extract_strided_slice %869 {offsets = [6, 0], sizes = [1, 16], strides = [1, 1]} : vector<64x16xf32> to vector<1x16xf32>
    %911 = vector.broadcast %909 : vector<2x1xf32> to vector<2x16xf32>
    %912 = vector.broadcast %910 : vector<1x16xf32> to vector<2x16xf32>
    %913 = arith.mulf %911, %912 : vector<2x16xf32>
    %914 = arith.addf %908, %913 : vector<2x16xf32>
    %915 = vector.extract_strided_slice %623 {offsets = [0, 7], sizes = [2, 1], strides = [1, 1]} : vector<2x8xf32> to vector<2x1xf32>
    %916 = vector.extract_strided_slice %869 {offsets = [7, 0], sizes = [1, 16], strides = [1, 1]} : vector<64x16xf32> to vector<1x16xf32>
    %917 = vector.broadcast %915 : vector<2x1xf32> to vector<2x16xf32>
    %918 = vector.broadcast %916 : vector<1x16xf32> to vector<2x16xf32>
    %919 = arith.mulf %917, %918 : vector<2x16xf32>
    %920 = arith.addf %914, %919 : vector<2x16xf32>
    %921 = vector.extract_strided_slice %658 {offsets = [0, 0], sizes = [2, 1], strides = [1, 1]} : vector<2x8xf32> to vector<2x1xf32>
    %922 = vector.extract_strided_slice %869 {offsets = [8, 0], sizes = [1, 16], strides = [1, 1]} : vector<64x16xf32> to vector<1x16xf32>
    %923 = vector.broadcast %921 : vector<2x1xf32> to vector<2x16xf32>
    %924 = vector.broadcast %922 : vector<1x16xf32> to vector<2x16xf32>
    %925 = arith.mulf %923, %924 : vector<2x16xf32>
    %926 = arith.addf %920, %925 : vector<2x16xf32>
    %927 = vector.extract_strided_slice %658 {offsets = [0, 1], sizes = [2, 1], strides = [1, 1]} : vector<2x8xf32> to vector<2x1xf32>
    %928 = vector.extract_strided_slice %869 {offsets = [9, 0], sizes = [1, 16], strides = [1, 1]} : vector<64x16xf32> to vector<1x16xf32>
    %929 = vector.broadcast %927 : vector<2x1xf32> to vector<2x16xf32>
    %930 = vector.broadcast %928 : vector<1x16xf32> to vector<2x16xf32>
    %931 = arith.mulf %929, %930 : vector<2x16xf32>
    %932 = arith.addf %926, %931 : vector<2x16xf32>
    %933 = vector.extract_strided_slice %658 {offsets = [0, 2], sizes = [2, 1], strides = [1, 1]} : vector<2x8xf32> to vector<2x1xf32>
    %934 = vector.extract_strided_slice %869 {offsets = [10, 0], sizes = [1, 16], strides = [1, 1]} : vector<64x16xf32> to vector<1x16xf32>
    %935 = vector.broadcast %933 : vector<2x1xf32> to vector<2x16xf32>
    %936 = vector.broadcast %934 : vector<1x16xf32> to vector<2x16xf32>
    %937 = arith.mulf %935, %936 : vector<2x16xf32>
    %938 = arith.addf %932, %937 : vector<2x16xf32>
    %939 = vector.extract_strided_slice %658 {offsets = [0, 3], sizes = [2, 1], strides = [1, 1]} : vector<2x8xf32> to vector<2x1xf32>
    %940 = vector.extract_strided_slice %869 {offsets = [11, 0], sizes = [1, 16], strides = [1, 1]} : vector<64x16xf32> to vector<1x16xf32>
    %941 = vector.broadcast %939 : vector<2x1xf32> to vector<2x16xf32>
    %942 = vector.broadcast %940 : vector<1x16xf32> to vector<2x16xf32>
    %943 = arith.mulf %941, %942 : vector<2x16xf32>
    %944 = arith.addf %938, %943 : vector<2x16xf32>
    %945 = vector.extract_strided_slice %658 {offsets = [0, 4], sizes = [2, 1], strides = [1, 1]} : vector<2x8xf32> to vector<2x1xf32>
    %946 = vector.extract_strided_slice %869 {offsets = [12, 0], sizes = [1, 16], strides = [1, 1]} : vector<64x16xf32> to vector<1x16xf32>
    %947 = vector.broadcast %945 : vector<2x1xf32> to vector<2x16xf32>
    %948 = vector.broadcast %946 : vector<1x16xf32> to vector<2x16xf32>
    %949 = arith.mulf %947, %948 : vector<2x16xf32>
    %950 = arith.addf %944, %949 : vector<2x16xf32>
    %951 = vector.extract_strided_slice %658 {offsets = [0, 5], sizes = [2, 1], strides = [1, 1]} : vector<2x8xf32> to vector<2x1xf32>
    %952 = vector.extract_strided_slice %869 {offsets = [13, 0], sizes = [1, 16], strides = [1, 1]} : vector<64x16xf32> to vector<1x16xf32>
    %953 = vector.broadcast %951 : vector<2x1xf32> to vector<2x16xf32>
    %954 = vector.broadcast %952 : vector<1x16xf32> to vector<2x16xf32>
    %955 = arith.mulf %953, %954 : vector<2x16xf32>
    %956 = arith.addf %950, %955 : vector<2x16xf32>
    %957 = vector.extract_strided_slice %658 {offsets = [0, 6], sizes = [2, 1], strides = [1, 1]} : vector<2x8xf32> to vector<2x1xf32>
    %958 = vector.extract_strided_slice %869 {offsets = [14, 0], sizes = [1, 16], strides = [1, 1]} : vector<64x16xf32> to vector<1x16xf32>
    %959 = vector.broadcast %957 : vector<2x1xf32> to vector<2x16xf32>
    %960 = vector.broadcast %958 : vector<1x16xf32> to vector<2x16xf32>
    %961 = arith.mulf %959, %960 : vector<2x16xf32>
    %962 = arith.addf %956, %961 : vector<2x16xf32>
    %963 = vector.extract_strided_slice %658 {offsets = [0, 7], sizes = [2, 1], strides = [1, 1]} : vector<2x8xf32> to vector<2x1xf32>
    %964 = vector.extract_strided_slice %869 {offsets = [15, 0], sizes = [1, 16], strides = [1, 1]} : vector<64x16xf32> to vector<1x16xf32>
    %965 = vector.broadcast %963 : vector<2x1xf32> to vector<2x16xf32>
    %966 = vector.broadcast %964 : vector<1x16xf32> to vector<2x16xf32>
    %967 = arith.mulf %965, %966 : vector<2x16xf32>
    %968 = arith.addf %962, %967 : vector<2x16xf32>
    %969 = vector.extract_strided_slice %693 {offsets = [0, 0], sizes = [2, 1], strides = [1, 1]} : vector<2x8xf32> to vector<2x1xf32>
    %970 = vector.extract_strided_slice %869 {offsets = [16, 0], sizes = [1, 16], strides = [1, 1]} : vector<64x16xf32> to vector<1x16xf32>
    %971 = vector.broadcast %969 : vector<2x1xf32> to vector<2x16xf32>
    %972 = vector.broadcast %970 : vector<1x16xf32> to vector<2x16xf32>
    %973 = arith.mulf %971, %972 : vector<2x16xf32>
    %974 = arith.addf %968, %973 : vector<2x16xf32>
    %975 = vector.extract_strided_slice %693 {offsets = [0, 1], sizes = [2, 1], strides = [1, 1]} : vector<2x8xf32> to vector<2x1xf32>
    %976 = vector.extract_strided_slice %869 {offsets = [17, 0], sizes = [1, 16], strides = [1, 1]} : vector<64x16xf32> to vector<1x16xf32>
    %977 = vector.broadcast %975 : vector<2x1xf32> to vector<2x16xf32>
    %978 = vector.broadcast %976 : vector<1x16xf32> to vector<2x16xf32>
    %979 = arith.mulf %977, %978 : vector<2x16xf32>
    %980 = arith.addf %974, %979 : vector<2x16xf32>
    %981 = vector.extract_strided_slice %693 {offsets = [0, 2], sizes = [2, 1], strides = [1, 1]} : vector<2x8xf32> to vector<2x1xf32>
    %982 = vector.extract_strided_slice %869 {offsets = [18, 0], sizes = [1, 16], strides = [1, 1]} : vector<64x16xf32> to vector<1x16xf32>
    %983 = vector.broadcast %981 : vector<2x1xf32> to vector<2x16xf32>
    %984 = vector.broadcast %982 : vector<1x16xf32> to vector<2x16xf32>
    %985 = arith.mulf %983, %984 : vector<2x16xf32>
    %986 = arith.addf %980, %985 : vector<2x16xf32>
    %987 = vector.extract_strided_slice %693 {offsets = [0, 3], sizes = [2, 1], strides = [1, 1]} : vector<2x8xf32> to vector<2x1xf32>
    %988 = vector.extract_strided_slice %869 {offsets = [19, 0], sizes = [1, 16], strides = [1, 1]} : vector<64x16xf32> to vector<1x16xf32>
    %989 = vector.broadcast %987 : vector<2x1xf32> to vector<2x16xf32>
    %990 = vector.broadcast %988 : vector<1x16xf32> to vector<2x16xf32>
    %991 = arith.mulf %989, %990 : vector<2x16xf32>
    %992 = arith.addf %986, %991 : vector<2x16xf32>
    %993 = vector.extract_strided_slice %693 {offsets = [0, 4], sizes = [2, 1], strides = [1, 1]} : vector<2x8xf32> to vector<2x1xf32>
    %994 = vector.extract_strided_slice %869 {offsets = [20, 0], sizes = [1, 16], strides = [1, 1]} : vector<64x16xf32> to vector<1x16xf32>
    %995 = vector.broadcast %993 : vector<2x1xf32> to vector<2x16xf32>
    %996 = vector.broadcast %994 : vector<1x16xf32> to vector<2x16xf32>
    %997 = arith.mulf %995, %996 : vector<2x16xf32>
    %998 = arith.addf %992, %997 : vector<2x16xf32>
    %999 = vector.extract_strided_slice %693 {offsets = [0, 5], sizes = [2, 1], strides = [1, 1]} : vector<2x8xf32> to vector<2x1xf32>
    %1000 = vector.extract_strided_slice %869 {offsets = [21, 0], sizes = [1, 16], strides = [1, 1]} : vector<64x16xf32> to vector<1x16xf32>
    %1001 = vector.broadcast %999 : vector<2x1xf32> to vector<2x16xf32>
    %1002 = vector.broadcast %1000 : vector<1x16xf32> to vector<2x16xf32>
    %1003 = arith.mulf %1001, %1002 : vector<2x16xf32>
    %1004 = arith.addf %998, %1003 : vector<2x16xf32>
    %1005 = vector.extract_strided_slice %693 {offsets = [0, 6], sizes = [2, 1], strides = [1, 1]} : vector<2x8xf32> to vector<2x1xf32>
    %1006 = vector.extract_strided_slice %869 {offsets = [22, 0], sizes = [1, 16], strides = [1, 1]} : vector<64x16xf32> to vector<1x16xf32>
    %1007 = vector.broadcast %1005 : vector<2x1xf32> to vector<2x16xf32>
    %1008 = vector.broadcast %1006 : vector<1x16xf32> to vector<2x16xf32>
    %1009 = arith.mulf %1007, %1008 : vector<2x16xf32>
    %1010 = arith.addf %1004, %1009 : vector<2x16xf32>
    %1011 = vector.extract_strided_slice %693 {offsets = [0, 7], sizes = [2, 1], strides = [1, 1]} : vector<2x8xf32> to vector<2x1xf32>
    %1012 = vector.extract_strided_slice %869 {offsets = [23, 0], sizes = [1, 16], strides = [1, 1]} : vector<64x16xf32> to vector<1x16xf32>
    %1013 = vector.broadcast %1011 : vector<2x1xf32> to vector<2x16xf32>
    %1014 = vector.broadcast %1012 : vector<1x16xf32> to vector<2x16xf32>
    %1015 = arith.mulf %1013, %1014 : vector<2x16xf32>
    %1016 = arith.addf %1010, %1015 : vector<2x16xf32>
    %1017 = vector.extract_strided_slice %728 {offsets = [0, 0], sizes = [2, 1], strides = [1, 1]} : vector<2x8xf32> to vector<2x1xf32>
    %1018 = vector.extract_strided_slice %869 {offsets = [24, 0], sizes = [1, 16], strides = [1, 1]} : vector<64x16xf32> to vector<1x16xf32>
    %1019 = vector.broadcast %1017 : vector<2x1xf32> to vector<2x16xf32>
    %1020 = vector.broadcast %1018 : vector<1x16xf32> to vector<2x16xf32>
    %1021 = arith.mulf %1019, %1020 : vector<2x16xf32>
    %1022 = arith.addf %1016, %1021 : vector<2x16xf32>
    %1023 = vector.extract_strided_slice %728 {offsets = [0, 1], sizes = [2, 1], strides = [1, 1]} : vector<2x8xf32> to vector<2x1xf32>
    %1024 = vector.extract_strided_slice %869 {offsets = [25, 0], sizes = [1, 16], strides = [1, 1]} : vector<64x16xf32> to vector<1x16xf32>
    %1025 = vector.broadcast %1023 : vector<2x1xf32> to vector<2x16xf32>
    %1026 = vector.broadcast %1024 : vector<1x16xf32> to vector<2x16xf32>
    %1027 = arith.mulf %1025, %1026 : vector<2x16xf32>
    %1028 = arith.addf %1022, %1027 : vector<2x16xf32>
    %1029 = vector.extract_strided_slice %728 {offsets = [0, 2], sizes = [2, 1], strides = [1, 1]} : vector<2x8xf32> to vector<2x1xf32>
    %1030 = vector.extract_strided_slice %869 {offsets = [26, 0], sizes = [1, 16], strides = [1, 1]} : vector<64x16xf32> to vector<1x16xf32>
    %1031 = vector.broadcast %1029 : vector<2x1xf32> to vector<2x16xf32>
    %1032 = vector.broadcast %1030 : vector<1x16xf32> to vector<2x16xf32>
    %1033 = arith.mulf %1031, %1032 : vector<2x16xf32>
    %1034 = arith.addf %1028, %1033 : vector<2x16xf32>
    %1035 = vector.extract_strided_slice %728 {offsets = [0, 3], sizes = [2, 1], strides = [1, 1]} : vector<2x8xf32> to vector<2x1xf32>
    %1036 = vector.extract_strided_slice %869 {offsets = [27, 0], sizes = [1, 16], strides = [1, 1]} : vector<64x16xf32> to vector<1x16xf32>
    %1037 = vector.broadcast %1035 : vector<2x1xf32> to vector<2x16xf32>
    %1038 = vector.broadcast %1036 : vector<1x16xf32> to vector<2x16xf32>
    %1039 = arith.mulf %1037, %1038 : vector<2x16xf32>
    %1040 = arith.addf %1034, %1039 : vector<2x16xf32>
    %1041 = vector.extract_strided_slice %728 {offsets = [0, 4], sizes = [2, 1], strides = [1, 1]} : vector<2x8xf32> to vector<2x1xf32>
    %1042 = vector.extract_strided_slice %869 {offsets = [28, 0], sizes = [1, 16], strides = [1, 1]} : vector<64x16xf32> to vector<1x16xf32>
    %1043 = vector.broadcast %1041 : vector<2x1xf32> to vector<2x16xf32>
    %1044 = vector.broadcast %1042 : vector<1x16xf32> to vector<2x16xf32>
    %1045 = arith.mulf %1043, %1044 : vector<2x16xf32>
    %1046 = arith.addf %1040, %1045 : vector<2x16xf32>
    %1047 = vector.extract_strided_slice %728 {offsets = [0, 5], sizes = [2, 1], strides = [1, 1]} : vector<2x8xf32> to vector<2x1xf32>
    %1048 = vector.extract_strided_slice %869 {offsets = [29, 0], sizes = [1, 16], strides = [1, 1]} : vector<64x16xf32> to vector<1x16xf32>
    %1049 = vector.broadcast %1047 : vector<2x1xf32> to vector<2x16xf32>
    %1050 = vector.broadcast %1048 : vector<1x16xf32> to vector<2x16xf32>
    %1051 = arith.mulf %1049, %1050 : vector<2x16xf32>
    %1052 = arith.addf %1046, %1051 : vector<2x16xf32>
    %1053 = vector.extract_strided_slice %728 {offsets = [0, 6], sizes = [2, 1], strides = [1, 1]} : vector<2x8xf32> to vector<2x1xf32>
    %1054 = vector.extract_strided_slice %869 {offsets = [30, 0], sizes = [1, 16], strides = [1, 1]} : vector<64x16xf32> to vector<1x16xf32>
    %1055 = vector.broadcast %1053 : vector<2x1xf32> to vector<2x16xf32>
    %1056 = vector.broadcast %1054 : vector<1x16xf32> to vector<2x16xf32>
    %1057 = arith.mulf %1055, %1056 : vector<2x16xf32>
    %1058 = arith.addf %1052, %1057 : vector<2x16xf32>
    %1059 = vector.extract_strided_slice %728 {offsets = [0, 7], sizes = [2, 1], strides = [1, 1]} : vector<2x8xf32> to vector<2x1xf32>
    %1060 = vector.extract_strided_slice %869 {offsets = [31, 0], sizes = [1, 16], strides = [1, 1]} : vector<64x16xf32> to vector<1x16xf32>
    %1061 = vector.broadcast %1059 : vector<2x1xf32> to vector<2x16xf32>
    %1062 = vector.broadcast %1060 : vector<1x16xf32> to vector<2x16xf32>
    %1063 = arith.mulf %1061, %1062 : vector<2x16xf32>
    %1064 = arith.addf %1058, %1063 : vector<2x16xf32>
    %1065 = vector.extract_strided_slice %763 {offsets = [0, 0], sizes = [2, 1], strides = [1, 1]} : vector<2x8xf32> to vector<2x1xf32>
    %1066 = vector.extract_strided_slice %869 {offsets = [32, 0], sizes = [1, 16], strides = [1, 1]} : vector<64x16xf32> to vector<1x16xf32>
    %1067 = vector.broadcast %1065 : vector<2x1xf32> to vector<2x16xf32>
    %1068 = vector.broadcast %1066 : vector<1x16xf32> to vector<2x16xf32>
    %1069 = arith.mulf %1067, %1068 : vector<2x16xf32>
    %1070 = arith.addf %1064, %1069 : vector<2x16xf32>
    %1071 = vector.extract_strided_slice %763 {offsets = [0, 1], sizes = [2, 1], strides = [1, 1]} : vector<2x8xf32> to vector<2x1xf32>
    %1072 = vector.extract_strided_slice %869 {offsets = [33, 0], sizes = [1, 16], strides = [1, 1]} : vector<64x16xf32> to vector<1x16xf32>
    %1073 = vector.broadcast %1071 : vector<2x1xf32> to vector<2x16xf32>
    %1074 = vector.broadcast %1072 : vector<1x16xf32> to vector<2x16xf32>
    %1075 = arith.mulf %1073, %1074 : vector<2x16xf32>
    %1076 = arith.addf %1070, %1075 : vector<2x16xf32>
    %1077 = vector.extract_strided_slice %763 {offsets = [0, 2], sizes = [2, 1], strides = [1, 1]} : vector<2x8xf32> to vector<2x1xf32>
    %1078 = vector.extract_strided_slice %869 {offsets = [34, 0], sizes = [1, 16], strides = [1, 1]} : vector<64x16xf32> to vector<1x16xf32>
    %1079 = vector.broadcast %1077 : vector<2x1xf32> to vector<2x16xf32>
    %1080 = vector.broadcast %1078 : vector<1x16xf32> to vector<2x16xf32>
    %1081 = arith.mulf %1079, %1080 : vector<2x16xf32>
    %1082 = arith.addf %1076, %1081 : vector<2x16xf32>
    %1083 = vector.extract_strided_slice %763 {offsets = [0, 3], sizes = [2, 1], strides = [1, 1]} : vector<2x8xf32> to vector<2x1xf32>
    %1084 = vector.extract_strided_slice %869 {offsets = [35, 0], sizes = [1, 16], strides = [1, 1]} : vector<64x16xf32> to vector<1x16xf32>
    %1085 = vector.broadcast %1083 : vector<2x1xf32> to vector<2x16xf32>
    %1086 = vector.broadcast %1084 : vector<1x16xf32> to vector<2x16xf32>
    %1087 = arith.mulf %1085, %1086 : vector<2x16xf32>
    %1088 = arith.addf %1082, %1087 : vector<2x16xf32>
    %1089 = vector.extract_strided_slice %763 {offsets = [0, 4], sizes = [2, 1], strides = [1, 1]} : vector<2x8xf32> to vector<2x1xf32>
    %1090 = vector.extract_strided_slice %869 {offsets = [36, 0], sizes = [1, 16], strides = [1, 1]} : vector<64x16xf32> to vector<1x16xf32>
    %1091 = vector.broadcast %1089 : vector<2x1xf32> to vector<2x16xf32>
    %1092 = vector.broadcast %1090 : vector<1x16xf32> to vector<2x16xf32>
    %1093 = arith.mulf %1091, %1092 : vector<2x16xf32>
    %1094 = arith.addf %1088, %1093 : vector<2x16xf32>
    %1095 = vector.extract_strided_slice %763 {offsets = [0, 5], sizes = [2, 1], strides = [1, 1]} : vector<2x8xf32> to vector<2x1xf32>
    %1096 = vector.extract_strided_slice %869 {offsets = [37, 0], sizes = [1, 16], strides = [1, 1]} : vector<64x16xf32> to vector<1x16xf32>
    %1097 = vector.broadcast %1095 : vector<2x1xf32> to vector<2x16xf32>
    %1098 = vector.broadcast %1096 : vector<1x16xf32> to vector<2x16xf32>
    %1099 = arith.mulf %1097, %1098 : vector<2x16xf32>
    %1100 = arith.addf %1094, %1099 : vector<2x16xf32>
    %1101 = vector.extract_strided_slice %763 {offsets = [0, 6], sizes = [2, 1], strides = [1, 1]} : vector<2x8xf32> to vector<2x1xf32>
    %1102 = vector.extract_strided_slice %869 {offsets = [38, 0], sizes = [1, 16], strides = [1, 1]} : vector<64x16xf32> to vector<1x16xf32>
    %1103 = vector.broadcast %1101 : vector<2x1xf32> to vector<2x16xf32>
    %1104 = vector.broadcast %1102 : vector<1x16xf32> to vector<2x16xf32>
    %1105 = arith.mulf %1103, %1104 : vector<2x16xf32>
    %1106 = arith.addf %1100, %1105 : vector<2x16xf32>
    %1107 = vector.extract_strided_slice %763 {offsets = [0, 7], sizes = [2, 1], strides = [1, 1]} : vector<2x8xf32> to vector<2x1xf32>
    %1108 = vector.extract_strided_slice %869 {offsets = [39, 0], sizes = [1, 16], strides = [1, 1]} : vector<64x16xf32> to vector<1x16xf32>
    %1109 = vector.broadcast %1107 : vector<2x1xf32> to vector<2x16xf32>
    %1110 = vector.broadcast %1108 : vector<1x16xf32> to vector<2x16xf32>
    %1111 = arith.mulf %1109, %1110 : vector<2x16xf32>
    %1112 = arith.addf %1106, %1111 : vector<2x16xf32>
    %1113 = vector.extract_strided_slice %798 {offsets = [0, 0], sizes = [2, 1], strides = [1, 1]} : vector<2x8xf32> to vector<2x1xf32>
    %1114 = vector.extract_strided_slice %869 {offsets = [40, 0], sizes = [1, 16], strides = [1, 1]} : vector<64x16xf32> to vector<1x16xf32>
    %1115 = vector.broadcast %1113 : vector<2x1xf32> to vector<2x16xf32>
    %1116 = vector.broadcast %1114 : vector<1x16xf32> to vector<2x16xf32>
    %1117 = arith.mulf %1115, %1116 : vector<2x16xf32>
    %1118 = arith.addf %1112, %1117 : vector<2x16xf32>
    %1119 = vector.extract_strided_slice %798 {offsets = [0, 1], sizes = [2, 1], strides = [1, 1]} : vector<2x8xf32> to vector<2x1xf32>
    %1120 = vector.extract_strided_slice %869 {offsets = [41, 0], sizes = [1, 16], strides = [1, 1]} : vector<64x16xf32> to vector<1x16xf32>
    %1121 = vector.broadcast %1119 : vector<2x1xf32> to vector<2x16xf32>
    %1122 = vector.broadcast %1120 : vector<1x16xf32> to vector<2x16xf32>
    %1123 = arith.mulf %1121, %1122 : vector<2x16xf32>
    %1124 = arith.addf %1118, %1123 : vector<2x16xf32>
    %1125 = vector.extract_strided_slice %798 {offsets = [0, 2], sizes = [2, 1], strides = [1, 1]} : vector<2x8xf32> to vector<2x1xf32>
    %1126 = vector.extract_strided_slice %869 {offsets = [42, 0], sizes = [1, 16], strides = [1, 1]} : vector<64x16xf32> to vector<1x16xf32>
    %1127 = vector.broadcast %1125 : vector<2x1xf32> to vector<2x16xf32>
    %1128 = vector.broadcast %1126 : vector<1x16xf32> to vector<2x16xf32>
    %1129 = arith.mulf %1127, %1128 : vector<2x16xf32>
    %1130 = arith.addf %1124, %1129 : vector<2x16xf32>
    %1131 = vector.extract_strided_slice %798 {offsets = [0, 3], sizes = [2, 1], strides = [1, 1]} : vector<2x8xf32> to vector<2x1xf32>
    %1132 = vector.extract_strided_slice %869 {offsets = [43, 0], sizes = [1, 16], strides = [1, 1]} : vector<64x16xf32> to vector<1x16xf32>
    %1133 = vector.broadcast %1131 : vector<2x1xf32> to vector<2x16xf32>
    %1134 = vector.broadcast %1132 : vector<1x16xf32> to vector<2x16xf32>
    %1135 = arith.mulf %1133, %1134 : vector<2x16xf32>
    %1136 = arith.addf %1130, %1135 : vector<2x16xf32>
    %1137 = vector.extract_strided_slice %798 {offsets = [0, 4], sizes = [2, 1], strides = [1, 1]} : vector<2x8xf32> to vector<2x1xf32>
    %1138 = vector.extract_strided_slice %869 {offsets = [44, 0], sizes = [1, 16], strides = [1, 1]} : vector<64x16xf32> to vector<1x16xf32>
    %1139 = vector.broadcast %1137 : vector<2x1xf32> to vector<2x16xf32>
    %1140 = vector.broadcast %1138 : vector<1x16xf32> to vector<2x16xf32>
    %1141 = arith.mulf %1139, %1140 : vector<2x16xf32>
    %1142 = arith.addf %1136, %1141 : vector<2x16xf32>
    %1143 = vector.extract_strided_slice %798 {offsets = [0, 5], sizes = [2, 1], strides = [1, 1]} : vector<2x8xf32> to vector<2x1xf32>
    %1144 = vector.extract_strided_slice %869 {offsets = [45, 0], sizes = [1, 16], strides = [1, 1]} : vector<64x16xf32> to vector<1x16xf32>
    %1145 = vector.broadcast %1143 : vector<2x1xf32> to vector<2x16xf32>
    %1146 = vector.broadcast %1144 : vector<1x16xf32> to vector<2x16xf32>
    %1147 = arith.mulf %1145, %1146 : vector<2x16xf32>
    %1148 = arith.addf %1142, %1147 : vector<2x16xf32>
    %1149 = vector.extract_strided_slice %798 {offsets = [0, 6], sizes = [2, 1], strides = [1, 1]} : vector<2x8xf32> to vector<2x1xf32>
    %1150 = vector.extract_strided_slice %869 {offsets = [46, 0], sizes = [1, 16], strides = [1, 1]} : vector<64x16xf32> to vector<1x16xf32>
    %1151 = vector.broadcast %1149 : vector<2x1xf32> to vector<2x16xf32>
    %1152 = vector.broadcast %1150 : vector<1x16xf32> to vector<2x16xf32>
    %1153 = arith.mulf %1151, %1152 : vector<2x16xf32>
    %1154 = arith.addf %1148, %1153 : vector<2x16xf32>
    %1155 = vector.extract_strided_slice %798 {offsets = [0, 7], sizes = [2, 1], strides = [1, 1]} : vector<2x8xf32> to vector<2x1xf32>
    %1156 = vector.extract_strided_slice %869 {offsets = [47, 0], sizes = [1, 16], strides = [1, 1]} : vector<64x16xf32> to vector<1x16xf32>
    %1157 = vector.broadcast %1155 : vector<2x1xf32> to vector<2x16xf32>
    %1158 = vector.broadcast %1156 : vector<1x16xf32> to vector<2x16xf32>
    %1159 = arith.mulf %1157, %1158 : vector<2x16xf32>
    %1160 = arith.addf %1154, %1159 : vector<2x16xf32>
    %1161 = vector.extract_strided_slice %833 {offsets = [0, 0], sizes = [2, 1], strides = [1, 1]} : vector<2x8xf32> to vector<2x1xf32>
    %1162 = vector.extract_strided_slice %869 {offsets = [48, 0], sizes = [1, 16], strides = [1, 1]} : vector<64x16xf32> to vector<1x16xf32>
    %1163 = vector.broadcast %1161 : vector<2x1xf32> to vector<2x16xf32>
    %1164 = vector.broadcast %1162 : vector<1x16xf32> to vector<2x16xf32>
    %1165 = arith.mulf %1163, %1164 : vector<2x16xf32>
    %1166 = arith.addf %1160, %1165 : vector<2x16xf32>
    %1167 = vector.extract_strided_slice %833 {offsets = [0, 1], sizes = [2, 1], strides = [1, 1]} : vector<2x8xf32> to vector<2x1xf32>
    %1168 = vector.extract_strided_slice %869 {offsets = [49, 0], sizes = [1, 16], strides = [1, 1]} : vector<64x16xf32> to vector<1x16xf32>
    %1169 = vector.broadcast %1167 : vector<2x1xf32> to vector<2x16xf32>
    %1170 = vector.broadcast %1168 : vector<1x16xf32> to vector<2x16xf32>
    %1171 = arith.mulf %1169, %1170 : vector<2x16xf32>
    %1172 = arith.addf %1166, %1171 : vector<2x16xf32>
    %1173 = vector.extract_strided_slice %833 {offsets = [0, 2], sizes = [2, 1], strides = [1, 1]} : vector<2x8xf32> to vector<2x1xf32>
    %1174 = vector.extract_strided_slice %869 {offsets = [50, 0], sizes = [1, 16], strides = [1, 1]} : vector<64x16xf32> to vector<1x16xf32>
    %1175 = vector.broadcast %1173 : vector<2x1xf32> to vector<2x16xf32>
    %1176 = vector.broadcast %1174 : vector<1x16xf32> to vector<2x16xf32>
    %1177 = arith.mulf %1175, %1176 : vector<2x16xf32>
    %1178 = arith.addf %1172, %1177 : vector<2x16xf32>
    %1179 = vector.extract_strided_slice %833 {offsets = [0, 3], sizes = [2, 1], strides = [1, 1]} : vector<2x8xf32> to vector<2x1xf32>
    %1180 = vector.extract_strided_slice %869 {offsets = [51, 0], sizes = [1, 16], strides = [1, 1]} : vector<64x16xf32> to vector<1x16xf32>
    %1181 = vector.broadcast %1179 : vector<2x1xf32> to vector<2x16xf32>
    %1182 = vector.broadcast %1180 : vector<1x16xf32> to vector<2x16xf32>
    %1183 = arith.mulf %1181, %1182 : vector<2x16xf32>
    %1184 = arith.addf %1178, %1183 : vector<2x16xf32>
    %1185 = vector.extract_strided_slice %833 {offsets = [0, 4], sizes = [2, 1], strides = [1, 1]} : vector<2x8xf32> to vector<2x1xf32>
    %1186 = vector.extract_strided_slice %869 {offsets = [52, 0], sizes = [1, 16], strides = [1, 1]} : vector<64x16xf32> to vector<1x16xf32>
    %1187 = vector.broadcast %1185 : vector<2x1xf32> to vector<2x16xf32>
    %1188 = vector.broadcast %1186 : vector<1x16xf32> to vector<2x16xf32>
    %1189 = arith.mulf %1187, %1188 : vector<2x16xf32>
    %1190 = arith.addf %1184, %1189 : vector<2x16xf32>
    %1191 = vector.extract_strided_slice %833 {offsets = [0, 5], sizes = [2, 1], strides = [1, 1]} : vector<2x8xf32> to vector<2x1xf32>
    %1192 = vector.extract_strided_slice %869 {offsets = [53, 0], sizes = [1, 16], strides = [1, 1]} : vector<64x16xf32> to vector<1x16xf32>
    %1193 = vector.broadcast %1191 : vector<2x1xf32> to vector<2x16xf32>
    %1194 = vector.broadcast %1192 : vector<1x16xf32> to vector<2x16xf32>
    %1195 = arith.mulf %1193, %1194 : vector<2x16xf32>
    %1196 = arith.addf %1190, %1195 : vector<2x16xf32>
    %1197 = vector.extract_strided_slice %833 {offsets = [0, 6], sizes = [2, 1], strides = [1, 1]} : vector<2x8xf32> to vector<2x1xf32>
    %1198 = vector.extract_strided_slice %869 {offsets = [54, 0], sizes = [1, 16], strides = [1, 1]} : vector<64x16xf32> to vector<1x16xf32>
    %1199 = vector.broadcast %1197 : vector<2x1xf32> to vector<2x16xf32>
    %1200 = vector.broadcast %1198 : vector<1x16xf32> to vector<2x16xf32>
    %1201 = arith.mulf %1199, %1200 : vector<2x16xf32>
    %1202 = arith.addf %1196, %1201 : vector<2x16xf32>
    %1203 = vector.extract_strided_slice %833 {offsets = [0, 7], sizes = [2, 1], strides = [1, 1]} : vector<2x8xf32> to vector<2x1xf32>
    %1204 = vector.extract_strided_slice %869 {offsets = [55, 0], sizes = [1, 16], strides = [1, 1]} : vector<64x16xf32> to vector<1x16xf32>
    %1205 = vector.broadcast %1203 : vector<2x1xf32> to vector<2x16xf32>
    %1206 = vector.broadcast %1204 : vector<1x16xf32> to vector<2x16xf32>
    %1207 = arith.mulf %1205, %1206 : vector<2x16xf32>
    %1208 = arith.addf %1202, %1207 : vector<2x16xf32>
    %1209 = vector.extract_strided_slice %868 {offsets = [0, 0], sizes = [2, 1], strides = [1, 1]} : vector<2x8xf32> to vector<2x1xf32>
    %1210 = vector.extract_strided_slice %869 {offsets = [56, 0], sizes = [1, 16], strides = [1, 1]} : vector<64x16xf32> to vector<1x16xf32>
    %1211 = vector.broadcast %1209 : vector<2x1xf32> to vector<2x16xf32>
    %1212 = vector.broadcast %1210 : vector<1x16xf32> to vector<2x16xf32>
    %1213 = arith.mulf %1211, %1212 : vector<2x16xf32>
    %1214 = arith.addf %1208, %1213 : vector<2x16xf32>
    %1215 = vector.extract_strided_slice %868 {offsets = [0, 1], sizes = [2, 1], strides = [1, 1]} : vector<2x8xf32> to vector<2x1xf32>
    %1216 = vector.extract_strided_slice %869 {offsets = [57, 0], sizes = [1, 16], strides = [1, 1]} : vector<64x16xf32> to vector<1x16xf32>
    %1217 = vector.broadcast %1215 : vector<2x1xf32> to vector<2x16xf32>
    %1218 = vector.broadcast %1216 : vector<1x16xf32> to vector<2x16xf32>
    %1219 = arith.mulf %1217, %1218 : vector<2x16xf32>
    %1220 = arith.addf %1214, %1219 : vector<2x16xf32>
    %1221 = vector.extract_strided_slice %868 {offsets = [0, 2], sizes = [2, 1], strides = [1, 1]} : vector<2x8xf32> to vector<2x1xf32>
    %1222 = vector.extract_strided_slice %869 {offsets = [58, 0], sizes = [1, 16], strides = [1, 1]} : vector<64x16xf32> to vector<1x16xf32>
    %1223 = vector.broadcast %1221 : vector<2x1xf32> to vector<2x16xf32>
    %1224 = vector.broadcast %1222 : vector<1x16xf32> to vector<2x16xf32>
    %1225 = arith.mulf %1223, %1224 : vector<2x16xf32>
    %1226 = arith.addf %1220, %1225 : vector<2x16xf32>
    %1227 = vector.extract_strided_slice %868 {offsets = [0, 3], sizes = [2, 1], strides = [1, 1]} : vector<2x8xf32> to vector<2x1xf32>
    %1228 = vector.extract_strided_slice %869 {offsets = [59, 0], sizes = [1, 16], strides = [1, 1]} : vector<64x16xf32> to vector<1x16xf32>
    %1229 = vector.broadcast %1227 : vector<2x1xf32> to vector<2x16xf32>
    %1230 = vector.broadcast %1228 : vector<1x16xf32> to vector<2x16xf32>
    %1231 = arith.mulf %1229, %1230 : vector<2x16xf32>
    %1232 = arith.addf %1226, %1231 : vector<2x16xf32>
    %1233 = vector.extract_strided_slice %868 {offsets = [0, 4], sizes = [2, 1], strides = [1, 1]} : vector<2x8xf32> to vector<2x1xf32>
    %1234 = vector.extract_strided_slice %869 {offsets = [60, 0], sizes = [1, 16], strides = [1, 1]} : vector<64x16xf32> to vector<1x16xf32>
    %1235 = vector.broadcast %1233 : vector<2x1xf32> to vector<2x16xf32>
    %1236 = vector.broadcast %1234 : vector<1x16xf32> to vector<2x16xf32>
    %1237 = arith.mulf %1235, %1236 : vector<2x16xf32>
    %1238 = arith.addf %1232, %1237 : vector<2x16xf32>
    %1239 = vector.extract_strided_slice %868 {offsets = [0, 5], sizes = [2, 1], strides = [1, 1]} : vector<2x8xf32> to vector<2x1xf32>
    %1240 = vector.extract_strided_slice %869 {offsets = [61, 0], sizes = [1, 16], strides = [1, 1]} : vector<64x16xf32> to vector<1x16xf32>
    %1241 = vector.broadcast %1239 : vector<2x1xf32> to vector<2x16xf32>
    %1242 = vector.broadcast %1240 : vector<1x16xf32> to vector<2x16xf32>
    %1243 = arith.mulf %1241, %1242 : vector<2x16xf32>
    %1244 = arith.addf %1238, %1243 : vector<2x16xf32>
    %1245 = vector.extract_strided_slice %868 {offsets = [0, 6], sizes = [2, 1], strides = [1, 1]} : vector<2x8xf32> to vector<2x1xf32>
    %1246 = vector.extract_strided_slice %869 {offsets = [62, 0], sizes = [1, 16], strides = [1, 1]} : vector<64x16xf32> to vector<1x16xf32>
    %1247 = vector.broadcast %1245 : vector<2x1xf32> to vector<2x16xf32>
    %1248 = vector.broadcast %1246 : vector<1x16xf32> to vector<2x16xf32>
    %1249 = arith.mulf %1247, %1248 : vector<2x16xf32>
    %1250 = arith.addf %1244, %1249 : vector<2x16xf32>
    %1251 = vector.extract_strided_slice %868 {offsets = [0, 7], sizes = [2, 1], strides = [1, 1]} : vector<2x8xf32> to vector<2x1xf32>
    %1252 = vector.extract_strided_slice %869 {offsets = [63, 0], sizes = [1, 16], strides = [1, 1]} : vector<64x16xf32> to vector<1x16xf32>
    %1253 = vector.broadcast %1251 : vector<2x1xf32> to vector<2x16xf32>
    %1254 = vector.broadcast %1252 : vector<1x16xf32> to vector<2x16xf32>
    %1255 = arith.mulf %1253, %1254 : vector<2x16xf32>
    %1256 = arith.addf %1250, %1255 : vector<2x16xf32>
    %cst_265 = arith.constant 0.000000e+00 : f32
    %1257 = vector.broadcast %cst_265 : f32 to vector<2x16xf32>
    %1258 = arith.maximumf %1256, %1257 : vector<2x16xf32>
    %1259 = vector.broadcast %cst_265 : f32 to vector<2x16xf32>
    %1260 = arith.subf %1256, %1259 : vector<2x16xf32>
    %1261 = arith.cmpf one, %1260, %1260 : vector<2x16xf32>
    %1262 = vector.broadcast %cst_265 : f32 to vector<2x16xf32>
    %1263 = arith.addf %1256, %1262 : vector<2x16xf32>
    %1264 = math.absf %1260 : vector<2x16xf32>
    %cst_266 = arith.constant 0.000000e+00 : f32
    %1265 = vector.broadcast %cst_266 : f32 to vector<2x16xf32>
    %1266 = arith.subf %1265, %1264 : vector<2x16xf32>
    %1267 = math.exp %1266 : vector<2x16xf32>
    %1268 = math.log1p %1267 : vector<2x16xf32>
    %1269 = arith.addf %1258, %1268 : vector<2x16xf32>
    %1270 = arith.select %1261, %1263, %1269 : vector<2x16xi1>, vector<2x16xf32>
    %c0_267 = arith.constant 0 : index
    %c0_268 = arith.constant 0 : index
    %1271 = vector.load %arg9[%c0_267, %c0_268] : memref<1x16xf32, #tpu.memory_space<vmem>>, vector<1x16xf32>
    %1272 = vector.broadcast %1271 : vector<1x16xf32> to vector<2x16xf32>
    %1273 = arith.mulf %1270, %1272 : vector<2x16xf32>
    %cst_269 = arith.constant dense<0.000000e+00> : vector<2xf32>
    %1274 = vector.multi_reduction <add>, %1273, %cst_269 [1] : vector<2x16xf32> to vector<2xf32>
    %1275 = vector.shape_cast %1274 : vector<2xf32> to vector<2x1xf32>
    %c0_270 = arith.constant 0 : index
    %c0_271 = arith.constant 0 : index
    %1276 = vector.load %arg10[%c0_270, %c0_271] : memref<1x1xf32, #tpu.memory_space<vmem>>, vector<1x1xf32>
    %1277 = vector.broadcast %1276 : vector<1x1xf32> to vector<2x1xf32>
    %1278 = arith.addf %1275, %1277 : vector<2x1xf32>
    %cst_272 = arith.constant 0.000000e+00 : f32
    %1279 = vector.broadcast %cst_272 : f32 to vector<2x1xf32>
    %1280 = arith.maximumf %1278, %1279 : vector<2x1xf32>
    %1281 = vector.broadcast %cst_272 : f32 to vector<2x1xf32>
    %1282 = arith.subf %1278, %1281 : vector<2x1xf32>
    %1283 = arith.cmpf one, %1282, %1282 : vector<2x1xf32>
    %1284 = vector.broadcast %cst_272 : f32 to vector<2x1xf32>
    %1285 = arith.addf %1278, %1284 : vector<2x1xf32>
    %1286 = math.absf %1282 : vector<2x1xf32>
    %cst_273 = arith.constant 0.000000e+00 : f32
    %1287 = vector.broadcast %cst_273 : f32 to vector<2x1xf32>
    %1288 = arith.subf %1287, %1286 : vector<2x1xf32>
    %1289 = math.exp %1288 : vector<2x1xf32>
    %1290 = math.log1p %1289 : vector<2x1xf32>
    %1291 = arith.addf %1280, %1290 : vector<2x1xf32>
    %1292 = arith.select %1283, %1285, %1291 : vector<2x1xi1>, vector<2x1xf32>
    %cst_274 = arith.constant 1.000000e+08 : f32
    %1293 = vector.broadcast %cst_274 : f32 to vector<2x1xf32>
    %1294 = arith.mulf %1292, %1293 : vector<2x1xf32>
    %cst_275 = arith.constant 3.000000e-02 : f32
    %1295 = vector.broadcast %cst_275 : f32 to vector<2x1xf32>
    %1296 = arith.mulf %1294, %1295 : vector<2x1xf32>
    %c0_276 = arith.constant 0 : index
    %c0_277 = arith.constant 0 : index
    %1297 = vector.load %arg11[%c0_276, %c0_277] : memref<2x1xf32, #tpu.memory_space<vmem>>, vector<2x1xf32>
    tpu.vector_store %arg11[%c0_276, %c0_277], %1296 {strides = array<i32>} : memref<2x1xf32, #tpu.memory_space<vmem>>, vector<2x1xf32>,
    return
  }
}

</mosaic_0001>

<llo_original>
// kernel: tpu_custom_call.1
$region0: #{tpu_custom_call.1}
  #allocation0 [shape = 'u32[]', space=smem, size = 0x4, offset = 0x4, fixed_abs, tag = 'smem constant byte address 0x4 - core index']
  #allocation1 [shape = 'u32[144,128]{1,0:T(1,128)}', space=vmem, size = 0x12000, scoped, tag = 'internal scratch']
  #allocation2 [shape = 'f32[1]{0:T(128)S(6)}', space=smem, size = 0x200, scoped, tag = 'scoped memory for tpu_custom_call.1']
  #allocation3 [shape = 'f32[1]{0:T(128)S(6)}', space=smem, size = 0x200, scoped, tag = 'scoped memory for tpu_custom_call.1']
  #allocation4 [shape = 'f32[1,1]{1,0:T(1,128)S(1)}', space=vmem, size = 0x200, scoped, tag = 'scoped memory for tpu_custom_call.1']
  %s0 = inlined_call_operand.vmem [shape: f32[2,32], index: 0, kind: input, shape index: {}]
  %s1 = inlined_call_operand.vmem [shape: f32[32,81], index: 1, kind: input, shape index: {}]
  %s2 = inlined_call_operand.vmem [shape: f32[1,81], index: 2, kind: input, shape index: {}]
  %s3 = inlined_call_operand.vmem [shape: f32[3,3], index: 3, kind: input, shape index: {}]
  %s4 = inlined_call_operand.<no memory space> [shape: f32[1], index: 4, kind: input, shape index: {}]
  %s5 = inlined_call_operand.vmem [shape: f32[2,2], index: 5, kind: input, shape index: {}]
  %s6 = inlined_call_operand.<no memory space> [shape: f32[1], index: 6, kind: input, shape index: {}]
  %s7 = inlined_call_operand.vmem [shape: f32[64,16], index: 7, kind: input, shape index: {}]
  %s8 = inlined_call_operand.vmem [shape: f32[1,16], index: 8, kind: input, shape index: {}]
  %s9 = inlined_call_operand.vmem [shape: f32[1,16], index: 9, kind: input, shape index: {}]
  %s10 = inlined_call_operand.<no memory space> [shape: f32[1,1], index: 10, kind: input, shape index: {}]
  %s11 = inlined_call_operand.vmem [shape: f32[2,1], index: 11, kind: output, shape index: {}]
  %s12 = sld [smem:[#allocation0]]
  $region62: #{tpu_custom_call.1} parent=0
    _
  %s14 = ssub.s32 1, %s12
  %s15 = scalar_select 0, %s14, %s12
  %16 = sst [smem:[#allocation2]] %s4
  %17 = sst [smem:[#allocation3]] %s6
  %v18 = vstv %s10
  %19 = vst [vmem:[#allocation4] sm:$0x1] %v18
  $region1: #{tpu_custom_call.1} parent=0
    #allocation5 [shape = 'u8[2048]{0}', space=smem, size = 0x800, scoped, tag = 'input window, operand 3, single buffered']
    #allocation6 [shape = 's32[1]{0}', space=sflag, size = 0x4, scoped, tag = 'scoped memory for tpu_custom_call.1']
    #allocation7 [shape = 'u8[1024]{0}', space=smem, size = 0x400, scoped, tag = 'input window, operand 5, single buffered']
    #allocation8 [shape = 's32[1]{0}', space=sflag, size = 0x4, scoped, tag = 'scoped memory for tpu_custom_call.1']
    %20 = vsyncpa [#allocation6], 0
    %21 = vsyncpa [#allocation8], 0
    // Predicated region
    $region2: #{tpu_custom_call.1} parent=1 // pred_check
      _
    $region3: #{tpu_custom_call.1} parent=1 // pred_check_branch
      %23 = sbr.rel (0) target = $region5
    $region4: #{tpu_custom_call.1} parent=1 // pred_region
      _
    $region5: #{tpu_custom_call.1} parent=1 // pred_fallthru
      _
    // Predicated region
    $region6: #{tpu_custom_call.1} parent=1 // pred_check
      _
    $region7: #{tpu_custom_call.1} parent=1 // pred_check_branch
      %25 = sbr.rel (0) target = $region9
    $region8: #{tpu_custom_call.1} parent=1 // pred_region
      _
    $region9: #{tpu_custom_call.1} parent=1 // pred_fallthru
      _
    // Predicated region
    $region10: #{tpu_custom_call.1} parent=1 // pred_check
      _
    $region11: #{tpu_custom_call.1} parent=1 // pred_check_branch
      %27 = sbr.rel (0) target = $region13
    $region12: #{tpu_custom_call.1} parent=1 // pred_region
      _
    $region13: #{tpu_custom_call.1} parent=1 // pred_fallthru
      _
    // Predicated region
    $region14: #{tpu_custom_call.1} parent=1 // pred_check
      _
    $region15: #{tpu_custom_call.1} parent=1 // pred_check_branch
      %29 = sbr.rel (0) target = $region17
    $region16: #{tpu_custom_call.1} parent=1 // pred_region
      %s31 = ssub.s32 64, 64
      %32 = vsyncadd [#allocation6], %s31
      %s34 = sshll.u32 %s3, 4
      %s35 = int_to_ptr.vmem [resolvable:$true] %s34
      %37 = dma.vmem_to_smem %s35, 64, [#allocation5], [#allocation6]
    $region17: #{tpu_custom_call.1} parent=1 // pred_fallthru
      _
    // Predicated region
    $region18: #{tpu_custom_call.1} parent=1 // pred_check
      _
    $region19: #{tpu_custom_call.1} parent=1 // pred_check_branch
      %39 = sbr.rel (0) target = $region21
    $region20: #{tpu_custom_call.1} parent=1 // pred_region
      _
    $region21: #{tpu_custom_call.1} parent=1 // pred_fallthru
      _
    // Predicated region
    $region22: #{tpu_custom_call.1} parent=1 // pred_check
      _
    $region23: #{tpu_custom_call.1} parent=1 // pred_check_branch
      %41 = sbr.rel (0) target = $region25
    $region24: #{tpu_custom_call.1} parent=1 // pred_region
      %s43 = ssub.s32 32, 32
      %44 = vsyncadd [#allocation8], %s43
      %s46 = sshll.u32 %s5, 4
      %s47 = int_to_ptr.vmem [resolvable:$true] %s46
      %49 = dma.vmem_to_smem %s47, 32, [#allocation7], [#allocation8]
    $region25: #{tpu_custom_call.1} parent=1 // pred_fallthru
      _
    // Predicated region
    $region26: #{tpu_custom_call.1} parent=1 // pred_check
      _
    $region27: #{tpu_custom_call.1} parent=1 // pred_check_branch
      %51 = sbr.rel (0) target = $region29
    $region28: #{tpu_custom_call.1} parent=1 // pred_region
      _
    $region29: #{tpu_custom_call.1} parent=1 // pred_fallthru
      _
    // Predicated region
    $region30: #{tpu_custom_call.1} parent=1 // pred_check
      _
    $region31: #{tpu_custom_call.1} parent=1 // pred_check_branch
      %53 = sbr.rel (0) target = $region33
    $region32: #{tpu_custom_call.1} parent=1 // pred_region
      _
    $region33: #{tpu_custom_call.1} parent=1 // pred_fallthru
      _
    // Predicated region
    $region34: #{tpu_custom_call.1} parent=1 // pred_check
      _
    $region35: #{tpu_custom_call.1} parent=1 // pred_check_branch
      %55 = sbr.rel (0) target = $region37
    $region36: #{tpu_custom_call.1} parent=1 // pred_region
      _
    $region37: #{tpu_custom_call.1} parent=1 // pred_fallthru
      _
    // Predicated region
    $region38: #{tpu_custom_call.1} parent=1 // pred_check
      _
    $region39: #{tpu_custom_call.1} parent=1 // pred_check_branch
      %57 = sbr.rel (0) target = $region41
    $region40: #{tpu_custom_call.1} parent=1 // pred_region
      _
    $region41: #{tpu_custom_call.1} parent=1 // pred_fallthru
      _
    // Predicated region
    $region42: #{tpu_custom_call.1} parent=1 // pred_check
      _
    $region43: #{tpu_custom_call.1} parent=1 // pred_check_branch
      %59 = sbr.rel (0) target = $region45
    $region44: #{tpu_custom_call.1} parent=1 // pred_region
      _
    $region45: #{tpu_custom_call.1} parent=1 // pred_fallthru
      _
    // Predicated region
    $region46: #{tpu_custom_call.1} parent=1 // pred_check
      _
    $region47: #{tpu_custom_call.1} parent=1 // pred_check_branch
      %61 = sbr.rel (0) target = $region49
    $region48: #{tpu_custom_call.1} parent=1 // pred_region
      %62 = dma.done [#allocation6], 64
    $region49: #{tpu_custom_call.1} parent=1 // pred_fallthru
      _
    // Predicated region
    $region50: #{tpu_custom_call.1} parent=1 // pred_check
      _
    $region51: #{tpu_custom_call.1} parent=1 // pred_check_branch
      %64 = sbr.rel (0) target = $region53
    $region52: #{tpu_custom_call.1} parent=1 // pred_region
      %65 = dma.done [#allocation8], 32
    $region53: #{tpu_custom_call.1} parent=1 // pred_fallthru
      _
    %66 = sfence
    %v67 = vld [vmem:[%s0] sm:$0x3]
    %v68 = vld [vmem:[%s1] sm:$0xff]
    %v69 = vld [vmem:[%s1 + $0x8] sm:$0xff]
    %v70 = vld [vmem:[%s1 + $0x10] sm:$0xff]
    %v71 = vld [vmem:[%s1 + $0x18] sm:$0xff]
    %v72 = vld [vmem:[%s2] sm:$0x1]
    %v74 = vlaneseq
    %v75 = vshrl.u32 %v74, 7
    %v76 = vsub.s32 0, %v75
    %v77 = vrot.slane %v72, %v76
    %80 = vset.pattern.permute.xlu0 0
    %81 = vperm.xlu0 %80, %v67
    %v82 = vpop.permute.xlu0 %81
    %v84 = vlaneseq
    %v85 = vshrl.u32 %v84, 7
    %v86 = vsub.s32 0, %v85
    %v87 = vrot.slane %v68, %v86
    %v88 = vmul.f32 %v82, %v87
    %v89 = vadd.f32 %v77, %v88
    %90 = vset.pattern.permute.xlu0 1
    %91 = vperm.xlu0 %90, %v67
    %v92 = vpop.permute.xlu0 %91
    %v94 = vlaneseq
    %v95 = vshrl.u32 %v94, 7
    %v96 = vsub.s32 1, %v95
    %v97 = vrot.slane %v68, %v96
    %v98 = vmul.f32 %v92, %v97
    %v99 = vadd.f32 %v89, %v98
    %100 = vset.pattern.permute.xlu0 2
    %101 = vperm.xlu0 %100, %v67
    %v102 = vpop.permute.xlu0 %101
    %v104 = vlaneseq
    %v105 = vshrl.u32 %v104, 7
    %v106 = vsub.s32 2, %v105
    %v107 = vrot.slane %v68, %v106
    %v108 = vmul.f32 %v102, %v107
    %v109 = vadd.f32 %v99, %v108
    %110 = vset.pattern.permute.xlu0 3
    %111 = vperm.xlu0 %110, %v67
    %v112 = vpop.permute.xlu0 %111
    %v114 = vlaneseq
    %v115 = vshrl.u32 %v114, 7
    %v116 = vsub.s32 3, %v115
    %v117 = vrot.slane %v68, %v116
    %v118 = vmul.f32 %v112, %v117
    %v119 = vadd.f32 %v109, %v118
    %120 = vset.pattern.permute.xlu0 4
    %121 = vperm.xlu0 %120, %v67
    %v122 = vpop.permute.xlu0 %121
    %v124 = vlaneseq
    %v125 = vshrl.u32 %v124, 7
    %v126 = vsub.s32 4, %v125
    %v127 = vrot.slane %v68, %v126
    %v128 = vmul.f32 %v122, %v127
    %v129 = vadd.f32 %v119, %v128
    %130 = vset.pattern.permute.xlu0 5
    %131 = vperm.xlu0 %130, %v67
    %v132 = vpop.permute.xlu0 %131
    %v134 = vlaneseq
    %v135 = vshrl.u32 %v134, 7
    %v136 = vsub.s32 5, %v135
    %v137 = vrot.slane %v68, %v136
    %v138 = vmul.f32 %v132, %v137
    %v139 = vadd.f32 %v129, %v138
    %140 = vset.pattern.permute.xlu0 6
    %141 = vperm.xlu0 %140, %v67
    %v142 = vpop.permute.xlu0 %141
    %v144 = vlaneseq
    %v145 = vshrl.u32 %v144, 7
    %v146 = vsub.s32 6, %v145
    %v147 = vrot.slane %v68, %v146
    %v148 = vmul.f32 %v142, %v147
    %v149 = vadd.f32 %v139, %v148
    %150 = vset.pattern.permute.xlu0 7
    %151 = vperm.xlu0 %150, %v67
    %v152 = vpop.permute.xlu0 %151
    %v154 = vlaneseq
    %v155 = vshrl.u32 %v154, 7
    %v156 = vsub.s32 7, %v155
    %v157 = vrot.slane %v68, %v156
    %v158 = vmul.f32 %v152, %v157
    %v159 = vadd.f32 %v149, %v158
    %160 = vset.pattern.permute.xlu0 8
    %161 = vperm.xlu0 %160, %v67
    %v162 = vpop.permute.xlu0 %161
    %v164 = vlaneseq
    %v165 = vshrl.u32 %v164, 7
    %v166 = vsub.s32 0, %v165
    %v167 = vrot.slane %v69, %v166
    %v168 = vmul.f32 %v162, %v167
    %v169 = vadd.f32 %v159, %v168
    %170 = vset.pattern.permute.xlu0 9
    %171 = vperm.xlu0 %170, %v67
    %v172 = vpop.permute.xlu0 %171
    %v174 = vlaneseq
    %v175 = vshrl.u32 %v174, 7
    %v176 = vsub.s32 1, %v175
    %v177 = vrot.slane %v69, %v176
    %v178 = vmul.f32 %v172, %v177
    %v179 = vadd.f32 %v169, %v178
    %180 = vset.pattern.permute.xlu0 10
    %181 = vperm.xlu0 %180, %v67
    %v182 = vpop.permute.xlu0 %181
    %v184 = vlaneseq
    %v185 = vshrl.u32 %v184, 7
    %v186 = vsub.s32 2, %v185
    %v187 = vrot.slane %v69, %v186
    %v188 = vmul.f32 %v182, %v187
    %v189 = vadd.f32 %v179, %v188
    %190 = vset.pattern.permute.xlu0 11
    %191 = vperm.xlu0 %190, %v67
    %v192 = vpop.permute.xlu0 %191
    %v194 = vlaneseq
    %v195 = vshrl.u32 %v194, 7
    %v196 = vsub.s32 3, %v195
    %v197 = vrot.slane %v69, %v196
    %v198 = vmul.f32 %v192, %v197
    %v199 = vadd.f32 %v189, %v198
    %200 = vset.pattern.permute.xlu0 12
    %201 = vperm.xlu0 %200, %v67
    %v202 = vpop.permute.xlu0 %201
    %v204 = vlaneseq
    %v205 = vshrl.u32 %v204, 7
    %v206 = vsub.s32 4, %v205
    %v207 = vrot.slane %v69, %v206
    %v208 = vmul.f32 %v202, %v207
    %v209 = vadd.f32 %v199, %v208
    %210 = vset.pattern.permute.xlu0 13
    %211 = vperm.xlu0 %210, %v67
    %v212 = vpop.permute.xlu0 %211
    %v214 = vlaneseq
    %v215 = vshrl.u32 %v214, 7
    %v216 = vsub.s32 5, %v215
    %v217 = vrot.slane %v69, %v216
    %v218 = vmul.f32 %v212, %v217
    %v219 = vadd.f32 %v209, %v218
    %220 = vset.pattern.permute.xlu0 14
    %221 = vperm.xlu0 %220, %v67
    %v222 = vpop.permute.xlu0 %221
    %v224 = vlaneseq
    %v225 = vshrl.u32 %v224, 7
    %v226 = vsub.s32 6, %v225
    %v227 = vrot.slane %v69, %v226
    %v228 = vmul.f32 %v222, %v227
    %v229 = vadd.f32 %v219, %v228
    %230 = vset.pattern.permute.xlu0 15
    %231 = vperm.xlu0 %230, %v67
    %v232 = vpop.permute.xlu0 %231
    %v234 = vlaneseq
    %v235 = vshrl.u32 %v234, 7
    %v236 = vsub.s32 7, %v235
    %v237 = vrot.slane %v69, %v236
    %v238 = vmul.f32 %v232, %v237
    %v239 = vadd.f32 %v229, %v238
    %240 = vset.pattern.permute.xlu0 16
    %241 = vperm.xlu0 %240, %v67
    %v242 = vpop.permute.xlu0 %241
    %v244 = vlaneseq
    %v245 = vshrl.u32 %v244, 7
    %v246 = vsub.s32 0, %v245
    %v247 = vrot.slane %v70, %v246
    %v248 = vmul.f32 %v242, %v247
    %v249 = vadd.f32 %v239, %v248
    %250 = vset.pattern.permute.xlu0 17
    %251 = vperm.xlu0 %250, %v67
    %v252 = vpop.permute.xlu0 %251
    %v254 = vlaneseq
    %v255 = vshrl.u32 %v254, 7
    %v256 = vsub.s32 1, %v255
    %v257 = vrot.slane %v70, %v256
    %v258 = vmul.f32 %v252, %v257
    %v259 = vadd.f32 %v249, %v258
    %260 = vset.pattern.permute.xlu0 18
    %261 = vperm.xlu0 %260, %v67
    %v262 = vpop.permute.xlu0 %261
    %v264 = vlaneseq
    %v265 = vshrl.u32 %v264, 7
    %v266 = vsub.s32 2, %v265
    %v267 = vrot.slane %v70, %v266
    %v268 = vmul.f32 %v262, %v267
    %v269 = vadd.f32 %v259, %v268
    %270 = vset.pattern.permute.xlu0 19
    %271 = vperm.xlu0 %270, %v67
    %v272 = vpop.permute.xlu0 %271
    %v274 = vlaneseq
    %v275 = vshrl.u32 %v274, 7
    %v276 = vsub.s32 3, %v275
    %v277 = vrot.slane %v70, %v276
    %v278 = vmul.f32 %v272, %v277
    %v279 = vadd.f32 %v269, %v278
    %280 = vset.pattern.permute.xlu0 20
    %281 = vperm.xlu0 %280, %v67
    %v282 = vpop.permute.xlu0 %281
    %v284 = vlaneseq
    %v285 = vshrl.u32 %v284, 7
    %v286 = vsub.s32 4, %v285
    %v287 = vrot.slane %v70, %v286
    %v288 = vmul.f32 %v282, %v287
    %v289 = vadd.f32 %v279, %v288
    %290 = vset.pattern.permute.xlu0 21
    %291 = vperm.xlu0 %290, %v67
    %v292 = vpop.permute.xlu0 %291
    %v294 = vlaneseq
    %v295 = vshrl.u32 %v294, 7
    %v296 = vsub.s32 5, %v295
    %v297 = vrot.slane %v70, %v296
    %v298 = vmul.f32 %v292, %v297
    %v299 = vadd.f32 %v289, %v298
    %300 = vset.pattern.permute.xlu0 22
    %301 = vperm.xlu0 %300, %v67
    %v302 = vpop.permute.xlu0 %301
    %v304 = vlaneseq
    %v305 = vshrl.u32 %v304, 7
    %v306 = vsub.s32 6, %v305
    %v307 = vrot.slane %v70, %v306
    %v308 = vmul.f32 %v302, %v307
    %v309 = vadd.f32 %v299, %v308
    %310 = vset.pattern.permute.xlu0 23
    %311 = vperm.xlu0 %310, %v67
    %v312 = vpop.permute.xlu0 %311
    %v314 = vlaneseq
    %v315 = vshrl.u32 %v314, 7
    %v316 = vsub.s32 7, %v315
    %v317 = vrot.slane %v70, %v316
    %v318 = vmul.f32 %v312, %v317
    %v319 = vadd.f32 %v309, %v318
    %320 = vset.pattern.permute.xlu0 24
    %321 = vperm.xlu0 %320, %v67
    %v322 = vpop.permute.xlu0 %321
    %v324 = vlaneseq
    %v325 = vshrl.u32 %v324, 7
    %v326 = vsub.s32 0, %v325
    %v327 = vrot.slane %v71, %v326
    %v328 = vmul.f32 %v322, %v327
    %v329 = vadd.f32 %v319, %v328
    %330 = vset.pattern.permute.xlu0 25
    %331 = vperm.xlu0 %330, %v67
    %v332 = vpop.permute.xlu0 %331
    %v334 = vlaneseq
    %v335 = vshrl.u32 %v334, 7
    %v336 = vsub.s32 1, %v335
    %v337 = vrot.slane %v71, %v336
    %v338 = vmul.f32 %v332, %v337
    %v339 = vadd.f32 %v329, %v338
    %340 = vset.pattern.permute.xlu0 26
    %341 = vperm.xlu0 %340, %v67
    %v342 = vpop.permute.xlu0 %341
    %v344 = vlaneseq
    %v345 = vshrl.u32 %v344, 7
    %v346 = vsub.s32 2, %v345
    %v347 = vrot.slane %v71, %v346
    %v348 = vmul.f32 %v342, %v347
    %v349 = vadd.f32 %v339, %v348
    %350 = vset.pattern.permute.xlu0 27
    %351 = vperm.xlu0 %350, %v67
    %v352 = vpop.permute.xlu0 %351
    %v354 = vlaneseq
    %v355 = vshrl.u32 %v354, 7
    %v356 = vsub.s32 3, %v355
    %v357 = vrot.slane %v71, %v356
    %v358 = vmul.f32 %v352, %v357
    %v359 = vadd.f32 %v349, %v358
    %360 = vset.pattern.permute.xlu0 28
    %361 = vperm.xlu0 %360, %v67
    %v362 = vpop.permute.xlu0 %361
    %v364 = vlaneseq
    %v365 = vshrl.u32 %v364, 7
    %v366 = vsub.s32 4, %v365
    %v367 = vrot.slane %v71, %v366
    %v368 = vmul.f32 %v362, %v367
    %v369 = vadd.f32 %v359, %v368
    %370 = vset.pattern.permute.xlu0 29
    %371 = vperm.xlu0 %370, %v67
    %v372 = vpop.permute.xlu0 %371
    %v374 = vlaneseq
    %v375 = vshrl.u32 %v374, 7
    %v376 = vsub.s32 5, %v375
    %v377 = vrot.slane %v71, %v376
    %v378 = vmul.f32 %v372, %v377
    %v379 = vadd.f32 %v369, %v378
    %380 = vset.pattern.permute.xlu0 30
    %381 = vperm.xlu0 %380, %v67
    %v382 = vpop.permute.xlu0 %381
    %v384 = vlaneseq
    %v385 = vshrl.u32 %v384, 7
    %v386 = vsub.s32 6, %v385
    %v387 = vrot.slane %v71, %v386
    %v388 = vmul.f32 %v382, %v387
    %v389 = vadd.f32 %v379, %v388
    %390 = vset.pattern.permute.xlu0 31
    %391 = vperm.xlu0 %390, %v67
    %v392 = vpop.permute.xlu0 %391
    %v394 = vlaneseq
    %v395 = vshrl.u32 %v394, 7
    %v396 = vsub.s32 7, %v395
    %v397 = vrot.slane %v71, %v396
    %v398 = vmul.f32 %v392, %v397
    %v399 = vadd.f32 %v389, %v398
    %401 = vrot.lane.b32.xlu0 %v399, 1
    %v402 = vpop.permute.xlu0 %401
    %vm404 = vcmask 7168
    %v405 = vsel %vm404, 0.0, %v402
    %406 = vrot.lane.b32.xlu0 %v399, 127
    %v407 = vpop.permute.xlu0 %406
    %vm409 = vcmask 64512
    %v410 = vsel %vm409, %v407, 0.0
    %411 = vrot.lane.b32.xlu0 %v399, 120
    %v412 = vpop.permute.xlu0 %411
    %v414 = vsel %vm404, 0.0, %v412
    %415 = vrot.lane.b32.xlu0 %v399, 118
    %v416 = vpop.permute.xlu0 %415
    %v418 = vsel %vm409, %v416, 0.0
    %419 = vrot.lane.b32.xlu0 %v399, 111
    %v420 = vpop.permute.xlu0 %419
    %v422 = vsel %vm404, 0.0, %v420
    %423 = vrot.lane.b32.xlu0 %v399, 109
    %v424 = vpop.permute.xlu0 %423
    %v426 = vsel %vm409, %v424, 0.0
    %427 = vrot.lane.b32.xlu0 %v399, 102
    %v428 = vpop.permute.xlu0 %427
    %v430 = vsel %vm404, 0.0, %v428
    %431 = vrot.lane.b32.xlu0 %v399, 100
    %v432 = vpop.permute.xlu0 %431
    %v434 = vsel %vm409, %v432, 0.0
    %435 = vrot.lane.b32.xlu0 %v399, 93
    %v436 = vpop.permute.xlu0 %435
    %v438 = vsel %vm404, 0.0, %v436
    %439 = vrot.lane.b32.xlu0 %v399, 91
    %v440 = vpop.permute.xlu0 %439
    %v442 = vsel %vm409, %v440, 0.0
    %443 = vrot.lane.b32.xlu0 %v399, 84
    %v444 = vpop.permute.xlu0 %443
    %v446 = vsel %vm404, 0.0, %v444
    %447 = vrot.lane.b32.xlu0 %v399, 82
    %v448 = vpop.permute.xlu0 %447
    %v450 = vsel %vm409, %v448, 0.0
    %451 = vrot.lane.b32.xlu0 %v399, 75
    %v452 = vpop.permute.xlu0 %451
    %v454 = vsel %vm404, 0.0, %v452
    %455 = vrot.lane.b32.xlu0 %v399, 73
    %v456 = vpop.permute.xlu0 %455
    %v458 = vsel %vm409, %v456, 0.0
    %459 = vrot.lane.b32.xlu0 %v399, 66
    %v460 = vpop.permute.xlu0 %459
    %v462 = vsel %vm404, 0.0, %v460
    %463 = vrot.lane.b32.xlu0 %v399, 64
    %v464 = vpop.permute.xlu0 %463
    %v466 = vsel %vm409, %v464, 0.0
    %467 = vrot.lane.b32.xlu0 %v399, 57
    %v468 = vpop.permute.xlu0 %467
    %v470 = vsel %vm404, 0.0, %v468
    %471 = vrot.lane.b32.xlu0 %v399, 55
    %v472 = vpop.permute.xlu0 %471
    %v474 = vsel %vm409, %v472, 0.0
    %s475 = sld [smem:[#allocation2]]
    %s476 = sld [smem:[#allocation5 + $0x80]]
    %v477 = vstv %s476
    %v478 = vmul.f32 %v477, %v405
    %v479 = vadd.f32 %v478, 0.0
    %s480 = sld [smem:[#allocation5 + $0x81]]
    %v481 = vstv %s480
    %v482 = vmul.f32 %v481, %v399
    %v483 = vadd.f32 %v479, %v482
    %s484 = sld [smem:[#allocation5 + $0x82]]
    %v485 = vstv %s484
    %v486 = vmul.f32 %v485, %v410
    %v487 = vadd.f32 %v483, %v486
    %s488 = sld [smem:[#allocation5 + $0x100]]
    %v489 = vstv %s488
    %v490 = vmul.f32 %v489, %v414
    %v491 = vadd.f32 %v487, %v490
    %s492 = sld [smem:[#allocation5 + $0x101]]
    %v493 = vstv %s492
    %v494 = vmul.f32 %v493, %v399
    %496 = vrot.lane.b32.xlu0 %v494, 119
    %v497 = vpop.permute.xlu0 %496
    %v499 = vadd.f32 %v491, %v497
    %s500 = sld [smem:[#allocation5 + $0x102]]
    %v501 = vstv %s500
    %v502 = vmul.f32 %v501, %v418
    %v503 = vadd.f32 %v499, %v502
    %v504 = vstv %s475
    %v505 = vadd.f32 %v503, %v504
    %s506 = sld [smem:[#allocation5]]
    %v507 = vstv %s506
    %v508 = vmul.f32 %v507, %v405
    %v509 = vadd.f32 %v508, 0.0
    %s510 = sld [smem:[#allocation5 + $0x1]]
    %v511 = vstv %s510
    %v512 = vmul.f32 %v511, %v399
    %v513 = vadd.f32 %v509, %v512
    %s514 = sld [smem:[#allocation5 + $0x2]]
    %v515 = vstv %s514
    %v516 = vmul.f32 %v515, %v410
    %v517 = vadd.f32 %v513, %v516
    %v518 = vmul.f32 %v477, %v414
    %v519 = vadd.f32 %v517, %v518
    %521 = vrot.lane.b32.xlu0 %v482, 119
    %v522 = vpop.permute.xlu0 %521
    %v524 = vadd.f32 %v519, %v522
    %v525 = vmul.f32 %v485, %v418
    %v526 = vadd.f32 %v524, %v525
    %v527 = vmul.f32 %v489, %v422
    %v528 = vadd.f32 %v526, %v527
    %529 = vrot.lane.b32.xlu0 %v494, 110
    %v530 = vpop.permute.xlu0 %529
    %v532 = vadd.f32 %v528, %v530
    %v533 = vmul.f32 %v501, %v426
    %v534 = vadd.f32 %v532, %v533
    %v535 = vadd.f32 %v534, %v504
    %v536 = vmul.f32 %v507, %v414
    %v537 = vadd.f32 %v536, 0.0
    %539 = vrot.lane.b32.xlu0 %v512, 119
    %v540 = vpop.permute.xlu0 %539
    %v542 = vadd.f32 %v537, %v540
    %v543 = vmul.f32 %v515, %v418
    %v544 = vadd.f32 %v542, %v543
    %v545 = vmul.f32 %v477, %v422
    %v546 = vadd.f32 %v544, %v545
    %547 = vrot.lane.b32.xlu0 %v482, 110
    %v548 = vpop.permute.xlu0 %547
    %v550 = vadd.f32 %v546, %v548
    %v551 = vmul.f32 %v485, %v426
    %v552 = vadd.f32 %v550, %v551
    %v553 = vmul.f32 %v489, %v430
    %v554 = vadd.f32 %v552, %v553
    %555 = vrot.lane.b32.xlu0 %v494, 101
    %v556 = vpop.permute.xlu0 %555
    %v558 = vadd.f32 %v554, %v556
    %v559 = vmul.f32 %v501, %v434
    %v560 = vadd.f32 %v558, %v559
    %v561 = vadd.f32 %v560, %v504
    %v562 = vmul.f32 %v507, %v422
    %v563 = vadd.f32 %v562, 0.0
    %564 = vrot.lane.b32.xlu0 %v512, 110
    %v565 = vpop.permute.xlu0 %564
    %v567 = vadd.f32 %v563, %v565
    %v568 = vmul.f32 %v515, %v426
    %v569 = vadd.f32 %v567, %v568
    %v570 = vmul.f32 %v477, %v430
    %v571 = vadd.f32 %v569, %v570
    %572 = vrot.lane.b32.xlu0 %v482, 101
    %v573 = vpop.permute.xlu0 %572
    %v575 = vadd.f32 %v571, %v573
    %v576 = vmul.f32 %v485, %v434
    %v577 = vadd.f32 %v575, %v576
    %v578 = vmul.f32 %v489, %v438
    %v579 = vadd.f32 %v577, %v578
    %580 = vrot.lane.b32.xlu0 %v494, 92
    %v581 = vpop.permute.xlu0 %580
    %v583 = vadd.f32 %v579, %v581
    %v584 = vmul.f32 %v501, %v442
    %v585 = vadd.f32 %v583, %v584
    %v586 = vadd.f32 %v585, %v504
    %v587 = vmul.f32 %v507, %v430
    %v588 = vadd.f32 %v587, 0.0
    %589 = vrot.lane.b32.xlu0 %v512, 101
    %v590 = vpop.permute.xlu0 %589
    %v592 = vadd.f32 %v588, %v590
    %v593 = vmul.f32 %v515, %v434
    %v594 = vadd.f32 %v592, %v593
    %v595 = vmul.f32 %v477, %v438
    %v596 = vadd.f32 %v594, %v595
    %597 = vrot.lane.b32.xlu0 %v482, 92
    %v598 = vpop.permute.xlu0 %597
    %v600 = vadd.f32 %v596, %v598
    %v601 = vmul.f32 %v485, %v442
    %v602 = vadd.f32 %v600, %v601
    %v603 = vmul.f32 %v489, %v446
    %v604 = vadd.f32 %v602, %v603
    %605 = vrot.lane.b32.xlu0 %v494, 83
    %v606 = vpop.permute.xlu0 %605
    %v608 = vadd.f32 %v604, %v606
    %v609 = vmul.f32 %v501, %v450
    %v610 = vadd.f32 %v608, %v609
    %v611 = vadd.f32 %v610, %v504
    %v612 = vmul.f32 %v507, %v438
    %v613 = vadd.f32 %v612, 0.0
    %614 = vrot.lane.b32.xlu0 %v512, 92
    %v615 = vpop.permute.xlu0 %614
    %v617 = vadd.f32 %v613, %v615
    %v618 = vmul.f32 %v515, %v442
    %v619 = vadd.f32 %v617, %v618
    %v620 = vmul.f32 %v477, %v446
    %v621 = vadd.f32 %v619, %v620
    %622 = vrot.lane.b32.xlu0 %v482, 83
    %v623 = vpop.permute.xlu0 %622
    %v625 = vadd.f32 %v621, %v623
    %v626 = vmul.f32 %v485, %v450
    %v627 = vadd.f32 %v625, %v626
    %v628 = vmul.f32 %v489, %v454
    %v629 = vadd.f32 %v627, %v628
    %630 = vrot.lane.b32.xlu0 %v494, 74
    %v631 = vpop.permute.xlu0 %630
    %v633 = vadd.f32 %v629, %v631
    %v634 = vmul.f32 %v501, %v458
    %v635 = vadd.f32 %v633, %v634
    %v636 = vadd.f32 %v635, %v504
    %v637 = vmul.f32 %v507, %v446
    %v638 = vadd.f32 %v637, 0.0
    %639 = vrot.lane.b32.xlu0 %v512, 83
    %v640 = vpop.permute.xlu0 %639
    %v642 = vadd.f32 %v638, %v640
    %v643 = vmul.f32 %v515, %v450
    %v644 = vadd.f32 %v642, %v643
    %v645 = vmul.f32 %v477, %v454
    %v646 = vadd.f32 %v644, %v645
    %647 = vrot.lane.b32.xlu0 %v482, 74
    %v648 = vpop.permute.xlu0 %647
    %v650 = vadd.f32 %v646, %v648
    %v651 = vmul.f32 %v485, %v458
    %v652 = vadd.f32 %v650, %v651
    %v653 = vmul.f32 %v489, %v462
    %v654 = vadd.f32 %v652, %v653
    %655 = vrot.lane.b32.xlu0 %v494, 65
    %v656 = vpop.permute.xlu0 %655
    %v658 = vadd.f32 %v654, %v656
    %v659 = vmul.f32 %v501, %v466
    %v660 = vadd.f32 %v658, %v659
    %v661 = vadd.f32 %v660, %v504
    %v662 = vmul.f32 %v507, %v454
    %v663 = vadd.f32 %v662, 0.0
    %664 = vrot.lane.b32.xlu0 %v512, 74
    %v665 = vpop.permute.xlu0 %664
    %v667 = vadd.f32 %v663, %v665
    %v668 = vmul.f32 %v515, %v458
    %v669 = vadd.f32 %v667, %v668
    %v670 = vmul.f32 %v477, %v462
    %v671 = vadd.f32 %v669, %v670
    %672 = vrot.lane.b32.xlu0 %v482, 65
    %v673 = vpop.permute.xlu0 %672
    %v675 = vadd.f32 %v671, %v673
    %v676 = vmul.f32 %v485, %v466
    %v677 = vadd.f32 %v675, %v676
    %v678 = vmul.f32 %v489, %v470
    %v679 = vadd.f32 %v677, %v678
    %680 = vrot.lane.b32.xlu0 %v494, 56
    %v681 = vpop.permute.xlu0 %680
    %v683 = vadd.f32 %v679, %v681
    %v684 = vmul.f32 %v501, %v474
    %v685 = vadd.f32 %v683, %v684
    %v686 = vadd.f32 %v685, %v504
    %v687 = vmul.f32 %v507, %v462
    %v688 = vadd.f32 %v687, 0.0
    %689 = vrot.lane.b32.xlu0 %v512, 65
    %v690 = vpop.permute.xlu0 %689
    %v692 = vadd.f32 %v688, %v690
    %v693 = vmul.f32 %v515, %v466
    %v694 = vadd.f32 %v692, %v693
    %v695 = vmul.f32 %v477, %v470
    %v696 = vadd.f32 %v694, %v695
    %697 = vrot.lane.b32.xlu0 %v482, 56
    %v698 = vpop.permute.xlu0 %697
    %v700 = vadd.f32 %v696, %v698
    %v701 = vmul.f32 %v485, %v474
    %v702 = vadd.f32 %v700, %v701
    %v703 = vadd.f32 %v702, %v504
    %s704 = sld [smem:[#allocation3]]
    %s705 = sld [smem:[#allocation7]]
    %v706 = vstv %s705
    %v707 = vmul.f32 %v706, %v505
    %s708 = sld [smem:[#allocation7 + $0x1]]
    %v709 = vstv %s708
    %v710 = vmul.f32 %v709, %v505
    %712 = vrot.lane.b32.xlu0 %v710, 127
    %v713 = vpop.permute.xlu0 %712
    %v715 = vadd.f32 %v707, %v713
    %s716 = sld [smem:[#allocation7 + $0x80]]
    %v717 = vstv %s716
    %v718 = vmul.f32 %v717, %v535
    %v719 = vadd.f32 %v715, %v718
    %s720 = sld [smem:[#allocation7 + $0x81]]
    %v721 = vstv %s720
    %v722 = vmul.f32 %v721, %v535
    %724 = vrot.lane.b32.xlu0 %v722, 127
    %v725 = vpop.permute.xlu0 %724
    %v727 = vadd.f32 %v719, %v725
    %v728 = vstv %s704
    %v729 = vadd.f32 %v727, %v728
    %v730 = vmax.f32 %v729, 0.0
    %vm731 = vcmp.ne.f32.partialorder %v729, %v729
    %v732 = vadd.f32 %v729, 0.0
    %v733 = vand.u32 2147483647, %v729
    %v734 = vsub.f32 0.0, %v733
    %v735 = vmul.f32 %v734, 1.442695
    %v736 = vpow.pop %v735
    %v737 = vadd.f32 %v736, 1.0
    %v738 = vlog2.pop %v737
    %v739 = vmul.f32 %v738, 0.6931472
    %v740 = vmul.f32 -0.5, %v736
    %v741 = vadd.f32 %v740, 1.0
    %v742 = vmul.f32 %v741, %v736
    %v743 = vand.u32 2147483647, %v736
    %vm744 = vcmp.lt.f32.partialorder %v743, 0.0004427343
    %v745 = vsel %vm744, %v742, %v739
    %v746 = vadd.f32 %v730, %v745
    %v747 = vsel %vm731, %v732, %v746
    %v748 = vmul.f32 %v706, %v535
    %v749 = vmul.f32 %v709, %v535
    %751 = vrot.lane.b32.xlu0 %v749, 127
    %v752 = vpop.permute.xlu0 %751
    %v754 = vadd.f32 %v748, %v752
    %v755 = vmul.f32 %v717, %v561
    %v756 = vadd.f32 %v754, %v755
    %v757 = vmul.f32 %v721, %v561
    %759 = vrot.lane.b32.xlu0 %v757, 127
    %v760 = vpop.permute.xlu0 %759
    %v762 = vadd.f32 %v756, %v760
    %v763 = vadd.f32 %v762, %v728
    %v764 = vmax.f32 %v763, 0.0
    %vm765 = vcmp.ne.f32.partialorder %v763, %v763
    %v766 = vadd.f32 %v763, 0.0
    %v767 = vand.u32 2147483647, %v763
    %v768 = vsub.f32 0.0, %v767
    %v769 = vmul.f32 %v768, 1.442695
    %v770 = vpow.pop %v769
    %v771 = vadd.f32 %v770, 1.0
    %v772 = vlog2.pop %v771
    %v773 = vmul.f32 %v772, 0.6931472
    %v774 = vmul.f32 -0.5, %v770
    %v775 = vadd.f32 %v774, 1.0
    %v776 = vmul.f32 %v775, %v770
    %v777 = vand.u32 2147483647, %v770
    %vm778 = vcmp.lt.f32.partialorder %v777, 0.0004427343
    %v779 = vsel %vm778, %v776, %v773
    %v780 = vadd.f32 %v764, %v779
    %v781 = vsel %vm765, %v766, %v780
    %v782 = vmul.f32 %v706, %v561
    %v783 = vmul.f32 %v709, %v561
    %785 = vrot.lane.b32.xlu0 %v783, 127
    %v786 = vpop.permute.xlu0 %785
    %v788 = vadd.f32 %v782, %v786
    %v789 = vmul.f32 %v717, %v586
    %v790 = vadd.f32 %v788, %v789
    %v791 = vmul.f32 %v721, %v586
    %793 = vrot.lane.b32.xlu0 %v791, 127
    %v794 = vpop.permute.xlu0 %793
    %v796 = vadd.f32 %v790, %v794
    %v797 = vadd.f32 %v796, %v728
    %v798 = vmax.f32 %v797, 0.0
    %vm799 = vcmp.ne.f32.partialorder %v797, %v797
    %v800 = vadd.f32 %v797, 0.0
    %v801 = vand.u32 2147483647, %v797
    %v802 = vsub.f32 0.0, %v801
    %v803 = vmul.f32 %v802, 1.442695
    %v804 = vpow.pop %v803
    %v805 = vadd.f32 %v804, 1.0
    %v806 = vlog2.pop %v805
    %v807 = vmul.f32 %v806, 0.6931472
    %v808 = vmul.f32 -0.5, %v804
    %v809 = vadd.f32 %v808, 1.0
    %v810 = vmul.f32 %v809, %v804
    %v811 = vand.u32 2147483647, %v804
    %vm812 = vcmp.lt.f32.partialorder %v811, 0.0004427343
    %v813 = vsel %vm812, %v810, %v807
    %v814 = vadd.f32 %v798, %v813
    %v815 = vsel %vm799, %v800, %v814
    %v816 = vmul.f32 %v706, %v586
    %v817 = vmul.f32 %v709, %v586
    %819 = vrot.lane.b32.xlu0 %v817, 127
    %v820 = vpop.permute.xlu0 %819
    %v822 = vadd.f32 %v816, %v820
    %v823 = vmul.f32 %v717, %v611
    %v824 = vadd.f32 %v822, %v823
    %v825 = vmul.f32 %v721, %v611
    %827 = vrot.lane.b32.xlu0 %v825, 127
    %v828 = vpop.permute.xlu0 %827
    %v830 = vadd.f32 %v824, %v828
    %v831 = vadd.f32 %v830, %v728
    %v832 = vmax.f32 %v831, 0.0
    %vm833 = vcmp.ne.f32.partialorder %v831, %v831
    %v834 = vadd.f32 %v831, 0.0
    %v835 = vand.u32 2147483647, %v831
    %v836 = vsub.f32 0.0, %v835
    %v837 = vmul.f32 %v836, 1.442695
    %v838 = vpow.pop %v837
    %v839 = vadd.f32 %v838, 1.0
    %v840 = vlog2.pop %v839
    %v841 = vmul.f32 %v840, 0.6931472
    %v842 = vmul.f32 -0.5, %v838
    %v843 = vadd.f32 %v842, 1.0
    %v844 = vmul.f32 %v843, %v838
    %v845 = vand.u32 2147483647, %v838
    %vm846 = vcmp.lt.f32.partialorder %v845, 0.0004427343
    %v847 = vsel %vm846, %v844, %v841
    %v848 = vadd.f32 %v832, %v847
    %v849 = vsel %vm833, %v834, %v848
    %v850 = vmul.f32 %v706, %v611
    %v851 = vmul.f32 %v709, %v611
    %853 = vrot.lane.b32.xlu0 %v851, 127
    %v854 = vpop.permute.xlu0 %853
    %v856 = vadd.f32 %v850, %v854
    %v857 = vmul.f32 %v717, %v636
    %v858 = vadd.f32 %v856, %v857
    %v859 = vmul.f32 %v721, %v636
    %861 = vrot.lane.b32.xlu0 %v859, 127
    %v862 = vpop.permute.xlu0 %861
    %v864 = vadd.f32 %v858, %v862
    %v865 = vadd.f32 %v864, %v728
    %v866 = vmax.f32 %v865, 0.0
    %vm867 = vcmp.ne.f32.partialorder %v865, %v865
    %v868 = vadd.f32 %v865, 0.0
    %v869 = vand.u32 2147483647, %v865
    %v870 = vsub.f32 0.0, %v869
    %v871 = vmul.f32 %v870, 1.442695
    %v872 = vpow.pop %v871
    %v873 = vadd.f32 %v872, 1.0
    %v874 = vlog2.pop %v873
    %v875 = vmul.f32 %v874, 0.6931472
    %v876 = vmul.f32 -0.5, %v872
    %v877 = vadd.f32 %v876, 1.0
    %v878 = vmul.f32 %v877, %v872
    %v879 = vand.u32 2147483647, %v872
    %vm880 = vcmp.lt.f32.partialorder %v879, 0.0004427343
    %v881 = vsel %vm880, %v878, %v875
    %v882 = vadd.f32 %v866, %v881
    %v883 = vsel %vm867, %v868, %v882
    %v884 = vmul.f32 %v706, %v636
    %v885 = vmul.f32 %v709, %v636
    %887 = vrot.lane.b32.xlu0 %v885, 127
    %v888 = vpop.permute.xlu0 %887
    %v890 = vadd.f32 %v884, %v888
    %v891 = vmul.f32 %v717, %v661
    %v892 = vadd.f32 %v890, %v891
    %v893 = vmul.f32 %v721, %v661
    %895 = vrot.lane.b32.xlu0 %v893, 127
    %v896 = vpop.permute.xlu0 %895
    %v898 = vadd.f32 %v892, %v896
    %v899 = vadd.f32 %v898, %v728
    %v900 = vmax.f32 %v899, 0.0
    %vm901 = vcmp.ne.f32.partialorder %v899, %v899
    %v902 = vadd.f32 %v899, 0.0
    %v903 = vand.u32 2147483647, %v899
    %v904 = vsub.f32 0.0, %v903
    %v905 = vmul.f32 %v904, 1.442695
    %v906 = vpow.pop %v905
    %v907 = vadd.f32 %v906, 1.0
    %v908 = vlog2.pop %v907
    %v909 = vmul.f32 %v908, 0.6931472
    %v910 = vmul.f32 -0.5, %v906
    %v911 = vadd.f32 %v910, 1.0
    %v912 = vmul.f32 %v911, %v906
    %v913 = vand.u32 2147483647, %v906
    %vm914 = vcmp.lt.f32.partialorder %v913, 0.0004427343
    %v915 = vsel %vm914, %v912, %v909
    %v916 = vadd.f32 %v900, %v915
    %v917 = vsel %vm901, %v902, %v916
    %v918 = vmul.f32 %v706, %v661
    %v919 = vmul.f32 %v709, %v661
    %921 = vrot.lane.b32.xlu0 %v919, 127
    %v922 = vpop.permute.xlu0 %921
    %v924 = vadd.f32 %v918, %v922
    %v925 = vmul.f32 %v717, %v686
    %v926 = vadd.f32 %v924, %v925
    %v927 = vmul.f32 %v721, %v686
    %929 = vrot.lane.b32.xlu0 %v927, 127
    %v930 = vpop.permute.xlu0 %929
    %v932 = vadd.f32 %v926, %v930
    %v933 = vadd.f32 %v932, %v728
    %v934 = vmax.f32 %v933, 0.0
    %vm935 = vcmp.ne.f32.partialorder %v933, %v933
    %v936 = vadd.f32 %v933, 0.0
    %v937 = vand.u32 2147483647, %v933
    %v938 = vsub.f32 0.0, %v937
    %v939 = vmul.f32 %v938, 1.442695
    %v940 = vpow.pop %v939
    %v941 = vadd.f32 %v940, 1.0
    %v942 = vlog2.pop %v941
    %v943 = vmul.f32 %v942, 0.6931472
    %v944 = vmul.f32 -0.5, %v940
    %v945 = vadd.f32 %v944, 1.0
    %v946 = vmul.f32 %v945, %v940
    %v947 = vand.u32 2147483647, %v940
    %vm948 = vcmp.lt.f32.partialorder %v947, 0.0004427343
    %v949 = vsel %vm948, %v946, %v943
    %v950 = vadd.f32 %v934, %v949
    %v951 = vsel %vm935, %v936, %v950
    %v952 = vmul.f32 %v706, %v686
    %v953 = vmul.f32 %v709, %v686
    %955 = vrot.lane.b32.xlu0 %v953, 127
    %v956 = vpop.permute.xlu0 %955
    %v958 = vadd.f32 %v952, %v956
    %v959 = vmul.f32 %v717, %v703
    %v960 = vadd.f32 %v958, %v959
    %v961 = vmul.f32 %v721, %v703
    %963 = vrot.lane.b32.xlu0 %v961, 127
    %v964 = vpop.permute.xlu0 %963
    %v966 = vadd.f32 %v960, %v964
    %v967 = vadd.f32 %v966, %v728
    %v968 = vmax.f32 %v967, 0.0
    %vm969 = vcmp.ne.f32.partialorder %v967, %v967
    %v970 = vadd.f32 %v967, 0.0
    %v971 = vand.u32 2147483647, %v967
    %v972 = vsub.f32 0.0, %v971
    %v973 = vmul.f32 %v972, 1.442695
    %v974 = vpow.pop %v973
    %v975 = vadd.f32 %v974, 1.0
    %v976 = vlog2.pop %v975
    %v977 = vmul.f32 %v976, 0.6931472
    %v978 = vmul.f32 -0.5, %v974
    %v979 = vadd.f32 %v978, 1.0
    %v980 = vmul.f32 %v979, %v974
    %v981 = vand.u32 2147483647, %v974
    %vm982 = vcmp.lt.f32.partialorder %v981, 0.0004427343
    %v983 = vsel %vm982, %v980, %v977
    %v984 = vadd.f32 %v968, %v983
    %v985 = vsel %vm969, %v970, %v984
    %v986 = vld [vmem:[%s7] sm:$0xff]
    %v987 = vld [vmem:[%s7 + $0x8] sm:$0xff]
    %v988 = vld [vmem:[%s7 + $0x10] sm:$0xff]
    %v989 = vld [vmem:[%s7 + $0x18] sm:$0xff]
    %v990 = vld [vmem:[%s7 + $0x20] sm:$0xff]
    %v991 = vld [vmem:[%s7 + $0x28] sm:$0xff]
    %v992 = vld [vmem:[%s7 + $0x30] sm:$0xff]
    %v993 = vld [vmem:[%s7 + $0x38] sm:$0xff]
    %v994 = vld [vmem:[%s8] sm:$0x1]
    %v996 = vlaneseq
    %v997 = vshrl.u32 %v996, 7
    %v998 = vsub.s32 0, %v997
    %v999 = vrot.slane %v994, %v998
    %1002 = vset.pattern.permute.xlu0 0
    %1003 = vperm.xlu0 %1002, %v747
    %v1004 = vpop.permute.xlu0 %1003
    %v1006 = vlaneseq
    %v1007 = vshrl.u32 %v1006, 7
    %v1008 = vsub.s32 0, %v1007
    %v1009 = vrot.slane %v986, %v1008
    %v1010 = vmul.f32 %v1004, %v1009
    %v1011 = vadd.f32 %v999, %v1010
    %1012 = vset.pattern.permute.xlu0 1
    %1013 = vperm.xlu0 %1012, %v747
    %v1014 = vpop.permute.xlu0 %1013
    %v1016 = vlaneseq
    %v1017 = vshrl.u32 %v1016, 7
    %v1018 = vsub.s32 1, %v1017
    %v1019 = vrot.slane %v986, %v1018
    %v1020 = vmul.f32 %v1014, %v1019
    %v1021 = vadd.f32 %v1011, %v1020
    %1022 = vset.pattern.permute.xlu0 2
    %1023 = vperm.xlu0 %1022, %v747
    %v1024 = vpop.permute.xlu0 %1023
    %v1026 = vlaneseq
    %v1027 = vshrl.u32 %v1026, 7
    %v1028 = vsub.s32 2, %v1027
    %v1029 = vrot.slane %v986, %v1028
    %v1030 = vmul.f32 %v1024, %v1029
    %v1031 = vadd.f32 %v1021, %v1030
    %1032 = vset.pattern.permute.xlu0 3
    %1033 = vperm.xlu0 %1032, %v747
    %v1034 = vpop.permute.xlu0 %1033
    %v1036 = vlaneseq
    %v1037 = vshrl.u32 %v1036, 7
    %v1038 = vsub.s32 3, %v1037
    %v1039 = vrot.slane %v986, %v1038
    %v1040 = vmul.f32 %v1034, %v1039
    %v1041 = vadd.f32 %v1031, %v1040
    %1042 = vset.pattern.permute.xlu0 4
    %1043 = vperm.xlu0 %1042, %v747
    %v1044 = vpop.permute.xlu0 %1043
    %v1046 = vlaneseq
    %v1047 = vshrl.u32 %v1046, 7
    %v1048 = vsub.s32 4, %v1047
    %v1049 = vrot.slane %v986, %v1048
    %v1050 = vmul.f32 %v1044, %v1049
    %v1051 = vadd.f32 %v1041, %v1050
    %1052 = vset.pattern.permute.xlu0 5
    %1053 = vperm.xlu0 %1052, %v747
    %v1054 = vpop.permute.xlu0 %1053
    %v1056 = vlaneseq
    %v1057 = vshrl.u32 %v1056, 7
    %v1058 = vsub.s32 5, %v1057
    %v1059 = vrot.slane %v986, %v1058
    %v1060 = vmul.f32 %v1054, %v1059
    %v1061 = vadd.f32 %v1051, %v1060
    %1062 = vset.pattern.permute.xlu0 6
    %1063 = vperm.xlu0 %1062, %v747
    %v1064 = vpop.permute.xlu0 %1063
    %v1066 = vlaneseq
    %v1067 = vshrl.u32 %v1066, 7
    %v1068 = vsub.s32 6, %v1067
    %v1069 = vrot.slane %v986, %v1068
    %v1070 = vmul.f32 %v1064, %v1069
    %v1071 = vadd.f32 %v1061, %v1070
    %1072 = vset.pattern.permute.xlu0 7
    %1073 = vperm.xlu0 %1072, %v747
    %v1074 = vpop.permute.xlu0 %1073
    %v1076 = vlaneseq
    %v1077 = vshrl.u32 %v1076, 7
    %v1078 = vsub.s32 7, %v1077
    %v1079 = vrot.slane %v986, %v1078
    %v1080 = vmul.f32 %v1074, %v1079
    %v1081 = vadd.f32 %v1071, %v1080
    %1083 = vset.pattern.permute.xlu0 0
    %1084 = vperm.xlu0 %1083, %v781
    %v1085 = vpop.permute.xlu0 %1084
    %v1087 = vlaneseq
    %v1088 = vshrl.u32 %v1087, 7
    %v1089 = vsub.s32 0, %v1088
    %v1090 = vrot.slane %v987, %v1089
    %v1091 = vmul.f32 %v1085, %v1090
    %v1092 = vadd.f32 %v1081, %v1091
    %1093 = vset.pattern.permute.xlu0 1
    %1094 = vperm.xlu0 %1093, %v781
    %v1095 = vpop.permute.xlu0 %1094
    %v1097 = vlaneseq
    %v1098 = vshrl.u32 %v1097, 7
    %v1099 = vsub.s32 1, %v1098
    %v1100 = vrot.slane %v987, %v1099
    %v1101 = vmul.f32 %v1095, %v1100
    %v1102 = vadd.f32 %v1092, %v1101
    %1103 = vset.pattern.permute.xlu0 2
    %1104 = vperm.xlu0 %1103, %v781
    %v1105 = vpop.permute.xlu0 %1104
    %v1107 = vlaneseq
    %v1108 = vshrl.u32 %v1107, 7
    %v1109 = vsub.s32 2, %v1108
    %v1110 = vrot.slane %v987, %v1109
    %v1111 = vmul.f32 %v1105, %v1110
    %v1112 = vadd.f32 %v1102, %v1111
    %1113 = vset.pattern.permute.xlu0 3
    %1114 = vperm.xlu0 %1113, %v781
    %v1115 = vpop.permute.xlu0 %1114
    %v1117 = vlaneseq
    %v1118 = vshrl.u32 %v1117, 7
    %v1119 = vsub.s32 3, %v1118
    %v1120 = vrot.slane %v987, %v1119
    %v1121 = vmul.f32 %v1115, %v1120
    %v1122 = vadd.f32 %v1112, %v1121
    %1123 = vset.pattern.permute.xlu0 4
    %1124 = vperm.xlu0 %1123, %v781
    %v1125 = vpop.permute.xlu0 %1124
    %v1127 = vlaneseq
    %v1128 = vshrl.u32 %v1127, 7
    %v1129 = vsub.s32 4, %v1128
    %v1130 = vrot.slane %v987, %v1129
    %v1131 = vmul.f32 %v1125, %v1130
    %v1132 = vadd.f32 %v1122, %v1131
    %1133 = vset.pattern.permute.xlu0 5
    %1134 = vperm.xlu0 %1133, %v781
    %v1135 = vpop.permute.xlu0 %1134
    %v1137 = vlaneseq
    %v1138 = vshrl.u32 %v1137, 7
    %v1139 = vsub.s32 5, %v1138
    %v1140 = vrot.slane %v987, %v1139
    %v1141 = vmul.f32 %v1135, %v1140
    %v1142 = vadd.f32 %v1132, %v1141
    %1143 = vset.pattern.permute.xlu0 6
    %1144 = vperm.xlu0 %1143, %v781
    %v1145 = vpop.permute.xlu0 %1144
    %v1147 = vlaneseq
    %v1148 = vshrl.u32 %v1147, 7
    %v1149 = vsub.s32 6, %v1148
    %v1150 = vrot.slane %v987, %v1149
    %v1151 = vmul.f32 %v1145, %v1150
    %v1152 = vadd.f32 %v1142, %v1151
    %1153 = vset.pattern.permute.xlu0 7
    %1154 = vperm.xlu0 %1153, %v781
    %v1155 = vpop.permute.xlu0 %1154
    %v1157 = vlaneseq
    %v1158 = vshrl.u32 %v1157, 7
    %v1159 = vsub.s32 7, %v1158
    %v1160 = vrot.slane %v987, %v1159
    %v1161 = vmul.f32 %v1155, %v1160
    %v1162 = vadd.f32 %v1152, %v1161
    %1164 = vset.pattern.permute.xlu0 0
    %1165 = vperm.xlu0 %1164, %v815
    %v1166 = vpop.permute.xlu0 %1165
    %v1168 = vlaneseq
    %v1169 = vshrl.u32 %v1168, 7
    %v1170 = vsub.s32 0, %v1169
    %v1171 = vrot.slane %v988, %v1170
    %v1172 = vmul.f32 %v1166, %v1171
    %v1173 = vadd.f32 %v1162, %v1172
    %1174 = vset.pattern.permute.xlu0 1
    %1175 = vperm.xlu0 %1174, %v815
    %v1176 = vpop.permute.xlu0 %1175
    %v1178 = vlaneseq
    %v1179 = vshrl.u32 %v1178, 7
    %v1180 = vsub.s32 1, %v1179
    %v1181 = vrot.slane %v988, %v1180
    %v1182 = vmul.f32 %v1176, %v1181
    %v1183 = vadd.f32 %v1173, %v1182
    %1184 = vset.pattern.permute.xlu0 2
    %1185 = vperm.xlu0 %1184, %v815
    %v1186 = vpop.permute.xlu0 %1185
    %v1188 = vlaneseq
    %v1189 = vshrl.u32 %v1188, 7
    %v1190 = vsub.s32 2, %v1189
    %v1191 = vrot.slane %v988, %v1190
    %v1192 = vmul.f32 %v1186, %v1191
    %v1193 = vadd.f32 %v1183, %v1192
    %1194 = vset.pattern.permute.xlu0 3
    %1195 = vperm.xlu0 %1194, %v815
    %v1196 = vpop.permute.xlu0 %1195
    %v1198 = vlaneseq
    %v1199 = vshrl.u32 %v1198, 7
    %v1200 = vsub.s32 3, %v1199
    %v1201 = vrot.slane %v988, %v1200
    %v1202 = vmul.f32 %v1196, %v1201
    %v1203 = vadd.f32 %v1193, %v1202
    %1204 = vset.pattern.permute.xlu0 4
    %1205 = vperm.xlu0 %1204, %v815
    %v1206 = vpop.permute.xlu0 %1205
    %v1208 = vlaneseq
    %v1209 = vshrl.u32 %v1208, 7
    %v1210 = vsub.s32 4, %v1209
    %v1211 = vrot.slane %v988, %v1210
    %v1212 = vmul.f32 %v1206, %v1211
    %v1213 = vadd.f32 %v1203, %v1212
    %1214 = vset.pattern.permute.xlu0 5
    %1215 = vperm.xlu0 %1214, %v815
    %v1216 = vpop.permute.xlu0 %1215
    %v1218 = vlaneseq
    %v1219 = vshrl.u32 %v1218, 7
    %v1220 = vsub.s32 5, %v1219
    %v1221 = vrot.slane %v988, %v1220
    %v1222 = vmul.f32 %v1216, %v1221
    %v1223 = vadd.f32 %v1213, %v1222
    %1224 = vset.pattern.permute.xlu0 6
    %1225 = vperm.xlu0 %1224, %v815
    %v1226 = vpop.permute.xlu0 %1225
    %v1228 = vlaneseq
    %v1229 = vshrl.u32 %v1228, 7
    %v1230 = vsub.s32 6, %v1229
    %v1231 = vrot.slane %v988, %v1230
    %v1232 = vmul.f32 %v1226, %v1231
    %v1233 = vadd.f32 %v1223, %v1232
    %1234 = vset.pattern.permute.xlu0 7
    %1235 = vperm.xlu0 %1234, %v815
    %v1236 = vpop.permute.xlu0 %1235
    %v1238 = vlaneseq
    %v1239 = vshrl.u32 %v1238, 7
    %v1240 = vsub.s32 7, %v1239
    %v1241 = vrot.slane %v988, %v1240
    %v1242 = vmul.f32 %v1236, %v1241
    %v1243 = vadd.f32 %v1233, %v1242
    %1245 = vset.pattern.permute.xlu0 0
    %1246 = vperm.xlu0 %1245, %v849
    %v1247 = vpop.permute.xlu0 %1246
    %v1249 = vlaneseq
    %v1250 = vshrl.u32 %v1249, 7
    %v1251 = vsub.s32 0, %v1250
    %v1252 = vrot.slane %v989, %v1251
    %v1253 = vmul.f32 %v1247, %v1252
    %v1254 = vadd.f32 %v1243, %v1253
    %1255 = vset.pattern.permute.xlu0 1
    %1256 = vperm.xlu0 %1255, %v849
    %v1257 = vpop.permute.xlu0 %1256
    %v1259 = vlaneseq
    %v1260 = vshrl.u32 %v1259, 7
    %v1261 = vsub.s32 1, %v1260
    %v1262 = vrot.slane %v989, %v1261
    %v1263 = vmul.f32 %v1257, %v1262
    %v1264 = vadd.f32 %v1254, %v1263
    %1265 = vset.pattern.permute.xlu0 2
    %1266 = vperm.xlu0 %1265, %v849
    %v1267 = vpop.permute.xlu0 %1266
    %v1269 = vlaneseq
    %v1270 = vshrl.u32 %v1269, 7
    %v1271 = vsub.s32 2, %v1270
    %v1272 = vrot.slane %v989, %v1271
    %v1273 = vmul.f32 %v1267, %v1272
    %v1274 = vadd.f32 %v1264, %v1273
    %1275 = vset.pattern.permute.xlu0 3
    %1276 = vperm.xlu0 %1275, %v849
    %v1277 = vpop.permute.xlu0 %1276
    %v1279 = vlaneseq
    %v1280 = vshrl.u32 %v1279, 7
    %v1281 = vsub.s32 3, %v1280
    %v1282 = vrot.slane %v989, %v1281
    %v1283 = vmul.f32 %v1277, %v1282
    %v1284 = vadd.f32 %v1274, %v1283
    %1285 = vset.pattern.permute.xlu0 4
    %1286 = vperm.xlu0 %1285, %v849
    %v1287 = vpop.permute.xlu0 %1286
    %v1289 = vlaneseq
    %v1290 = vshrl.u32 %v1289, 7
    %v1291 = vsub.s32 4, %v1290
    %v1292 = vrot.slane %v989, %v1291
    %v1293 = vmul.f32 %v1287, %v1292
    %v1294 = vadd.f32 %v1284, %v1293
    %1295 = vset.pattern.permute.xlu0 5
    %1296 = vperm.xlu0 %1295, %v849
    %v1297 = vpop.permute.xlu0 %1296
    %v1299 = vlaneseq
    %v1300 = vshrl.u32 %v1299, 7
    %v1301 = vsub.s32 5, %v1300
    %v1302 = vrot.slane %v989, %v1301
    %v1303 = vmul.f32 %v1297, %v1302
    %v1304 = vadd.f32 %v1294, %v1303
    %1305 = vset.pattern.permute.xlu0 6
    %1306 = vperm.xlu0 %1305, %v849
    %v1307 = vpop.permute.xlu0 %1306
    %v1309 = vlaneseq
    %v1310 = vshrl.u32 %v1309, 7
    %v1311 = vsub.s32 6, %v1310
    %v1312 = vrot.slane %v989, %v1311
    %v1313 = vmul.f32 %v1307, %v1312
    %v1314 = vadd.f32 %v1304, %v1313
    %1315 = vset.pattern.permute.xlu0 7
    %1316 = vperm.xlu0 %1315, %v849
    %v1317 = vpop.permute.xlu0 %1316
    %v1319 = vlaneseq
    %v1320 = vshrl.u32 %v1319, 7
    %v1321 = vsub.s32 7, %v1320
    %v1322 = vrot.slane %v989, %v1321
    %v1323 = vmul.f32 %v1317, %v1322
    %v1324 = vadd.f32 %v1314, %v1323
    %1326 = vset.pattern.permute.xlu0 0
    %1327 = vperm.xlu0 %1326, %v883
    %v1328 = vpop.permute.xlu0 %1327
    %v1330 = vlaneseq
    %v1331 = vshrl.u32 %v1330, 7
    %v1332 = vsub.s32 0, %v1331
    %v1333 = vrot.slane %v990, %v1332
    %v1334 = vmul.f32 %v1328, %v1333
    %v1335 = vadd.f32 %v1324, %v1334
    %1336 = vset.pattern.permute.xlu0 1
    %1337 = vperm.xlu0 %1336, %v883
    %v1338 = vpop.permute.xlu0 %1337
    %v1340 = vlaneseq
    %v1341 = vshrl.u32 %v1340, 7
    %v1342 = vsub.s32 1, %v1341
    %v1343 = vrot.slane %v990, %v1342
    %v1344 = vmul.f32 %v1338, %v1343
    %v1345 = vadd.f32 %v1335, %v1344
    %1346 = vset.pattern.permute.xlu0 2
    %1347 = vperm.xlu0 %1346, %v883
    %v1348 = vpop.permute.xlu0 %1347
    %v1350 = vlaneseq
    %v1351 = vshrl.u32 %v1350, 7
    %v1352 = vsub.s32 2, %v1351
    %v1353 = vrot.slane %v990, %v1352
    %v1354 = vmul.f32 %v1348, %v1353
    %v1355 = vadd.f32 %v1345, %v1354
    %1356 = vset.pattern.permute.xlu0 3
    %1357 = vperm.xlu0 %1356, %v883
    %v1358 = vpop.permute.xlu0 %1357
    %v1360 = vlaneseq
    %v1361 = vshrl.u32 %v1360, 7
    %v1362 = vsub.s32 3, %v1361
    %v1363 = vrot.slane %v990, %v1362
    %v1364 = vmul.f32 %v1358, %v1363
    %v1365 = vadd.f32 %v1355, %v1364
    %1366 = vset.pattern.permute.xlu0 4
    %1367 = vperm.xlu0 %1366, %v883
    %v1368 = vpop.permute.xlu0 %1367
    %v1370 = vlaneseq
    %v1371 = vshrl.u32 %v1370, 7
    %v1372 = vsub.s32 4, %v1371
    %v1373 = vrot.slane %v990, %v1372
    %v1374 = vmul.f32 %v1368, %v1373
    %v1375 = vadd.f32 %v1365, %v1374
    %1376 = vset.pattern.permute.xlu0 5
    %1377 = vperm.xlu0 %1376, %v883
    %v1378 = vpop.permute.xlu0 %1377
    %v1380 = vlaneseq
    %v1381 = vshrl.u32 %v1380, 7
    %v1382 = vsub.s32 5, %v1381
    %v1383 = vrot.slane %v990, %v1382
    %v1384 = vmul.f32 %v1378, %v1383
    %v1385 = vadd.f32 %v1375, %v1384
    %1386 = vset.pattern.permute.xlu0 6
    %1387 = vperm.xlu0 %1386, %v883
    %v1388 = vpop.permute.xlu0 %1387
    %v1390 = vlaneseq
    %v1391 = vshrl.u32 %v1390, 7
    %v1392 = vsub.s32 6, %v1391
    %v1393 = vrot.slane %v990, %v1392
    %v1394 = vmul.f32 %v1388, %v1393
    %v1395 = vadd.f32 %v1385, %v1394
    %1396 = vset.pattern.permute.xlu0 7
    %1397 = vperm.xlu0 %1396, %v883
    %v1398 = vpop.permute.xlu0 %1397
    %v1400 = vlaneseq
    %v1401 = vshrl.u32 %v1400, 7
    %v1402 = vsub.s32 7, %v1401
    %v1403 = vrot.slane %v990, %v1402
    %v1404 = vmul.f32 %v1398, %v1403
    %v1405 = vadd.f32 %v1395, %v1404
    %1407 = vset.pattern.permute.xlu0 0
    %1408 = vperm.xlu0 %1407, %v917
    %v1409 = vpop.permute.xlu0 %1408
    %v1411 = vlaneseq
    %v1412 = vshrl.u32 %v1411, 7
    %v1413 = vsub.s32 0, %v1412
    %v1414 = vrot.slane %v991, %v1413
    %v1415 = vmul.f32 %v1409, %v1414
    %v1416 = vadd.f32 %v1405, %v1415
    %1417 = vset.pattern.permute.xlu0 1
    %1418 = vperm.xlu0 %1417, %v917
    %v1419 = vpop.permute.xlu0 %1418
    %v1421 = vlaneseq
    %v1422 = vshrl.u32 %v1421, 7
    %v1423 = vsub.s32 1, %v1422
    %v1424 = vrot.slane %v991, %v1423
    %v1425 = vmul.f32 %v1419, %v1424
    %v1426 = vadd.f32 %v1416, %v1425
    %1427 = vset.pattern.permute.xlu0 2
    %1428 = vperm.xlu0 %1427, %v917
    %v1429 = vpop.permute.xlu0 %1428
    %v1431 = vlaneseq
    %v1432 = vshrl.u32 %v1431, 7
    %v1433 = vsub.s32 2, %v1432
    %v1434 = vrot.slane %v991, %v1433
    %v1435 = vmul.f32 %v1429, %v1434
    %v1436 = vadd.f32 %v1426, %v1435
    %1437 = vset.pattern.permute.xlu0 3
    %1438 = vperm.xlu0 %1437, %v917
    %v1439 = vpop.permute.xlu0 %1438
    %v1441 = vlaneseq
    %v1442 = vshrl.u32 %v1441, 7
    %v1443 = vsub.s32 3, %v1442
    %v1444 = vrot.slane %v991, %v1443
    %v1445 = vmul.f32 %v1439, %v1444
    %v1446 = vadd.f32 %v1436, %v1445
    %1447 = vset.pattern.permute.xlu0 4
    %1448 = vperm.xlu0 %1447, %v917
    %v1449 = vpop.permute.xlu0 %1448
    %v1451 = vlaneseq
    %v1452 = vshrl.u32 %v1451, 7
    %v1453 = vsub.s32 4, %v1452
    %v1454 = vrot.slane %v991, %v1453
    %v1455 = vmul.f32 %v1449, %v1454
    %v1456 = vadd.f32 %v1446, %v1455
    %1457 = vset.pattern.permute.xlu0 5
    %1458 = vperm.xlu0 %1457, %v917
    %v1459 = vpop.permute.xlu0 %1458
    %v1461 = vlaneseq
    %v1462 = vshrl.u32 %v1461, 7
    %v1463 = vsub.s32 5, %v1462
    %v1464 = vrot.slane %v991, %v1463
    %v1465 = vmul.f32 %v1459, %v1464
    %v1466 = vadd.f32 %v1456, %v1465
    %1467 = vset.pattern.permute.xlu0 6
    %1468 = vperm.xlu0 %1467, %v917
    %v1469 = vpop.permute.xlu0 %1468
    %v1471 = vlaneseq
    %v1472 = vshrl.u32 %v1471, 7
    %v1473 = vsub.s32 6, %v1472
    %v1474 = vrot.slane %v991, %v1473
    %v1475 = vmul.f32 %v1469, %v1474
    %v1476 = vadd.f32 %v1466, %v1475
    %1477 = vset.pattern.permute.xlu0 7
    %1478 = vperm.xlu0 %1477, %v917
    %v1479 = vpop.permute.xlu0 %1478
    %v1481 = vlaneseq
    %v1482 = vshrl.u32 %v1481, 7
    %v1483 = vsub.s32 7, %v1482
    %v1484 = vrot.slane %v991, %v1483
    %v1485 = vmul.f32 %v1479, %v1484
    %v1486 = vadd.f32 %v1476, %v1485
    %1488 = vset.pattern.permute.xlu0 0
    %1489 = vperm.xlu0 %1488, %v951
    %v1490 = vpop.permute.xlu0 %1489
    %v1492 = vlaneseq
    %v1493 = vshrl.u32 %v1492, 7
    %v1494 = vsub.s32 0, %v1493
    %v1495 = vrot.slane %v992, %v1494
    %v1496 = vmul.f32 %v1490, %v1495
    %v1497 = vadd.f32 %v1486, %v1496
    %1498 = vset.pattern.permute.xlu0 1
    %1499 = vperm.xlu0 %1498, %v951
    %v1500 = vpop.permute.xlu0 %1499
    %v1502 = vlaneseq
    %v1503 = vshrl.u32 %v1502, 7
    %v1504 = vsub.s32 1, %v1503
    %v1505 = vrot.slane %v992, %v1504
    %v1506 = vmul.f32 %v1500, %v1505
    %v1507 = vadd.f32 %v1497, %v1506
    %1508 = vset.pattern.permute.xlu0 2
    %1509 = vperm.xlu0 %1508, %v951
    %v1510 = vpop.permute.xlu0 %1509
    %v1512 = vlaneseq
    %v1513 = vshrl.u32 %v1512, 7
    %v1514 = vsub.s32 2, %v1513
    %v1515 = vrot.slane %v992, %v1514
    %v1516 = vmul.f32 %v1510, %v1515
    %v1517 = vadd.f32 %v1507, %v1516
    %1518 = vset.pattern.permute.xlu0 3
    %1519 = vperm.xlu0 %1518, %v951
    %v1520 = vpop.permute.xlu0 %1519
    %v1522 = vlaneseq
    %v1523 = vshrl.u32 %v1522, 7
    %v1524 = vsub.s32 3, %v1523
    %v1525 = vrot.slane %v992, %v1524
    %v1526 = vmul.f32 %v1520, %v1525
    %v1527 = vadd.f32 %v1517, %v1526
    %1528 = vset.pattern.permute.xlu0 4
    %1529 = vperm.xlu0 %1528, %v951
    %v1530 = vpop.permute.xlu0 %1529
    %v1532 = vlaneseq
    %v1533 = vshrl.u32 %v1532, 7
    %v1534 = vsub.s32 4, %v1533
    %v1535 = vrot.slane %v992, %v1534
    %v1536 = vmul.f32 %v1530, %v1535
    %v1537 = vadd.f32 %v1527, %v1536
    %1538 = vset.pattern.permute.xlu0 5
    %1539 = vperm.xlu0 %1538, %v951
    %v1540 = vpop.permute.xlu0 %1539
    %v1542 = vlaneseq
    %v1543 = vshrl.u32 %v1542, 7
    %v1544 = vsub.s32 5, %v1543
    %v1545 = vrot.slane %v992, %v1544
    %v1546 = vmul.f32 %v1540, %v1545
    %v1547 = vadd.f32 %v1537, %v1546
    %1548 = vset.pattern.permute.xlu0 6
    %1549 = vperm.xlu0 %1548, %v951
    %v1550 = vpop.permute.xlu0 %1549
    %v1552 = vlaneseq
    %v1553 = vshrl.u32 %v1552, 7
    %v1554 = vsub.s32 6, %v1553
    %v1555 = vrot.slane %v992, %v1554
    %v1556 = vmul.f32 %v1550, %v1555
    %v1557 = vadd.f32 %v1547, %v1556
    %1558 = vset.pattern.permute.xlu0 7
    %1559 = vperm.xlu0 %1558, %v951
    %v1560 = vpop.permute.xlu0 %1559
    %v1562 = vlaneseq
    %v1563 = vshrl.u32 %v1562, 7
    %v1564 = vsub.s32 7, %v1563
    %v1565 = vrot.slane %v992, %v1564
    %v1566 = vmul.f32 %v1560, %v1565
    %v1567 = vadd.f32 %v1557, %v1566
    %1569 = vset.pattern.permute.xlu0 0
    %1570 = vperm.xlu0 %1569, %v985
    %v1571 = vpop.permute.xlu0 %1570
    %v1573 = vlaneseq
    %v1574 = vshrl.u32 %v1573, 7
    %v1575 = vsub.s32 0, %v1574
    %v1576 = vrot.slane %v993, %v1575
    %v1577 = vmul.f32 %v1571, %v1576
    %v1578 = vadd.f32 %v1567, %v1577
    %1579 = vset.pattern.permute.xlu0 1
    %1580 = vperm.xlu0 %1579, %v985
    %v1581 = vpop.permute.xlu0 %1580
    %v1583 = vlaneseq
    %v1584 = vshrl.u32 %v1583, 7
    %v1585 = vsub.s32 1, %v1584
    %v1586 = vrot.slane %v993, %v1585
    %v1587 = vmul.f32 %v1581, %v1586
    %v1588 = vadd.f32 %v1578, %v1587
    %1589 = vset.pattern.permute.xlu0 2
    %1590 = vperm.xlu0 %1589, %v985
    %v1591 = vpop.permute.xlu0 %1590
    %v1593 = vlaneseq
    %v1594 = vshrl.u32 %v1593, 7
    %v1595 = vsub.s32 2, %v1594
    %v1596 = vrot.slane %v993, %v1595
    %v1597 = vmul.f32 %v1591, %v1596
    %v1598 = vadd.f32 %v1588, %v1597
    %1599 = vset.pattern.permute.xlu0 3
    %1600 = vperm.xlu0 %1599, %v985
    %v1601 = vpop.permute.xlu0 %1600
    %v1603 = vlaneseq
    %v1604 = vshrl.u32 %v1603, 7
    %v1605 = vsub.s32 3, %v1604
    %v1606 = vrot.slane %v993, %v1605
    %v1607 = vmul.f32 %v1601, %v1606
    %v1608 = vadd.f32 %v1598, %v1607
    %1609 = vset.pattern.permute.xlu0 4
    %1610 = vperm.xlu0 %1609, %v985
    %v1611 = vpop.permute.xlu0 %1610
    %v1613 = vlaneseq
    %v1614 = vshrl.u32 %v1613, 7
    %v1615 = vsub.s32 4, %v1614
    %v1616 = vrot.slane %v993, %v1615
    %v1617 = vmul.f32 %v1611, %v1616
    %v1618 = vadd.f32 %v1608, %v1617
    %1619 = vset.pattern.permute.xlu0 5
    %1620 = vperm.xlu0 %1619, %v985
    %v1621 = vpop.permute.xlu0 %1620
    %v1623 = vlaneseq
    %v1624 = vshrl.u32 %v1623, 7
    %v1625 = vsub.s32 5, %v1624
    %v1626 = vrot.slane %v993, %v1625
    %v1627 = vmul.f32 %v1621, %v1626
    %v1628 = vadd.f32 %v1618, %v1627
    %1629 = vset.pattern.permute.xlu0 6
    %1630 = vperm.xlu0 %1629, %v985
    %v1631 = vpop.permute.xlu0 %1630
    %v1633 = vlaneseq
    %v1634 = vshrl.u32 %v1633, 7
    %v1635 = vsub.s32 6, %v1634
    %v1636 = vrot.slane %v993, %v1635
    %v1637 = vmul.f32 %v1631, %v1636
    %v1638 = vadd.f32 %v1628, %v1637
    %1639 = vset.pattern.permute.xlu0 7
    %1640 = vperm.xlu0 %1639, %v985
    %v1641 = vpop.permute.xlu0 %1640
    %v1643 = vlaneseq
    %v1644 = vshrl.u32 %v1643, 7
    %v1645 = vsub.s32 7, %v1644
    %v1646 = vrot.slane %v993, %v1645
    %v1647 = vmul.f32 %v1641, %v1646
    %v1648 = vadd.f32 %v1638, %v1647
    %v1649 = vmax.f32 %v1648, 0.0
    %vm1650 = vcmp.ne.f32.partialorder %v1648, %v1648
    %v1651 = vadd.f32 %v1648, 0.0
    %v1652 = vand.u32 2147483647, %v1648
    %v1653 = vsub.f32 0.0, %v1652
    %v1654 = vmul.f32 %v1653, 1.442695
    %v1655 = vpow.pop %v1654
    %v1656 = vadd.f32 %v1655, 1.0
    %v1657 = vlog2.pop %v1656
    %v1658 = vmul.f32 %v1657, 0.6931472
    %v1659 = vmul.f32 -0.5, %v1655
    %v1660 = vadd.f32 %v1659, 1.0
    %v1661 = vmul.f32 %v1660, %v1655
    %v1662 = vand.u32 2147483647, %v1655
    %vm1663 = vcmp.lt.f32.partialorder %v1662, 0.0004427343
    %v1664 = vsel %vm1663, %v1661, %v1658
    %v1665 = vadd.f32 %v1649, %v1664
    %v1666 = vsel %vm1650, %v1651, %v1665
    %v1667 = vld [vmem:[%s9] sm:$0x1]
    %v1669 = vlaneseq
    %v1670 = vshrl.u32 %v1669, 7
    %v1671 = vsub.s32 0, %v1670
    %v1672 = vrot.slane %v1667, %v1671
    %v1674 = vmul.f32 %v1666, %v1672
    %vm1675 = vcmask 123904
    %v1676 = vsel %vm1675, %v1674, 0.0
    %1677 = vadd.xlane.f32.xlu0 %v1676
    %v1678 = vpop.xlane.xlu0 %1677
    %v1679 = vld [vmem:[#allocation4] sm:$0x1]
    %v1681 = vlaneseq
    %v1682 = vshrl.u32 %v1681, 7
    %v1683 = vsub.s32 0, %v1682
    %v1684 = vrot.slane %v1679, %v1683
    %v1686 = vadd.f32 %v1678, %v1684
    %v1687 = vmax.f32 %v1686, 0.0
    %vm1688 = vcmp.ne.f32.partialorder %v1686, %v1686
    %v1689 = vadd.f32 %v1686, 0.0
    %v1690 = vand.u32 2147483647, %v1686
    %v1691 = vsub.f32 0.0, %v1690
    %v1692 = vmul.f32 %v1691, 1.442695
    %v1693 = vpow.pop %v1692
    %v1694 = vadd.f32 %v1693, 1.0
    %v1695 = vlog2.pop %v1694
    %v1696 = vmul.f32 %v1695, 0.6931472
    %v1697 = vmul.f32 -0.5, %v1693
    %v1698 = vadd.f32 %v1697, 1.0
    %v1699 = vmul.f32 %v1698, %v1693
    %v1700 = vand.u32 2147483647, %v1693
    %vm1701 = vcmp.lt.f32.partialorder %v1700, 0.0004427343
    %v1702 = vsel %vm1701, %v1699, %v1696
    %v1703 = vadd.f32 %v1687, %v1702
    %v1704 = vsel %vm1688, %v1689, %v1703
    %v1705 = vmul.f32 %v1704, 1e+08
    %v1706 = vmul.f32 %v1705, 0.03
    %vm1707 = vcmask 1024
    %1708 = vst.msk [vmem:[%s11] sm:$0x3] %vm1707, %v1706
    // Predicated region
    $region54: #{tpu_custom_call.1} parent=1 // pred_check
      _
    $region55: #{tpu_custom_call.1} parent=1 // pred_check_branch
      %1710 = sbr.rel (0) target = $region57
    $region56: #{tpu_custom_call.1} parent=1 // pred_region
      _
    $region57: #{tpu_custom_call.1} parent=1 // pred_fallthru
      _
    // Predicated region
    $region58: #{tpu_custom_call.1} parent=1 // pred_check
      _
    $region59: #{tpu_custom_call.1} parent=1 // pred_check_branch
      %1712 = sbr.rel (0) target = $region61
    $region60: #{tpu_custom_call.1} parent=1 // pred_region
      _
    $region61: #{tpu_custom_call.1} parent=1 // pred_fallthru
      _
    %1713 = vsyncpa [#allocation6], 1
    %1714 = vsyncpa [#allocation8], 1

</llo_original>
